<compile_context>
chip_gen: v7x
topology: tpu7x:2x2x1
jax: 0.10.0
libtpu: 0.0.40
codegen_flags: <defaults>
</compile_context>

<pallas_src>
import functools

import numpy as np
import jax
import jax.numpy as jnp
from jax import lax
from jax.experimental import pallas as pl
from jax.experimental.pallas import tpu as pltpu

BN_EPS = 1e-5


# ----------------------------------------------------------------------------
# In-kernel helpers
# ----------------------------------------------------------------------------
def _mm(x4, w_bf16):
    """(bn, H, W, Ci) @ (Ci, Co) on the MXU: bf16 inputs, f32 accumulation."""
    bn, hh, ww, ci = x4.shape
    co = w_bf16.shape[-1]
    y = jnp.dot(x4.reshape(bn * hh * ww, ci), w_bf16,
                preferred_element_type=jnp.float32)
    return y.reshape(bn, hh, ww, co)


def _shift_w(x, d):
    """y[..., j, :] = x[..., (j + d) % W, :]   (circular, d in {-1, 0, +1})."""
    if d == 0:
        return x
    wdim = x.shape[2]
    if d == 1:
        return jnp.concatenate([x[:, :, 1:], x[:, :, :1]], axis=2)
    return jnp.concatenate([x[:, :, wdim - 1:], x[:, :, :wdim - 1]], axis=2)


def _shift_h(x, d):
    """y[:, i] = x[:, (i + d) % H]   (circular, d in {-1, 0, +1})."""
    if d == 0:
        return x
    hdim = x.shape[1]
    if d == 1:
        return jnp.concatenate([x[:, 1:], x[:, :1]], axis=1)
    return jnp.concatenate([x[:, hdim - 1:], x[:, :hdim - 1]], axis=1)


# ----------------------------------------------------------------------------
# Kernel
# ----------------------------------------------------------------------------
def bottleneck_kernel(x_ref, vec_ref, w1_ref, w2_ref, w3p_ref, o_ref, *,
                      cin, cint, cout, dense_out):
    bn, H, W, _ = x_ref.shape

    # Packed per-channel vector table (resident, f32):
    #   row 0: s1   row 1: t1   row 2: t2'   row 3: t3'   row 4: b3 + bp
    s1 = vec_ref[0:1, :cin].reshape(1, 1, 1, cin)
    t1 = vec_ref[1:2, :cin].reshape(1, 1, 1, cin)
    t2 = vec_ref[2:3, :cint].reshape(1, 1, 1, cint)
    t3 = vec_ref[3:4, :cint].reshape(1, 1, 1, cint)
    bo = vec_ref[4:5, :cout].reshape(1, 1, 1, cout)

    # ---- bn1 + relu (Dropout2d == identity in eval mode) --------------------
    h0 = jnp.maximum(x_ref[...] * s1 + t1, 0.0)

    # ---- conv1 (1x1) + bn2 + relu (bn2 scale / conv1 bias folded) -----------
    h1 = jnp.maximum(_mm(h0.astype(jnp.bfloat16), w1_ref[...]) + t2, 0.0)

    # ---- conv2 (3x3, circular pad) + bn3 + relu ------------------------------
    # dx-only im2col in bf16 (K = 3*Cint), dy handled by 3 accumulated matmuls
    # whose results are row-rotated (wrap) before summing.  No halo buffer.
    g = jnp.concatenate(
        [_shift_w(h1, dx - 1).astype(jnp.bfloat16) for dx in range(3)],
        axis=-1)                                     # (bn, H, W, 3*Cint) bf16
    acc = _shift_h(_mm(g, w2_ref[0]), -1)            # dy = 0 -> rows i-1
    acc = acc + _mm(g, w2_ref[1])                    # dy = 1 -> rows i
    acc = acc + _shift_h(_mm(g, w2_ref[2]), 1)       # dy = 2 -> rows i+1
    h2 = jnp.maximum(acc + t3, 0.0).astype(jnp.bfloat16)

    # ---- conv3 (1x1) + projection shortcut: ONE fused matmul ----------------
    # Re-read x from VMEM here so the f32 copy is not live across conv2.
    # NOTE: the residual path goes through bf16; fine for one block, consider
    # an f32 projection if many blocks are chained back-to-back.
    hx = jnp.concatenate([h2, x_ref[...].astype(jnp.bfloat16)], axis=-1)
    y = _mm(hx, w3p_ref[...]) + bo                   # (bn, H, W, Cout) f32

    if dense_out:
        # Lane-dense store: W*Cout lanes (multiple of 128) -> unmasked vst.
        o_ref[...] = y.reshape(bn, H, W * cout)
    else:
        o_ref[...] = y


# ----------------------------------------------------------------------------
# Wrapper
# ----------------------------------------------------------------------------
def _fold_bn(gamma, beta, mean, var):
    scale = gamma / jnp.sqrt(var + BN_EPS)
    shift = beta - mean * scale
    return scale.reshape(1, -1), shift.reshape(1, -1)


def _vmem_limit_bytes():
    # v7x: 64 MiB physical VMEM per TC (keep <= ~48 MiB); v5e/v6e: 128 MiB.
    try:
        cap = pltpu.get_tpu_info().vmem_capacity_bytes
    except Exception:
        cap = 64 * 1024 * 1024
    return int(min(0.75 * cap, 96 * 1024 * 1024))


def bottleneck_block(x_nchw, p, *, batch_tile=1, dense_out="auto"):
    """x_nchw: (N, Cin, H, W) float32 -> (N, Cout, H, W) float32 (eval mode)."""
    n, cin, h, w = x_nchw.shape
    cint = p['w1'].shape[1]
    cout = p['w3'].shape[1]
    assert n % batch_tile == 0

    # TODO(synk): when chaining blocks keep activations NHWC end-to-end and
    #             drop these transposes (a full extra HBM pass each).
    x = jnp.transpose(x_nchw, (0, 2, 3, 1))          # NHWC

    s1, t1 = _fold_bn(*p['bn1'])
    s2, t2 = _fold_bn(*p['bn2'])
    s3, t3 = _fold_bn(*p['bn3'])

    # Inference-mode algebraic folding (weights -> bf16 for the MXU;
    # element-wise scales/shifts stay f32 -- v5e has no bf16 VPU path):
    #   bn2(conv1(z))        = z @ (W1*s2)           + (s2*b1 + t2)
    #   bn3(conv2(z))        = im2col(z) @ (W2*s3)   + (s3*b2 + t3)
    #   conv3(z) + proj(x)   = [z, x] @ [[W3],[Wp]]  + (b3 + bp)
    w1f = (p['w1'] * s2).astype(jnp.bfloat16)                         # (Cin, Cint)
    w2f = (p['w2'] * s3.reshape(1, 1, 1, cint))                       # (3,3,Ci,Co)
    w2f = w2f.reshape(3, 3 * cint, cint).astype(jnp.bfloat16)         # rows=(dx,ci)
    w3p = jnp.concatenate([p['w3'], p['wp']], axis=0).astype(jnp.bfloat16)

    t2f = s2 * p['b1'] + t2                                           # (1, Cint)
    t3f = s3 * p['b2'] + t3                                           # (1, Cint)
    bof = p['b3'] + p['bp']                                           # (1, Cout)

    # One packed, resident (8, Cmax) table instead of six tiny inputs.
    cmax = max(cin, cint, cout)

    def row(v):
        v = v.reshape(-1)
        return jnp.pad(v, (0, cmax - v.shape[0]))

    zeros = jnp.zeros((cmax,), jnp.float32)
    vec = jnp.stack([row(s1), row(t1), row(t2f), row(t3f), row(bof),
                     zeros, zeros, zeros], axis=0)                    # (8, Cmax)

    bn_ = batch_tile
    grid = (n // bn_,)   # keep >= 2 grid steps so v7x's 2 TensorCores both work

    res2 = lambda i: (0, 0)
    res3 = lambda i: (0, 0, 0)
    in_specs = [
        pl.BlockSpec((bn_, h, w, cin), lambda i: (i, 0, 0, 0)),   # x (pipelined)
        pl.BlockSpec((8, cmax), res2),                            # packed vectors
        pl.BlockSpec((cin, cint), res2),                          # w1'
        pl.BlockSpec((3, 3 * cint, cint), res3),                  # w2'(dy)
        pl.BlockSpec((cint + cin, cout), res2),                   # [w3; wp]
    ]

    flops = 2 * n * h * w * (cin * cint + 9 * cint * cint + (cint + cin) * cout)
    bytes_accessed = (x.size * 4 + n * h * w * cout * 4 + vec.size * 4
                      + (w1f.size + w2f.size + w3p.size) * 2)
    cost = pl.CostEstimate(flops=flops, transcendentals=0,
                           bytes_accessed=bytes_accessed)

    def run(dense):
        if dense:
            out_shape = jax.ShapeDtypeStruct((n, h, w * cout), jnp.float32)
            out_spec = pl.BlockSpec((bn_, h, w * cout), lambda i: (i, 0, 0))
        else:
            out_shape = jax.ShapeDtypeStruct((n, h, w, cout), jnp.float32)
            out_spec = pl.BlockSpec((bn_, h, w, cout), lambda i: (i, 0, 0, 0))
        kern = functools.partial(bottleneck_kernel, cin=cin, cint=cint,
                                 cout=cout, dense_out=dense)
        out = pl.pallas_call(
            kern,
            out_shape=out_shape,
            grid=grid,
            in_specs=in_specs,
            out_specs=out_spec,
            compiler_params=pltpu.CompilerParams(
                dimension_semantics=("parallel",),
                vmem_limit_bytes=_vmem_limit_bytes()),
            cost_estimate=cost,
        )(x, vec, w1f, w2f, w3p)
        out = jax.block_until_ready(out)      # surface compile errors here
        if dense:
            out = out.reshape(n, h, w, cout)  # free relabel in the wrapper
        return jnp.transpose(out, (0, 3, 1, 2))

    if dense_out == "auto":
        # Prefer the lane-dense store (unmasked vst); if this Mosaic build does
        # not support the in-kernel minor-dim merge reshape, fall back to the
        # (identical-semantics) 4-D store.  Only valid for eager calls.
        try:
            return run(True)
        except Exception:
            return run(False)
    return run(bool(dense_out))


# ----------------------------------------------------------------------------
# Parameters and pure-JAX reference
# ----------------------------------------------------------------------------
def init_params(key, cin, cint, cout):
    ks = jax.random.split(key, 12)

    def wgt(k, shape, fan_in):
        return jax.random.normal(k, shape, jnp.float32) / np.sqrt(fan_in)

    def bn(k, c):
        k1, k2, k3, k4 = jax.random.split(k, 4)
        gamma = 1.0 + 0.1 * jax.random.normal(k1, (c,), jnp.float32)
        beta = 0.1 * jax.random.normal(k2, (c,), jnp.float32)
        mean = 0.1 * jax.random.normal(k3, (c,), jnp.float32)
        var = jnp.abs(1.0 + 0.1 * jax.random.normal(k4, (c,), jnp.float32))
        return (gamma, beta, mean, var)

    return {
        'w1': wgt(ks[0], (cin, cint), cin),
        'b1': wgt(ks[1], (cint,), cint).reshape(1, cint),
        'w2': wgt(ks[2], (3, 3, cint, cint), 9 * cint),   # HWIO
        'b2': wgt(ks[3], (cint,), cint).reshape(1, cint),
        'w3': wgt(ks[4], (cint, cout), cint),
        'b3': wgt(ks[5], (cout,), cout).reshape(1, cout),
        'wp': wgt(ks[6], (cin, cout), cin),
        'bp': wgt(ks[7], (cout,), cout).reshape(1, cout),
        'bn1': bn(ks[8], cin),
        'bn2': bn(ks[9], cint),
        'bn3': bn(ks[10], cint),
    }


def reference(x_nchw, p):
    """Pure-JAX f32 reference (independent path: lax.conv with wrap padding)."""
    x = jnp.transpose(x_nchw, (0, 2, 3, 1))
    hi = lax.Precision.HIGHEST

    def bn(h, g, b, m, v):
        return (h - m) / jnp.sqrt(v + BN_EPS) * g + b

    def conv1x1(h, w, b):
        return jnp.einsum('nhwc,cd->nhwd', h, w, precision=hi) + b

    short = conv1x1(x, p['wp'], p['bp'])
    h = jax.nn.relu(bn(x, *p['bn1']))
    h = conv1x1(h, p['w1'], p['b1'])
    h = jax.nn.relu(bn(h, *p['bn2']))
    hp = jnp.pad(h, ((0, 0), (1, 1), (1, 1), (0, 0)), mode='wrap')
    h = lax.conv_general_dilated(
        hp, p['w2'], window_strides=(1, 1), padding='VALID',
        dimension_numbers=('NHWC', 'HWIO', 'NHWC'), precision=hi) + p['b2']
    h = jax.nn.relu(bn(h, *p['bn3']))
    h = conv1x1(h, p['w3'], p['b3'])
    out = h + short
    return jnp.transpose(out, (0, 3, 1, 2))


if __name__ == "__main__":
    key = jax.random.PRNGKey(0)
    kx, kp = jax.random.split(key)

    N, Cin, Cint, Cout, H, W = 2, 4, 8, 16, 16, 16
    x = jax.random.normal(kx, (N, Cin, H, W), jnp.float32)
    params = init_params(kp, Cin, Cint, Cout)

    out = bottleneck_block(x, params)        # grid=(2,) -> both v7x TCs busy
    out = jax.block_until_ready(out)

    ref = reference(x, params)
    err = float(jnp.max(jnp.abs(out - ref)))
    scale = float(jnp.max(jnp.abs(ref)))
    assert out.shape == (N, Cout, H, W), out.shape
    # bf16 MXU inputs with f32 accumulation vs an f32 HIGHEST-precision ref.
    assert err / scale < 2e-2, f"relative error vs reference: {err / scale} (abs {err})"
    print("KERNEL_OK")
</pallas_src>

<mosaic_0001>
module attributes {stable_mosaic.version = 11 : i64} {
  func.func @bottleneck_kernel(%arg0: i32, %arg1: memref<1x16x16x4xf32, #tpu.memory_space<vmem>>, %arg2: memref<8x16xf32, #tpu.memory_space<vmem>>, %arg3: memref<4x8xbf16, #tpu.memory_space<vmem>>, %arg4: memref<3x24x8xbf16, #tpu.memory_space<vmem>>, %arg5: memref<12x16xbf16, #tpu.memory_space<vmem>>, %arg6: memref<1x16x256xf32, #tpu.memory_space<vmem>>) attributes {dimension_semantics = [#tpu.dimension_semantics<parallel>], iteration_bounds = array<i64: 2>, scalar_prefetch = 0 : i64, scratch_operands = 0 : i64, tpu.core_type = #tpu.core_type<tc>, window_params = [{transform_indices = @transform_0, window_bounds = array<i64: 1, 16, 16, 4>}, {pipeline_mode = #tpu.pipeline_mode<synchronous>, transform_indices = @transform_1, window_bounds = array<i64: 8, 16>}, {pipeline_mode = #tpu.pipeline_mode<synchronous>, transform_indices = @transform_2, window_bounds = array<i64: 4, 8>}, {pipeline_mode = #tpu.pipeline_mode<synchronous>, transform_indices = @transform_3, window_bounds = array<i64: 3, 24, 8>}, {pipeline_mode = #tpu.pipeline_mode<synchronous>, transform_indices = @transform_4, window_bounds = array<i64: 12, 16>}, {transform_indices = @transform_5, window_bounds = array<i64: 1, 16, 256>}]} {
    %c0 = arith.constant 0 : index
    %c0_0 = arith.constant 0 : index
    %0 = vector.load %arg2[%c0, %c0_0] : memref<8x16xf32, #tpu.memory_space<vmem>>, vector<1x4xf32>
    %1 = vector.shape_cast %0 : vector<1x4xf32> to vector<1x1x1x4xf32>
    %c1 = arith.constant 1 : index
    %c0_1 = arith.constant 0 : index
    %2 = vector.load %arg2[%c1, %c0_1] : memref<8x16xf32, #tpu.memory_space<vmem>>, vector<1x4xf32>
    %3 = vector.shape_cast %2 : vector<1x4xf32> to vector<1x1x1x4xf32>
    %c2 = arith.constant 2 : index
    %c0_2 = arith.constant 0 : index
    %4 = vector.load %arg2[%c2, %c0_2] : memref<8x16xf32, #tpu.memory_space<vmem>>, vector<1x8xf32>
    %5 = vector.shape_cast %4 : vector<1x8xf32> to vector<1x1x1x8xf32>
    %c3 = arith.constant 3 : index
    %c0_3 = arith.constant 0 : index
    %6 = vector.load %arg2[%c3, %c0_3] : memref<8x16xf32, #tpu.memory_space<vmem>>, vector<1x8xf32>
    %7 = vector.shape_cast %6 : vector<1x8xf32> to vector<1x1x1x8xf32>
    %c4 = arith.constant 4 : index
    %c0_4 = arith.constant 0 : index
    %8 = vector.load %arg2[%c4, %c0_4] : memref<8x16xf32, #tpu.memory_space<vmem>>, vector<1x16xf32>
    %9 = vector.shape_cast %8 : vector<1x16xf32> to vector<1x1x1x16xf32>
    %c0_5 = arith.constant 0 : index
    %c0_6 = arith.constant 0 : index
    %c0_7 = arith.constant 0 : index
    %c0_8 = arith.constant 0 : index
    %10 = vector.load %arg1[%c0_5, %c0_6, %c0_7, %c0_8] : memref<1x16x16x4xf32, #tpu.memory_space<vmem>>, vector<1x16x16x4xf32>
    %11 = vector.broadcast %1 : vector<1x1x1x4xf32> to vector<1x16x16x4xf32>
    %12 = arith.mulf %10, %11 : vector<1x16x16x4xf32>
    %13 = vector.broadcast %3 : vector<1x1x1x4xf32> to vector<1x16x16x4xf32>
    %14 = arith.addf %12, %13 : vector<1x16x16x4xf32>
    %cst = arith.constant 0.000000e+00 : f32
    %15 = vector.broadcast %cst : f32 to vector<1x16x16x4xf32>
    %16 = arith.maximumf %14, %15 : vector<1x16x16x4xf32>
    %17 = arith.truncf %16 : vector<1x16x16x4xf32> to vector<1x16x16x4xbf16>
    %c0_9 = arith.constant 0 : index
    %c0_10 = arith.constant 0 : index
    %18 = vector.load %arg3[%c0_9, %c0_10] : memref<4x8xbf16, #tpu.memory_space<vmem>>, vector<4x8xbf16>
    %19 = vector.shape_cast %17 : vector<1x16x16x4xbf16> to vector<256x4xbf16>
    %cst_11 = arith.constant dense<0.000000e+00> : vector<256x8xf32>
    %20 = tpu.matmul %19, %18, %cst_11 {dimension_numbers = #tpu.dot_dimension_numbers<[1], [0], [0], [1], [0, 0, 1, 1], [], []>} : vector<256x4xbf16>, vector<4x8xbf16>, vector<256x8xf32> -> vector<256x8xf32>
    %21 = vector.shape_cast %20 : vector<256x8xf32> to vector<1x16x16x8xf32>
    %22 = vector.broadcast %5 : vector<1x1x1x8xf32> to vector<1x16x16x8xf32>
    %23 = arith.addf %21, %22 : vector<1x16x16x8xf32>
    %cst_12 = arith.constant 0.000000e+00 : f32
    %24 = vector.broadcast %cst_12 : f32 to vector<1x16x16x8xf32>
    %25 = arith.maximumf %23, %24 : vector<1x16x16x8xf32>
    %26 = vector.extract_strided_slice %25 {offsets = [0, 0, 15, 0], sizes = [1, 16, 1, 8], strides = [1, 1, 1, 1]} : vector<1x16x16x8xf32> to vector<1x16x1x8xf32>
    %27 = vector.extract_strided_slice %25 {offsets = [0, 0, 0, 0], sizes = [1, 16, 15, 8], strides = [1, 1, 1, 1]} : vector<1x16x16x8xf32> to vector<1x16x15x8xf32>
    %28 = tpu.concatenate %26, %27 in 2 : vector<1x16x1x8xf32>, vector<1x16x15x8xf32> -> vector<1x16x16x8xf32>
    %29 = arith.truncf %28 : vector<1x16x16x8xf32> to vector<1x16x16x8xbf16>
    %30 = arith.truncf %25 : vector<1x16x16x8xf32> to vector<1x16x16x8xbf16>
    %31 = vector.extract_strided_slice %25 {offsets = [0, 0, 1, 0], sizes = [1, 16, 15, 8], strides = [1, 1, 1, 1]} : vector<1x16x16x8xf32> to vector<1x16x15x8xf32>
    %32 = vector.extract_strided_slice %25 {offsets = [0, 0, 0, 0], sizes = [1, 16, 1, 8], strides = [1, 1, 1, 1]} : vector<1x16x16x8xf32> to vector<1x16x1x8xf32>
    %33 = tpu.concatenate %31, %32 in 2 : vector<1x16x15x8xf32>, vector<1x16x1x8xf32> -> vector<1x16x16x8xf32>
    %34 = arith.truncf %33 : vector<1x16x16x8xf32> to vector<1x16x16x8xbf16>
    %35 = tpu.concatenate %29, %30, %34 in 3 : vector<1x16x16x8xbf16>, vector<1x16x16x8xbf16>, vector<1x16x16x8xbf16> -> vector<1x16x16x24xbf16>
    %c0_13 = arith.constant 0 : index
    %c0_14 = arith.constant 0 : index
    %c0_15 = arith.constant 0 : index
    %36 = vector.load %arg4[%c0_13, %c0_14, %c0_15] : memref<3x24x8xbf16, #tpu.memory_space<vmem>>, vector<1x24x8xbf16>
    %37 = vector.shape_cast %36 : vector<1x24x8xbf16> to vector<24x8xbf16>
    %38 = vector.shape_cast %35 : vector<1x16x16x24xbf16> to vector<256x24xbf16>
    %cst_16 = arith.constant dense<0.000000e+00> : vector<256x8xf32>
    %39 = tpu.matmul %38, %37, %cst_16 {dimension_numbers = #tpu.dot_dimension_numbers<[1], [0], [0], [1], [0, 0, 1, 1], [], []>} : vector<256x24xbf16>, vector<24x8xbf16>, vector<256x8xf32> -> vector<256x8xf32>
    %40 = vector.shape_cast %39 : vector<256x8xf32> to vector<1x16x16x8xf32>
    %41 = vector.extract_strided_slice %40 {offsets = [0, 15, 0, 0], sizes = [1, 1, 16, 8], strides = [1, 1, 1, 1]} : vector<1x16x16x8xf32> to vector<1x1x16x8xf32>
    %42 = vector.extract_strided_slice %40 {offsets = [0, 0, 0, 0], sizes = [1, 15, 16, 8], strides = [1, 1, 1, 1]} : vector<1x16x16x8xf32> to vector<1x15x16x8xf32>
    %43 = tpu.concatenate %41, %42 in 1 : vector<1x1x16x8xf32>, vector<1x15x16x8xf32> -> vector<1x16x16x8xf32>
    %c1_17 = arith.constant 1 : index
    %c0_18 = arith.constant 0 : index
    %c0_19 = arith.constant 0 : index
    %44 = vector.load %arg4[%c1_17, %c0_18, %c0_19] : memref<3x24x8xbf16, #tpu.memory_space<vmem>>, vector<1x24x8xbf16>
    %45 = vector.shape_cast %44 : vector<1x24x8xbf16> to vector<24x8xbf16>
    %46 = vector.shape_cast %35 : vector<1x16x16x24xbf16> to vector<256x24xbf16>
    %cst_20 = arith.constant dense<0.000000e+00> : vector<256x8xf32>
    %47 = tpu.matmul %46, %45, %cst_20 {dimension_numbers = #tpu.dot_dimension_numbers<[1], [0], [0], [1], [0, 0, 1, 1], [], []>} : vector<256x24xbf16>, vector<24x8xbf16>, vector<256x8xf32> -> vector<256x8xf32>
    %48 = vector.shape_cast %47 : vector<256x8xf32> to vector<1x16x16x8xf32>
    %49 = arith.addf %43, %48 : vector<1x16x16x8xf32>
    %c2_21 = arith.constant 2 : index
    %c0_22 = arith.constant 0 : index
    %c0_23 = arith.constant 0 : index
    %50 = vector.load %arg4[%c2_21, %c0_22, %c0_23] : memref<3x24x8xbf16, #tpu.memory_space<vmem>>, vector<1x24x8xbf16>
    %51 = vector.shape_cast %50 : vector<1x24x8xbf16> to vector<24x8xbf16>
    %52 = vector.shape_cast %35 : vector<1x16x16x24xbf16> to vector<256x24xbf16>
    %cst_24 = arith.constant dense<0.000000e+00> : vector<256x8xf32>
    %53 = tpu.matmul %52, %51, %cst_24 {dimension_numbers = #tpu.dot_dimension_numbers<[1], [0], [0], [1], [0, 0, 1, 1], [], []>} : vector<256x24xbf16>, vector<24x8xbf16>, vector<256x8xf32> -> vector<256x8xf32>
    %54 = vector.shape_cast %53 : vector<256x8xf32> to vector<1x16x16x8xf32>
    %55 = vector.extract_strided_slice %54 {offsets = [0, 1, 0, 0], sizes = [1, 15, 16, 8], strides = [1, 1, 1, 1]} : vector<1x16x16x8xf32> to vector<1x15x16x8xf32>
    %56 = vector.extract_strided_slice %54 {offsets = [0, 0, 0, 0], sizes = [1, 1, 16, 8], strides = [1, 1, 1, 1]} : vector<1x16x16x8xf32> to vector<1x1x16x8xf32>
    %57 = tpu.concatenate %55, %56 in 1 : vector<1x15x16x8xf32>, vector<1x1x16x8xf32> -> vector<1x16x16x8xf32>
    %58 = arith.addf %49, %57 : vector<1x16x16x8xf32>
    %59 = vector.broadcast %7 : vector<1x1x1x8xf32> to vector<1x16x16x8xf32>
    %60 = arith.addf %58, %59 : vector<1x16x16x8xf32>
    %cst_25 = arith.constant 0.000000e+00 : f32
    %61 = vector.broadcast %cst_25 : f32 to vector<1x16x16x8xf32>
    %62 = arith.maximumf %60, %61 : vector<1x16x16x8xf32>
    %63 = arith.truncf %62 : vector<1x16x16x8xf32> to vector<1x16x16x8xbf16>
    %c0_26 = arith.constant 0 : index
    %c0_27 = arith.constant 0 : index
    %c0_28 = arith.constant 0 : index
    %c0_29 = arith.constant 0 : index
    %64 = vector.load %arg1[%c0_26, %c0_27, %c0_28, %c0_29] : memref<1x16x16x4xf32, #tpu.memory_space<vmem>>, vector<1x16x16x4xf32>
    %65 = arith.truncf %64 : vector<1x16x16x4xf32> to vector<1x16x16x4xbf16>
    %66 = tpu.concatenate %63, %65 in 3 : vector<1x16x16x8xbf16>, vector<1x16x16x4xbf16> -> vector<1x16x16x12xbf16>
    %c0_30 = arith.constant 0 : index
    %c0_31 = arith.constant 0 : index
    %67 = vector.load %arg5[%c0_30, %c0_31] : memref<12x16xbf16, #tpu.memory_space<vmem>>, vector<12x16xbf16>
    %68 = vector.shape_cast %66 : vector<1x16x16x12xbf16> to vector<256x12xbf16>
    %cst_32 = arith.constant dense<0.000000e+00> : vector<256x16xf32>
    %69 = tpu.matmul %68, %67, %cst_32 {dimension_numbers = #tpu.dot_dimension_numbers<[1], [0], [0], [1], [0, 0, 1, 1], [], []>} : vector<256x12xbf16>, vector<12x16xbf16>, vector<256x16xf32> -> vector<256x16xf32>
    %70 = vector.shape_cast %69 : vector<256x16xf32> to vector<1x16x16x16xf32>
    %71 = vector.broadcast %9 : vector<1x1x1x16xf32> to vector<1x16x16x16xf32>
    %72 = arith.addf %70, %71 : vector<1x16x16x16xf32>
    %73 = vector.shape_cast %72 : vector<1x16x16x16xf32> to vector<1x16x256xf32>
    %c0_33 = arith.constant 0 : index
    %c0_34 = arith.constant 0 : index
    %c0_35 = arith.constant 0 : index
    %74 = vector.load %arg6[%c0_33, %c0_34, %c0_35] : memref<1x16x256xf32, #tpu.memory_space<vmem>>, vector<1x16x256xf32>
    tpu.vector_store %arg6[%c0_33, %c0_34, %c0_35], %73 {strides = array<i32>} : memref<1x16x256xf32, #tpu.memory_space<vmem>>, vector<1x16x256xf32>,
    return
  }
  func.func @transform_0(%arg0: i32) -> (i32, i32, i32, i32) {
    %c0_i32 = arith.constant 0 : i32
    %c0_i32_0 = arith.constant 0 : i32
    %c0_i32_1 = arith.constant 0 : i32
    %c0_i32_2 = arith.constant 0 : i32
    return %arg0, %c0_i32, %c0_i32_0, %c0_i32_1 : i32, i32, i32, i32
  }
  func.func @transform_1(%arg0: i32) -> (i32, i32) {
    %c0_i32 = arith.constant 0 : i32
    %c0_i32_0 = arith.constant 0 : i32
    %c0_i32_1 = arith.constant 0 : i32
    return %c0_i32, %c0_i32_0 : i32, i32
  }
  func.func @transform_2(%arg0: i32) -> (i32, i32) {
    %c0_i32 = arith.constant 0 : i32
    %c0_i32_0 = arith.constant 0 : i32
    %c0_i32_1 = arith.constant 0 : i32
    return %c0_i32, %c0_i32_0 : i32, i32
  }
  func.func @transform_3(%arg0: i32) -> (i32, i32, i32) {
    %c0_i32 = arith.constant 0 : i32
    %c0_i32_0 = arith.constant 0 : i32
    %c0_i32_1 = arith.constant 0 : i32
    %c0_i32_2 = arith.constant 0 : i32
    return %c0_i32, %c0_i32_0, %c0_i32_1 : i32, i32, i32
  }
  func.func @transform_4(%arg0: i32) -> (i32, i32) {
    %c0_i32 = arith.constant 0 : i32
    %c0_i32_0 = arith.constant 0 : i32
    %c0_i32_1 = arith.constant 0 : i32
    return %c0_i32, %c0_i32_0 : i32, i32
  }
  func.func @transform_5(%arg0: i32) -> (i32, i32, i32) {
    %c0_i32 = arith.constant 0 : i32
    %c0_i32_0 = arith.constant 0 : i32
    %c0_i32_1 = arith.constant 0 : i32
    return %arg0, %c0_i32, %c0_i32_0 : i32, i32, i32
  }
}

module attributes {stable_mosaic.version = 11 : i64} {
  func.func @bottleneck_kernel(%arg0: i32, %arg1: memref<1x16x16x4xf32, #tpu.memory_space<vmem>>, %arg2: memref<8x16xf32, #tpu.memory_space<vmem>>, %arg3: memref<4x8xbf16, #tpu.memory_space<vmem>>, %arg4: memref<3x24x8xbf16, #tpu.memory_space<vmem>>, %arg5: memref<12x16xbf16, #tpu.memory_space<vmem>>, %arg6: memref<1x16x16x16xf32, #tpu.memory_space<vmem>>) attributes {dimension_semantics = [#tpu.dimension_semantics<parallel>], iteration_bounds = array<i64: 2>, scalar_prefetch = 0 : i64, scratch_operands = 0 : i64, tpu.core_type = #tpu.core_type<tc>, window_params = [{transform_indices = @transform_0, window_bounds = array<i64: 1, 16, 16, 4>}, {pipeline_mode = #tpu.pipeline_mode<synchronous>, transform_indices = @transform_1, window_bounds = array<i64: 8, 16>}, {pipeline_mode = #tpu.pipeline_mode<synchronous>, transform_indices = @transform_2, window_bounds = array<i64: 4, 8>}, {pipeline_mode = #tpu.pipeline_mode<synchronous>, transform_indices = @transform_3, window_bounds = array<i64: 3, 24, 8>}, {pipeline_mode = #tpu.pipeline_mode<synchronous>, transform_indices = @transform_4, window_bounds = array<i64: 12, 16>}, {transform_indices = @transform_5, window_bounds = array<i64: 1, 16, 16, 16>}]} {
    %c0 = arith.constant 0 : index
    %c0_0 = arith.constant 0 : index
    %0 = vector.load %arg2[%c0, %c0_0] : memref<8x16xf32, #tpu.memory_space<vmem>>, vector<1x4xf32>
    %1 = vector.shape_cast %0 : vector<1x4xf32> to vector<1x1x1x4xf32>
    %c1 = arith.constant 1 : index
    %c0_1 = arith.constant 0 : index
    %2 = vector.load %arg2[%c1, %c0_1] : memref<8x16xf32, #tpu.memory_space<vmem>>, vector<1x4xf32>
    %3 = vector.shape_cast %2 : vector<1x4xf32> to vector<1x1x1x4xf32>
    %c2 = arith.constant 2 : index
    %c0_2 = arith.constant 0 : index
    %4 = vector.load %arg2[%c2, %c0_2] : memref<8x16xf32, #tpu.memory_space<vmem>>, vector<1x8xf32>
    %5 = vector.shape_cast %4 : vector<1x8xf32> to vector<1x1x1x8xf32>
    %c3 = arith.constant 3 : index
    %c0_3 = arith.constant 0 : index
    %6 = vector.load %arg2[%c3, %c0_3] : memref<8x16xf32, #tpu.memory_space<vmem>>, vector<1x8xf32>
    %7 = vector.shape_cast %6 : vector<1x8xf32> to vector<1x1x1x8xf32>
    %c4 = arith.constant 4 : index
    %c0_4 = arith.constant 0 : index
    %8 = vector.load %arg2[%c4, %c0_4] : memref<8x16xf32, #tpu.memory_space<vmem>>, vector<1x16xf32>
    %9 = vector.shape_cast %8 : vector<1x16xf32> to vector<1x1x1x16xf32>
    %c0_5 = arith.constant 0 : index
    %c0_6 = arith.constant 0 : index
    %c0_7 = arith.constant 0 : index
    %c0_8 = arith.constant 0 : index
    %10 = vector.load %arg1[%c0_5, %c0_6, %c0_7, %c0_8] : memref<1x16x16x4xf32, #tpu.memory_space<vmem>>, vector<1x16x16x4xf32>
    %11 = vector.broadcast %1 : vector<1x1x1x4xf32> to vector<1x16x16x4xf32>
    %12 = arith.mulf %10, %11 : vector<1x16x16x4xf32>
    %13 = vector.broadcast %3 : vector<1x1x1x4xf32> to vector<1x16x16x4xf32>
    %14 = arith.addf %12, %13 : vector<1x16x16x4xf32>
    %cst = arith.constant 0.000000e+00 : f32
    %15 = vector.broadcast %cst : f32 to vector<1x16x16x4xf32>
    %16 = arith.maximumf %14, %15 : vector<1x16x16x4xf32>
    %17 = arith.truncf %16 : vector<1x16x16x4xf32> to vector<1x16x16x4xbf16>
    %c0_9 = arith.constant 0 : index
    %c0_10 = arith.constant 0 : index
    %18 = vector.load %arg3[%c0_9, %c0_10] : memref<4x8xbf16, #tpu.memory_space<vmem>>, vector<4x8xbf16>
    %19 = vector.shape_cast %17 : vector<1x16x16x4xbf16> to vector<256x4xbf16>
    %cst_11 = arith.constant dense<0.000000e+00> : vector<256x8xf32>
    %20 = tpu.matmul %19, %18, %cst_11 {dimension_numbers = #tpu.dot_dimension_numbers<[1], [0], [0], [1], [0, 0, 1, 1], [], []>} : vector<256x4xbf16>, vector<4x8xbf16>, vector<256x8xf32> -> vector<256x8xf32>
    %21 = vector.shape_cast %20 : vector<256x8xf32> to vector<1x16x16x8xf32>
    %22 = vector.broadcast %5 : vector<1x1x1x8xf32> to vector<1x16x16x8xf32>
    %23 = arith.addf %21, %22 : vector<1x16x16x8xf32>
    %cst_12 = arith.constant 0.000000e+00 : f32
    %24 = vector.broadcast %cst_12 : f32 to vector<1x16x16x8xf32>
    %25 = arith.maximumf %23, %24 : vector<1x16x16x8xf32>
    %26 = vector.extract_strided_slice %25 {offsets = [0, 0, 15, 0], sizes = [1, 16, 1, 8], strides = [1, 1, 1, 1]} : vector<1x16x16x8xf32> to vector<1x16x1x8xf32>
    %27 = vector.extract_strided_slice %25 {offsets = [0, 0, 0, 0], sizes = [1, 16, 15, 8], strides = [1, 1, 1, 1]} : vector<1x16x16x8xf32> to vector<1x16x15x8xf32>
    %28 = tpu.concatenate %26, %27 in 2 : vector<1x16x1x8xf32>, vector<1x16x15x8xf32> -> vector<1x16x16x8xf32>
    %29 = arith.truncf %28 : vector<1x16x16x8xf32> to vector<1x16x16x8xbf16>
    %30 = arith.truncf %25 : vector<1x16x16x8xf32> to vector<1x16x16x8xbf16>
    %31 = vector.extract_strided_slice %25 {offsets = [0, 0, 1, 0], sizes = [1, 16, 15, 8], strides = [1, 1, 1, 1]} : vector<1x16x16x8xf32> to vector<1x16x15x8xf32>
    %32 = vector.extract_strided_slice %25 {offsets = [0, 0, 0, 0], sizes = [1, 16, 1, 8], strides = [1, 1, 1, 1]} : vector<1x16x16x8xf32> to vector<1x16x1x8xf32>
    %33 = tpu.concatenate %31, %32 in 2 : vector<1x16x15x8xf32>, vector<1x16x1x8xf32> -> vector<1x16x16x8xf32>
    %34 = arith.truncf %33 : vector<1x16x16x8xf32> to vector<1x16x16x8xbf16>
    %35 = tpu.concatenate %29, %30, %34 in 3 : vector<1x16x16x8xbf16>, vector<1x16x16x8xbf16>, vector<1x16x16x8xbf16> -> vector<1x16x16x24xbf16>
    %c0_13 = arith.constant 0 : index
    %c0_14 = arith.constant 0 : index
    %c0_15 = arith.constant 0 : index
    %36 = vector.load %arg4[%c0_13, %c0_14, %c0_15] : memref<3x24x8xbf16, #tpu.memory_space<vmem>>, vector<1x24x8xbf16>
    %37 = vector.shape_cast %36 : vector<1x24x8xbf16> to vector<24x8xbf16>
    %38 = vector.shape_cast %35 : vector<1x16x16x24xbf16> to vector<256x24xbf16>
    %cst_16 = arith.constant dense<0.000000e+00> : vector<256x8xf32>
    %39 = tpu.matmul %38, %37, %cst_16 {dimension_numbers = #tpu.dot_dimension_numbers<[1], [0], [0], [1], [0, 0, 1, 1], [], []>} : vector<256x24xbf16>, vector<24x8xbf16>, vector<256x8xf32> -> vector<256x8xf32>
    %40 = vector.shape_cast %39 : vector<256x8xf32> to vector<1x16x16x8xf32>
    %41 = vector.extract_strided_slice %40 {offsets = [0, 15, 0, 0], sizes = [1, 1, 16, 8], strides = [1, 1, 1, 1]} : vector<1x16x16x8xf32> to vector<1x1x16x8xf32>
    %42 = vector.extract_strided_slice %40 {offsets = [0, 0, 0, 0], sizes = [1, 15, 16, 8], strides = [1, 1, 1, 1]} : vector<1x16x16x8xf32> to vector<1x15x16x8xf32>
    %43 = tpu.concatenate %41, %42 in 1 : vector<1x1x16x8xf32>, vector<1x15x16x8xf32> -> vector<1x16x16x8xf32>
    %c1_17 = arith.constant 1 : index
    %c0_18 = arith.constant 0 : index
    %c0_19 = arith.constant 0 : index
    %44 = vector.load %arg4[%c1_17, %c0_18, %c0_19] : memref<3x24x8xbf16, #tpu.memory_space<vmem>>, vector<1x24x8xbf16>
    %45 = vector.shape_cast %44 : vector<1x24x8xbf16> to vector<24x8xbf16>
    %46 = vector.shape_cast %35 : vector<1x16x16x24xbf16> to vector<256x24xbf16>
    %cst_20 = arith.constant dense<0.000000e+00> : vector<256x8xf32>
    %47 = tpu.matmul %46, %45, %cst_20 {dimension_numbers = #tpu.dot_dimension_numbers<[1], [0], [0], [1], [0, 0, 1, 1], [], []>} : vector<256x24xbf16>, vector<24x8xbf16>, vector<256x8xf32> -> vector<256x8xf32>
    %48 = vector.shape_cast %47 : vector<256x8xf32> to vector<1x16x16x8xf32>
    %49 = arith.addf %43, %48 : vector<1x16x16x8xf32>
    %c2_21 = arith.constant 2 : index
    %c0_22 = arith.constant 0 : index
    %c0_23 = arith.constant 0 : index
    %50 = vector.load %arg4[%c2_21, %c0_22, %c0_23] : memref<3x24x8xbf16, #tpu.memory_space<vmem>>, vector<1x24x8xbf16>
    %51 = vector.shape_cast %50 : vector<1x24x8xbf16> to vector<24x8xbf16>
    %52 = vector.shape_cast %35 : vector<1x16x16x24xbf16> to vector<256x24xbf16>
    %cst_24 = arith.constant dense<0.000000e+00> : vector<256x8xf32>
    %53 = tpu.matmul %52, %51, %cst_24 {dimension_numbers = #tpu.dot_dimension_numbers<[1], [0], [0], [1], [0, 0, 1, 1], [], []>} : vector<256x24xbf16>, vector<24x8xbf16>, vector<256x8xf32> -> vector<256x8xf32>
    %54 = vector.shape_cast %53 : vector<256x8xf32> to vector<1x16x16x8xf32>
    %55 = vector.extract_strided_slice %54 {offsets = [0, 1, 0, 0], sizes = [1, 15, 16, 8], strides = [1, 1, 1, 1]} : vector<1x16x16x8xf32> to vector<1x15x16x8xf32>
    %56 = vector.extract_strided_slice %54 {offsets = [0, 0, 0, 0], sizes = [1, 1, 16, 8], strides = [1, 1, 1, 1]} : vector<1x16x16x8xf32> to vector<1x1x16x8xf32>
    %57 = tpu.concatenate %55, %56 in 1 : vector<1x15x16x8xf32>, vector<1x1x16x8xf32> -> vector<1x16x16x8xf32>
    %58 = arith.addf %49, %57 : vector<1x16x16x8xf32>
    %59 = vector.broadcast %7 : vector<1x1x1x8xf32> to vector<1x16x16x8xf32>
    %60 = arith.addf %58, %59 : vector<1x16x16x8xf32>
    %cst_25 = arith.constant 0.000000e+00 : f32
    %61 = vector.broadcast %cst_25 : f32 to vector<1x16x16x8xf32>
    %62 = arith.maximumf %60, %61 : vector<1x16x16x8xf32>
    %63 = arith.truncf %62 : vector<1x16x16x8xf32> to vector<1x16x16x8xbf16>
    %c0_26 = arith.constant 0 : index
    %c0_27 = arith.constant 0 : index
    %c0_28 = arith.constant 0 : index
    %c0_29 = arith.constant 0 : index
    %64 = vector.load %arg1[%c0_26, %c0_27, %c0_28, %c0_29] : memref<1x16x16x4xf32, #tpu.memory_space<vmem>>, vector<1x16x16x4xf32>
    %65 = arith.truncf %64 : vector<1x16x16x4xf32> to vector<1x16x16x4xbf16>
    %66 = tpu.concatenate %63, %65 in 3 : vector<1x16x16x8xbf16>, vector<1x16x16x4xbf16> -> vector<1x16x16x12xbf16>
    %c0_30 = arith.constant 0 : index
    %c0_31 = arith.constant 0 : index
    %67 = vector.load %arg5[%c0_30, %c0_31] : memref<12x16xbf16, #tpu.memory_space<vmem>>, vector<12x16xbf16>
    %68 = vector.shape_cast %66 : vector<1x16x16x12xbf16> to vector<256x12xbf16>
    %cst_32 = arith.constant dense<0.000000e+00> : vector<256x16xf32>
    %69 = tpu.matmul %68, %67, %cst_32 {dimension_numbers = #tpu.dot_dimension_numbers<[1], [0], [0], [1], [0, 0, 1, 1], [], []>} : vector<256x12xbf16>, vector<12x16xbf16>, vector<256x16xf32> -> vector<256x16xf32>
    %70 = vector.shape_cast %69 : vector<256x16xf32> to vector<1x16x16x16xf32>
    %71 = vector.broadcast %9 : vector<1x1x1x16xf32> to vector<1x16x16x16xf32>
    %72 = arith.addf %70, %71 : vector<1x16x16x16xf32>
    %c0_33 = arith.constant 0 : index
    %c0_34 = arith.constant 0 : index
    %c0_35 = arith.constant 0 : index
    %c0_36 = arith.constant 0 : index
    %73 = vector.load %arg6[%c0_33, %c0_34, %c0_35, %c0_36] : memref<1x16x16x16xf32, #tpu.memory_space<vmem>>, vector<1x16x16x16xf32>
    tpu.vector_store %arg6[%c0_33, %c0_34, %c0_35, %c0_36], %72 {strides = array<i32>} : memref<1x16x16x16xf32, #tpu.memory_space<vmem>>, vector<1x16x16x16xf32>,
    return
  }
  func.func @transform_0(%arg0: i32) -> (i32, i32, i32, i32) {
    %c0_i32 = arith.constant 0 : i32
    %c0_i32_0 = arith.constant 0 : i32
    %c0_i32_1 = arith.constant 0 : i32
    %c0_i32_2 = arith.constant 0 : i32
    return %arg0, %c0_i32, %c0_i32_0, %c0_i32_1 : i32, i32, i32, i32
  }
  func.func @transform_1(%arg0: i32) -> (i32, i32) {
    %c0_i32 = arith.constant 0 : i32
    %c0_i32_0 = arith.constant 0 : i32
    %c0_i32_1 = arith.constant 0 : i32
    return %c0_i32, %c0_i32_0 : i32, i32
  }
  func.func @transform_2(%arg0: i32) -> (i32, i32) {
    %c0_i32 = arith.constant 0 : i32
    %c0_i32_0 = arith.constant 0 : i32
    %c0_i32_1 = arith.constant 0 : i32
    return %c0_i32, %c0_i32_0 : i32, i32
  }
  func.func @transform_3(%arg0: i32) -> (i32, i32, i32) {
    %c0_i32 = arith.constant 0 : i32
    %c0_i32_0 = arith.constant 0 : i32
    %c0_i32_1 = arith.constant 0 : i32
    %c0_i32_2 = arith.constant 0 : i32
    return %c0_i32, %c0_i32_0, %c0_i32_1 : i32, i32, i32
  }
  func.func @transform_4(%arg0: i32) -> (i32, i32) {
    %c0_i32 = arith.constant 0 : i32
    %c0_i32_0 = arith.constant 0 : i32
    %c0_i32_1 = arith.constant 0 : i32
    return %c0_i32, %c0_i32_0 : i32, i32
  }
  func.func @transform_5(%arg0: i32) -> (i32, i32, i32, i32) {
    %c0_i32 = arith.constant 0 : i32
    %c0_i32_0 = arith.constant 0 : i32
    %c0_i32_1 = arith.constant 0 : i32
    %c0_i32_2 = arith.constant 0 : i32
    return %arg0, %c0_i32, %c0_i32_0, %c0_i32_1 : i32, i32, i32, i32
  }
}

</mosaic_0001>

<llo_original>
// kernel: tpu_custom_call.1
$region0: #{tpu_custom_call.1}
  #allocation0 [shape = 'u32[]', space=smem, size = 0x4, offset = 0x4, fixed_abs, tag = 'smem constant byte address 0x4 - core index']
  #allocation1 [shape = 'u32[144,128]{1,0:T(1,128)}', space=vmem, size = 0x12000, scoped, tag = 'internal scratch']
  %s0 = inlined_call_operand.vmem [shape: f32[2,16,16,4], index: 0, kind: input, shape index: {}]
  %s1 = inlined_call_operand.vmem [shape: f32[8,16], index: 1, kind: input, shape index: {}]
  %s2 = inlined_call_operand.vmem [shape: bf16[4,8], index: 2, kind: input, shape index: {}]
  %s3 = inlined_call_operand.vmem [shape: bf16[3,24,8], index: 3, kind: input, shape index: {}]
  %s4 = inlined_call_operand.vmem [shape: bf16[12,16], index: 4, kind: input, shape index: {}]
  %s5 = inlined_call_operand.hbm [shape: f32[2,16,256], index: 5, kind: output, shape index: {}]
  %s6 = sld [smem:[#allocation0]]
  $region53: #{tpu_custom_call.1} parent=0
    _
  %s8 = ssub.s32 1, %s6
  %s9 = scalar_select 0, %s8, %s6
  $region1: #{tpu_custom_call.1} parent=0
    #allocation2 [shape = 'u8[32768]{0}', space=vmem, size = 0x8000, scoped, tag = 'output window, operand 0']
    #allocation3 [shape = 's32[2]{0}', space=sflag, size = 0x8, scoped, tag = 'scoped memory for tpu_custom_call.1']
    %10 = vsyncpa [#allocation3], 0
    %s11 = scalar_lea.sflag [#allocation3], 1
    %12 = vsyncpa %s11, 0
    loop: start=0, step=1, limit=4
    $region2: #{tpu_custom_call.1} parent=1 // loop_pre_header
      _
    $region3: #{tpu_custom_call.1} parent=1 // loop_header
      %s14 = sphi 0, %s18
      %p15 = scmp.ge.s32.totalorder %s14, 4
      %s24 = sphi 0, %s26
      %s27 = sphi 0, %s24
      %s28 = sphi 0, %s27
      %s44 = sphi 0, %s28
      %s48 = sphi 0, %s48
      %s50 = sphi 0, %s48
      %s51 = sphi 0, %s50
      %s65 = sphi 0, %s51
      %s69 = sphi 0, %s69
      %s71 = sphi 0, %s69
      %s72 = sphi 0, %s71
      %s86 = sphi 0, %s72
      %s90 = sphi 0, %s90
      %s92 = sphi 0, %s90
      %s93 = sphi 0, %s92
      %s107 = sphi 0, %s93
      %s111 = sphi 0, %s111
      %s113 = sphi 0, %s111
      %s114 = sphi 0, %s113
      %s128 = sphi 0, %s114
      %s134 = sphi 0, %s136
      %s137 = sphi 0, %s134
      %s138 = sphi 0, %s137
      %s154 = sphi 0, %s138
    $region4: #{tpu_custom_call.1} parent=1 // loop_header_branch
      %17 = sbr.rel (%p15) target = $region8
    $region5: #{tpu_custom_call.1} parent=1 // loop_body
      %s19 = ssub.s32 %s14, 1
      %s20 = ssub.s32 %s14, 2
      %s21 = sadd.s32 %s14, 1
      %s22 = ssub.s32 %s14, %s21
      %p23 = scmp.eq.s32.totalorder %s22, 0
      %s25 = sadd.s32 %s24, 1
      %s26 = scalar_select %p23, %s24, %s25
      %p29 = pneg %p23
      %p30 = scmp.eq.s32.totalorder %s14, 1
      %p31 = por %p29, %p30
      %p32 = scmp.ne.s32.totalorder %s24, %s27
      %p33 = scmp.eq.s32.totalorder %s14, 0
      %p34 = por %p32, %p33
      %p35 = scmp.ne.s32.totalorder %s24, %s27
      %p36 = scmp.eq.s32.totalorder %s19, 1
      %p37 = por %p35, %p36
      %p38 = scmp.ne.s32.totalorder %s27, %s28
      %p39 = scmp.eq.s32.totalorder %s19, 0
      %p40 = por %p38, %p39
      %p41 = scmp.ne.s32.totalorder %s27, %s28
      %p42 = scmp.eq.s32.totalorder %s20, 1
      %p43 = por %p41, %p42
      %p45 = scmp.ne.s32.totalorder %s28, %s44
      %p46 = scmp.eq.s32.totalorder %s20, 0
      %p47 = por %p45, %p46
      %s49 = sadd.s32 %s48, 1
      %p52 = scmp.eq.s32.totalorder %s14, 1
      %p53 = scmp.ne.s32.totalorder %s48, %s50
      %p54 = scmp.eq.s32.totalorder %s14, 0
      %p55 = por %p53, %p54
      %p56 = scmp.ne.s32.totalorder %s48, %s50
      %p57 = scmp.eq.s32.totalorder %s19, 1
      %p58 = por %p56, %p57
      %p59 = scmp.ne.s32.totalorder %s50, %s51
      %p60 = scmp.eq.s32.totalorder %s19, 0
      %p61 = por %p59, %p60
      %p62 = scmp.ne.s32.totalorder %s50, %s51
      %p63 = scmp.eq.s32.totalorder %s20, 1
      %p64 = por %p62, %p63
      %p66 = scmp.ne.s32.totalorder %s51, %s65
      %p67 = scmp.eq.s32.totalorder %s20, 0
      %p68 = por %p66, %p67
      %s70 = sadd.s32 %s69, 1
      %p73 = scmp.eq.s32.totalorder %s14, 1
      %p74 = scmp.ne.s32.totalorder %s69, %s71
      %p75 = scmp.eq.s32.totalorder %s14, 0
      %p76 = por %p74, %p75
      %p77 = scmp.ne.s32.totalorder %s69, %s71
      %p78 = scmp.eq.s32.totalorder %s19, 1
      %p79 = por %p77, %p78
      %p80 = scmp.ne.s32.totalorder %s71, %s72
      %p81 = scmp.eq.s32.totalorder %s19, 0
      %p82 = por %p80, %p81
      %p83 = scmp.ne.s32.totalorder %s71, %s72
      %p84 = scmp.eq.s32.totalorder %s20, 1
      %p85 = por %p83, %p84
      %p87 = scmp.ne.s32.totalorder %s72, %s86
      %p88 = scmp.eq.s32.totalorder %s20, 0
      %p89 = por %p87, %p88
      %s91 = sadd.s32 %s90, 1
      %p94 = scmp.eq.s32.totalorder %s14, 1
      %p95 = scmp.ne.s32.totalorder %s90, %s92
      %p96 = scmp.eq.s32.totalorder %s14, 0
      %p97 = por %p95, %p96
      %p98 = scmp.ne.s32.totalorder %s90, %s92
      %p99 = scmp.eq.s32.totalorder %s19, 1
      %p100 = por %p98, %p99
      %p101 = scmp.ne.s32.totalorder %s92, %s93
      %p102 = scmp.eq.s32.totalorder %s19, 0
      %p103 = por %p101, %p102
      %p104 = scmp.ne.s32.totalorder %s92, %s93
      %p105 = scmp.eq.s32.totalorder %s20, 1
      %p106 = por %p104, %p105
      %p108 = scmp.ne.s32.totalorder %s93, %s107
      %p109 = scmp.eq.s32.totalorder %s20, 0
      %p110 = por %p108, %p109
      %s112 = sadd.s32 %s111, 1
      %p115 = scmp.eq.s32.totalorder %s14, 1
      %p116 = scmp.ne.s32.totalorder %s111, %s113
      %p117 = scmp.eq.s32.totalorder %s14, 0
      %p118 = por %p116, %p117
      %p119 = scmp.ne.s32.totalorder %s111, %s113
      %p120 = scmp.eq.s32.totalorder %s19, 1
      %p121 = por %p119, %p120
      %p122 = scmp.ne.s32.totalorder %s113, %s114
      %p123 = scmp.eq.s32.totalorder %s19, 0
      %p124 = por %p122, %p123
      %p125 = scmp.ne.s32.totalorder %s113, %s114
      %p126 = scmp.eq.s32.totalorder %s20, 1
      %p127 = por %p125, %p126
      %p129 = scmp.ne.s32.totalorder %s114, %s128
      %p130 = scmp.eq.s32.totalorder %s20, 0
      %p131 = por %p129, %p130
      %s132 = ssub.s32 %s14, %s21
      %p133 = scmp.eq.s32.totalorder %s132, 0
      %s135 = sadd.s32 %s134, 1
      %s136 = scalar_select %p133, %s134, %s135
      %p139 = pneg %p133
      %p140 = scmp.eq.s32.totalorder %s14, 1
      %p141 = por %p139, %p140
      %p142 = scmp.ne.s32.totalorder %s134, %s137
      %p143 = scmp.eq.s32.totalorder %s14, 0
      %p144 = por %p142, %p143
      %p145 = scmp.ne.s32.totalorder %s134, %s137
      %p146 = scmp.eq.s32.totalorder %s19, 1
      %p147 = por %p145, %p146
      %p148 = scmp.ne.s32.totalorder %s137, %s138
      %p149 = scmp.eq.s32.totalorder %s19, 0
      %p150 = por %p148, %p149
      %p151 = scmp.ne.s32.totalorder %s137, %s138
      %p152 = scmp.eq.s32.totalorder %s20, 1
      %p153 = por %p151, %p152
      %p155 = scmp.ne.s32.totalorder %s138, %s154
      %p156 = scmp.eq.s32.totalorder %s20, 0
      %p157 = por %p155, %p156
      %p158 = scmp.le.s32.totalorder 1, %s14
      %p159 = scmp.lt.s32.totalorder %s14, 3
      %p160 = pnand %p158, %p159
      %p161 = pneg %p160
      // Predicated region
      $region9: #{tpu_custom_call.1} parent=5 // pred_check
        _
      $region10: #{tpu_custom_call.1} parent=5 // pred_check_branch
        %163 = sbr.rel (%p160) target = $region12
      $region11: #{tpu_custom_call.1} parent=5 // pred_region
        %s164 = ssub.s32 %s14, 1
        // Predicated region
        $region13: #{tpu_custom_call.1} parent=11 // pred_check
          %p165 = pneg %p61
        $region14: #{tpu_custom_call.1} parent=11 // pred_check_branch
          %167 = sbr.rel (%p165) target = $region16
        $region15: #{tpu_custom_call.1} parent=11 // pred_region
          _
        $region16: #{tpu_custom_call.1} parent=11 // pred_fallthru
          _
        // Predicated region
        $region17: #{tpu_custom_call.1} parent=11 // pred_check
          %p168 = pneg %p82
        $region18: #{tpu_custom_call.1} parent=11 // pred_check_branch
          %170 = sbr.rel (%p168) target = $region20
        $region19: #{tpu_custom_call.1} parent=11 // pred_region
          _
        $region20: #{tpu_custom_call.1} parent=11 // pred_fallthru
          _
        // Predicated region
        $region21: #{tpu_custom_call.1} parent=11 // pred_check
          %p171 = pneg %p103
        $region22: #{tpu_custom_call.1} parent=11 // pred_check_branch
          %173 = sbr.rel (%p171) target = $region24
        $region23: #{tpu_custom_call.1} parent=11 // pred_region
          _
        $region24: #{tpu_custom_call.1} parent=11 // pred_fallthru
          _
        // Predicated region
        $region25: #{tpu_custom_call.1} parent=11 // pred_check
          %p174 = pneg %p124
        $region26: #{tpu_custom_call.1} parent=11 // pred_check_branch
          %176 = sbr.rel (%p174) target = $region28
        $region27: #{tpu_custom_call.1} parent=11 // pred_region
          _
        $region28: #{tpu_custom_call.1} parent=11 // pred_fallthru
          _
      $region12: #{tpu_custom_call.1} parent=5 // pred_fallthru
        _
      %p177 = scmp.lt.s32.totalorder %s14, 2
      // Predicated region
      $region29: #{tpu_custom_call.1} parent=5 // pred_check
        %p178 = pneg %p177
      $region30: #{tpu_custom_call.1} parent=5 // pred_check_branch
        %180 = sbr.rel (%p178) target = $region32
      $region31: #{tpu_custom_call.1} parent=5 // pred_region
        // Predicated region
        $region33: #{tpu_custom_call.1} parent=31 // pred_check
          %p181 = pneg %p34
        $region34: #{tpu_custom_call.1} parent=31 // pred_check_branch
          %183 = sbr.rel (%p181) target = $region36
        $region35: #{tpu_custom_call.1} parent=31 // pred_region
          %p184 = scmp.lt.s32.totalorder %s14, 1
          %s185 = scalar_select %p184, %s14, 1
          %s186 = smul.addr %s185, 32
          %s187 = smul.addr %s186, 8
          %s188 = scalar_lea.vmem %s0, %s187
        $region36: #{tpu_custom_call.1} parent=31 // pred_fallthru
          _
      $region32: #{tpu_custom_call.1} parent=5 // pred_fallthru
        _
      %p189 = scmp.le.s32.totalorder 1, %s14
      %p190 = scmp.lt.s32.totalorder %s14, 3
      %p191 = pnand %p189, %p190
      %p192 = pneg %p191
      // Predicated region
      $region37: #{tpu_custom_call.1} parent=5 // pred_check
        _
      $region38: #{tpu_custom_call.1} parent=5 // pred_check_branch
        %194 = sbr.rel (%p191) target = $region40
      $region39: #{tpu_custom_call.1} parent=5 // pred_region
        %s195 = ssub.s32 %s14, 1
        %p196 = scmp.lt.s32.totalorder %s19, 1
        %s197 = scalar_select %p196, %s19, 1
        %s198 = smul.addr %s197, 32
        %s199 = smul.addr %s198, 8
        %s200 = scalar_lea.vmem %s0, %s199
        %p201 = pneg %p40
        %p202 = pneg %p37
        %p203 = pneg %p61
        %p204 = pneg %p58
        %p205 = pneg %p82
        %p206 = pneg %p79
        %p207 = pneg %p103
        %p208 = pneg %p100
        %p209 = pneg %p124
        %p210 = pneg %p121
        %p211 = pneg %p150
        %p212 = pneg %p147
        %s213 = sand.u32 %s137, 1
        %s214 = scalar_lea.sflag [#allocation3], %s213
        %s215 = sand.u32 %s137, 1
        %s216 = smul.addr %s215, 32
        %s217 = scalar_lea.vmem [#allocation2], %s216
        %p218 = scmp.lt.s32.totalorder %s19, 1
        %s219 = scalar_select %p218, %s19, 1
        %s220 = smul.addr %s219, 32
        %s221 = smul.addr %s220, 8
        %s222 = scalar_lea.vmem %s0, %s221
        %v224 = vld [vmem:[%s1] sm:$0x1]
        %v225 = vld [vmem:[%s1 + $0x1] sm:$0x1]
        %v226 = vld [vmem:[%s1 + $0x2] sm:$0x1]
        %v227 = vld [vmem:[%s1 + $0x3] sm:$0x1]
        %v228 = vld [vmem:[%s1 + $0x4] sm:$0x1]
        %v229 = vld [vmem:[%s222] sm:$0xff]
        %v230 = vld [vmem:[%s222 + $0x8] sm:$0xff]
        %v231 = vld [vmem:[%s222 + $0x10] sm:$0xff]
        %v232 = vld [vmem:[%s222 + $0x18] sm:$0xff]
        %v233 = vld [vmem:[%s222 + $0x20] sm:$0xff]
        %v234 = vld [vmem:[%s222 + $0x28] sm:$0xff]
        %v235 = vld [vmem:[%s222 + $0x30] sm:$0xff]
        %v236 = vld [vmem:[%s222 + $0x38] sm:$0xff]
        %v237 = vld [vmem:[%s222 + $0x40] sm:$0xff]
        %v238 = vld [vmem:[%s222 + $0x48] sm:$0xff]
        %v239 = vld [vmem:[%s222 + $0x50] sm:$0xff]
        %v240 = vld [vmem:[%s222 + $0x58] sm:$0xff]
        %v241 = vld [vmem:[%s222 + $0x60] sm:$0xff]
        %v242 = vld [vmem:[%s222 + $0x68] sm:$0xff]
        %v243 = vld [vmem:[%s222 + $0x70] sm:$0xff]
        %v244 = vld [vmem:[%s222 + $0x78] sm:$0xff]
        %v245 = vld [vmem:[%s222 + $0x80] sm:$0xff]
        %v246 = vld [vmem:[%s222 + $0x88] sm:$0xff]
        %v247 = vld [vmem:[%s222 + $0x90] sm:$0xff]
        %v248 = vld [vmem:[%s222 + $0x98] sm:$0xff]
        %v249 = vld [vmem:[%s222 + $0xa0] sm:$0xff]
        %v250 = vld [vmem:[%s222 + $0xa8] sm:$0xff]
        %v251 = vld [vmem:[%s222 + $0xb0] sm:$0xff]
        %v252 = vld [vmem:[%s222 + $0xb8] sm:$0xff]
        %v253 = vld [vmem:[%s222 + $0xc0] sm:$0xff]
        %v254 = vld [vmem:[%s222 + $0xc8] sm:$0xff]
        %v255 = vld [vmem:[%s222 + $0xd0] sm:$0xff]
        %v256 = vld [vmem:[%s222 + $0xd8] sm:$0xff]
        %v257 = vld [vmem:[%s222 + $0xe0] sm:$0xff]
        %v258 = vld [vmem:[%s222 + $0xe8] sm:$0xff]
        %v259 = vld [vmem:[%s222 + $0xf0] sm:$0xff]
        %v260 = vld [vmem:[%s222 + $0xf8] sm:$0xff]
        %v261 = vlaneseq
        %v262 = vshrl.u32 %v261, 7
        %v263 = vsub.s32 0, %v262
        %v264 = vrot.slane %v224, %v263
        %v265 = vmul.f32 %v229, %v264
        %v266 = vmul.f32 %v230, %v264
        %v267 = vmul.f32 %v231, %v264
        %v268 = vmul.f32 %v232, %v264
        %v269 = vmul.f32 %v233, %v264
        %v270 = vmul.f32 %v234, %v264
        %v271 = vmul.f32 %v235, %v264
        %v272 = vmul.f32 %v236, %v264
        %v273 = vmul.f32 %v237, %v264
        %v274 = vmul.f32 %v238, %v264
        %v275 = vmul.f32 %v239, %v264
        %v276 = vmul.f32 %v240, %v264
        %v277 = vmul.f32 %v241, %v264
        %v278 = vmul.f32 %v242, %v264
        %v279 = vmul.f32 %v243, %v264
        %v280 = vmul.f32 %v244, %v264
        %v281 = vmul.f32 %v245, %v264
        %v282 = vmul.f32 %v246, %v264
        %v283 = vmul.f32 %v247, %v264
        %v284 = vmul.f32 %v248, %v264
        %v285 = vmul.f32 %v249, %v264
        %v286 = vmul.f32 %v250, %v264
        %v287 = vmul.f32 %v251, %v264
        %v288 = vmul.f32 %v252, %v264
        %v289 = vmul.f32 %v253, %v264
        %v290 = vmul.f32 %v254, %v264
        %v291 = vmul.f32 %v255, %v264
        %v292 = vmul.f32 %v256, %v264
        %v293 = vmul.f32 %v257, %v264
        %v294 = vmul.f32 %v258, %v264
        %v295 = vmul.f32 %v259, %v264
        %v296 = vmul.f32 %v260, %v264
        %v297 = vlaneseq
        %v298 = vshrl.u32 %v297, 7
        %v299 = vsub.s32 0, %v298
        %v300 = vrot.slane %v225, %v299
        %v301 = vadd.f32 %v265, %v300
        %v302 = vadd.f32 %v266, %v300
        %v303 = vadd.f32 %v267, %v300
        %v304 = vadd.f32 %v268, %v300
        %v305 = vadd.f32 %v269, %v300
        %v306 = vadd.f32 %v270, %v300
        %v307 = vadd.f32 %v271, %v300
        %v308 = vadd.f32 %v272, %v300
        %v309 = vadd.f32 %v273, %v300
        %v310 = vadd.f32 %v274, %v300
        %v311 = vadd.f32 %v275, %v300
        %v312 = vadd.f32 %v276, %v300
        %v313 = vadd.f32 %v277, %v300
        %v314 = vadd.f32 %v278, %v300
        %v315 = vadd.f32 %v279, %v300
        %v316 = vadd.f32 %v280, %v300
        %v317 = vadd.f32 %v281, %v300
        %v318 = vadd.f32 %v282, %v300
        %v319 = vadd.f32 %v283, %v300
        %v320 = vadd.f32 %v284, %v300
        %v321 = vadd.f32 %v285, %v300
        %v322 = vadd.f32 %v286, %v300
        %v323 = vadd.f32 %v287, %v300
        %v324 = vadd.f32 %v288, %v300
        %v325 = vadd.f32 %v289, %v300
        %v326 = vadd.f32 %v290, %v300
        %v327 = vadd.f32 %v291, %v300
        %v328 = vadd.f32 %v292, %v300
        %v329 = vadd.f32 %v293, %v300
        %v330 = vadd.f32 %v294, %v300
        %v331 = vadd.f32 %v295, %v300
        %v332 = vadd.f32 %v296, %v300
        %v333 = vmax.f32 %v301, 0.0
        %v334 = vmax.f32 %v302, 0.0
        %v335 = vmax.f32 %v303, 0.0
        %v336 = vmax.f32 %v304, 0.0
        %v337 = vmax.f32 %v305, 0.0
        %v338 = vmax.f32 %v306, 0.0
        %v339 = vmax.f32 %v307, 0.0
        %v340 = vmax.f32 %v308, 0.0
        %v341 = vmax.f32 %v309, 0.0
        %v342 = vmax.f32 %v310, 0.0
        %v343 = vmax.f32 %v311, 0.0
        %v344 = vmax.f32 %v312, 0.0
        %v345 = vmax.f32 %v313, 0.0
        %v346 = vmax.f32 %v314, 0.0
        %v347 = vmax.f32 %v315, 0.0
        %v348 = vmax.f32 %v316, 0.0
        %v349 = vmax.f32 %v317, 0.0
        %v350 = vmax.f32 %v318, 0.0
        %v351 = vmax.f32 %v319, 0.0
        %v352 = vmax.f32 %v320, 0.0
        %v353 = vmax.f32 %v321, 0.0
        %v354 = vmax.f32 %v322, 0.0
        %v355 = vmax.f32 %v323, 0.0
        %v356 = vmax.f32 %v324, 0.0
        %v357 = vmax.f32 %v325, 0.0
        %v358 = vmax.f32 %v326, 0.0
        %v359 = vmax.f32 %v327, 0.0
        %v360 = vmax.f32 %v328, 0.0
        %v361 = vmax.f32 %v329, 0.0
        %v362 = vmax.f32 %v330, 0.0
        %v363 = vmax.f32 %v331, 0.0
        %v364 = vmax.f32 %v332, 0.0
        %v365 = vpack.c.bf16 %v334, %v333
        %v366 = vpack.c.bf16 %v336, %v335
        %v367 = vpack.c.bf16 %v338, %v337
        %v368 = vpack.c.bf16 %v340, %v339
        %v369 = vpack.c.bf16 %v342, %v341
        %v370 = vpack.c.bf16 %v344, %v343
        %v371 = vpack.c.bf16 %v346, %v345
        %v372 = vpack.c.bf16 %v348, %v347
        %v373 = vpack.c.bf16 %v350, %v349
        %v374 = vpack.c.bf16 %v352, %v351
        %v375 = vpack.c.bf16 %v354, %v353
        %v376 = vpack.c.bf16 %v356, %v355
        %v377 = vpack.c.bf16 %v358, %v357
        %v378 = vpack.c.bf16 %v360, %v359
        %v379 = vpack.c.bf16 %v362, %v361
        %v380 = vpack.c.bf16 %v364, %v363
        %v381 = vld [vmem:[%s2] sm:$0x3]
        %vm382 = vcmask 31744
        %v384 = vsel %vm382, %v365, 0
        %v387 = vsel %vm382, %v366, 0
        %v390 = vsel %vm382, %v367, 0
        %v393 = vsel %vm382, %v368, 0
        %v396 = vsel %vm382, %v369, 0
        %v399 = vsel %vm382, %v370, 0
        %v402 = vsel %vm382, %v371, 0
        %v405 = vsel %vm382, %v372, 0
        %v408 = vsel %vm382, %v373, 0
        %v411 = vsel %vm382, %v374, 0
        %v414 = vsel %vm382, %v375, 0
        %v417 = vsel %vm382, %v376, 0
        %v420 = vsel %vm382, %v377, 0
        %v423 = vsel %vm382, %v378, 0
        %v426 = vsel %vm382, %v379, 0
        %v429 = vsel %vm382, %v380, 0
        %vm431 = vcmask 1041408
        %v433 = vsel %vm431, %v381, 0
        %435 = vmatprep.subr.bf16.mxu0 0
        %436 = vmatpush1.bf16.msra.mxu0 %v433
        %437 = vmatprep.subr.bf16.mxu0 0
        %438 = vmatpush1.bf16.msra.mxu0 0
        %439 = vmatprep.subr.bf16.mxu0 0
        %440 = vmatpush1.bf16.msra.mxu0 0
        %441 = vmatprep.subr.bf16.mxu0 0
        %442 = vmatpush1.bf16.msra.mxu0 0
        %443 = vmatprep.subr.bf16.mxu0 0
        %444 = vmatpush1.bf16.msra.mxu0 0
        %445 = vmatprep.subr.bf16.mxu0 0
        %446 = vmatpush1.bf16.msra.mxu0 0
        %447 = vmatprep.subr.bf16.mxu0 0
        %448 = vmatpush1.bf16.msra.mxu0 0
        %449 = vmatprep.subr.bf16.mxu0 0
        %450 = vmatpush1.bf16.msra.mxu0 0
        %451 = vmatprep.subr.bf16.mxu0 0
        %452 = vmatpush1.bf16.msra.mxu0 0
        %453 = vmatprep.subr.bf16.mxu0 0
        %454 = vmatpush1.bf16.msra.mxu0 0
        %455 = vmatprep.subr.bf16.mxu0 0
        %456 = vmatpush1.bf16.msra.mxu0 0
        %457 = vmatprep.subr.bf16.mxu0 0
        %458 = vmatpush1.bf16.msra.mxu0 0
        %459 = vmatprep.subr.bf16.mxu0 0
        %460 = vmatpush1.bf16.msra.mxu0 0
        %461 = vmatprep.subr.bf16.mxu0 0
        %462 = vmatpush1.bf16.msra.mxu0 0
        %463 = vmatprep.subr.bf16.mxu0 0
        %464 = vmatpush1.bf16.msra.mxu0 0
        %465 = vmatprep.subr.bf16.mxu0 0
        %466 = vmatpush1.bf16.msra.mxu0 0
        %467 = vmatprep.mubr.bf16.mxu0 0
        %468 = vmatmul.mubr.bf16.gmra.mrb[0].mxu0 %v384
        %v469 = vpop.f32.mrb[0].mxu0
        %v470 = vadd.f32 0.0, %v469
        %v471 = vpop.f32.mrb[0].mxu0
        %v472 = vpop.f32.mrb[0].mxu0
        %v473 = vadd.f32 0.0, %v472
        %v474 = vpop.f32.mrb[0].mxu0
        %475 = vmatprep.mubr.bf16.mxu0 0
        %476 = vmatmul.mubr.bf16.gmra.mrb[0].mxu0 %v387
        %v477 = vpop.f32.mrb[0].mxu0
        %v478 = vadd.f32 0.0, %v477
        %v479 = vpop.f32.mrb[0].mxu0
        %v480 = vpop.f32.mrb[0].mxu0
        %v481 = vadd.f32 0.0, %v480
        %v482 = vpop.f32.mrb[0].mxu0
        %483 = vmatprep.mubr.bf16.mxu0 0
        %484 = vmatmul.mubr.bf16.gmra.mrb[0].mxu0 %v390
        %v485 = vpop.f32.mrb[0].mxu0
        %v486 = vadd.f32 0.0, %v485
        %v487 = vpop.f32.mrb[0].mxu0
        %v488 = vpop.f32.mrb[0].mxu0
        %v489 = vadd.f32 0.0, %v488
        %v490 = vpop.f32.mrb[0].mxu0
        %491 = vmatprep.mubr.bf16.mxu0 0
        %492 = vmatmul.mubr.bf16.gmra.mrb[0].mxu0 %v393
        %v493 = vpop.f32.mrb[0].mxu0
        %v494 = vadd.f32 0.0, %v493
        %v495 = vpop.f32.mrb[0].mxu0
        %v496 = vpop.f32.mrb[0].mxu0
        %v497 = vadd.f32 0.0, %v496
        %v498 = vpop.f32.mrb[0].mxu0
        %499 = vmatprep.mubr.bf16.mxu0 0
        %500 = vmatmul.mubr.bf16.gmra.mrb[0].mxu0 %v396
        %v501 = vpop.f32.mrb[0].mxu0
        %v502 = vadd.f32 0.0, %v501
        %v503 = vpop.f32.mrb[0].mxu0
        %v504 = vpop.f32.mrb[0].mxu0
        %v505 = vadd.f32 0.0, %v504
        %v506 = vpop.f32.mrb[0].mxu0
        %507 = vmatprep.mubr.bf16.mxu0 0
        %508 = vmatmul.mubr.bf16.gmra.mrb[0].mxu0 %v399
        %v509 = vpop.f32.mrb[0].mxu0
        %v510 = vadd.f32 0.0, %v509
        %v511 = vpop.f32.mrb[0].mxu0
        %v512 = vpop.f32.mrb[0].mxu0
        %v513 = vadd.f32 0.0, %v512
        %v514 = vpop.f32.mrb[0].mxu0
        %515 = vmatprep.mubr.bf16.mxu0 0
        %516 = vmatmul.mubr.bf16.gmra.mrb[0].mxu0 %v402
        %v517 = vpop.f32.mrb[0].mxu0
        %v518 = vadd.f32 0.0, %v517
        %v519 = vpop.f32.mrb[0].mxu0
        %v520 = vpop.f32.mrb[0].mxu0
        %v521 = vadd.f32 0.0, %v520
        %v522 = vpop.f32.mrb[0].mxu0
        %523 = vmatprep.mubr.bf16.mxu0 0
        %524 = vmatmul.mubr.bf16.gmra.mrb[0].mxu0 %v405
        %v525 = vpop.f32.mrb[0].mxu0
        %v526 = vadd.f32 0.0, %v525
        %v527 = vpop.f32.mrb[0].mxu0
        %v528 = vpop.f32.mrb[0].mxu0
        %v529 = vadd.f32 0.0, %v528
        %v530 = vpop.f32.mrb[0].mxu0
        %531 = vmatprep.mubr.bf16.mxu0 0
        %532 = vmatmul.mubr.bf16.gmra.mrb[0].mxu0 %v408
        %v533 = vpop.f32.mrb[0].mxu0
        %v534 = vadd.f32 0.0, %v533
        %v535 = vpop.f32.mrb[0].mxu0
        %v536 = vpop.f32.mrb[0].mxu0
        %v537 = vadd.f32 0.0, %v536
        %v538 = vpop.f32.mrb[0].mxu0
        %539 = vmatprep.mubr.bf16.mxu0 0
        %540 = vmatmul.mubr.bf16.gmra.mrb[0].mxu0 %v411
        %v541 = vpop.f32.mrb[0].mxu0
        %v542 = vadd.f32 0.0, %v541
        %v543 = vpop.f32.mrb[0].mxu0
        %v544 = vpop.f32.mrb[0].mxu0
        %v545 = vadd.f32 0.0, %v544
        %v546 = vpop.f32.mrb[0].mxu0
        %547 = vmatprep.mubr.bf16.mxu0 0
        %548 = vmatmul.mubr.bf16.gmra.mrb[0].mxu0 %v414
        %v549 = vpop.f32.mrb[0].mxu0
        %v550 = vadd.f32 0.0, %v549
        %v551 = vpop.f32.mrb[0].mxu0
        %v552 = vpop.f32.mrb[0].mxu0
        %v553 = vadd.f32 0.0, %v552
        %v554 = vpop.f32.mrb[0].mxu0
        %555 = vmatprep.mubr.bf16.mxu0 0
        %556 = vmatmul.mubr.bf16.gmra.mrb[0].mxu0 %v417
        %v557 = vpop.f32.mrb[0].mxu0
        %v558 = vadd.f32 0.0, %v557
        %v559 = vpop.f32.mrb[0].mxu0
        %v560 = vpop.f32.mrb[0].mxu0
        %v561 = vadd.f32 0.0, %v560
        %v562 = vpop.f32.mrb[0].mxu0
        %563 = vmatprep.mubr.bf16.mxu0 0
        %564 = vmatmul.mubr.bf16.gmra.mrb[0].mxu0 %v420
        %v565 = vpop.f32.mrb[0].mxu0
        %v566 = vadd.f32 0.0, %v565
        %v567 = vpop.f32.mrb[0].mxu0
        %v568 = vpop.f32.mrb[0].mxu0
        %v569 = vadd.f32 0.0, %v568
        %v570 = vpop.f32.mrb[0].mxu0
        %571 = vmatprep.mubr.bf16.mxu0 0
        %572 = vmatmul.mubr.bf16.gmra.mrb[0].mxu0 %v423
        %v573 = vpop.f32.mrb[0].mxu0
        %v574 = vadd.f32 0.0, %v573
        %v575 = vpop.f32.mrb[0].mxu0
        %v576 = vpop.f32.mrb[0].mxu0
        %v577 = vadd.f32 0.0, %v576
        %v578 = vpop.f32.mrb[0].mxu0
        %579 = vmatprep.mubr.bf16.mxu0 0
        %580 = vmatmul.mubr.bf16.gmra.mrb[0].mxu0 %v426
        %v581 = vpop.f32.mrb[0].mxu0
        %v582 = vadd.f32 0.0, %v581
        %v583 = vpop.f32.mrb[0].mxu0
        %v584 = vpop.f32.mrb[0].mxu0
        %v585 = vadd.f32 0.0, %v584
        %v586 = vpop.f32.mrb[0].mxu0
        %587 = vmatprep.mubr.bf16.mxu0 0
        %588 = vmatmul.mubr.bf16.gmra.mrb[0].mxu0 %v429
        %v589 = vpop.f32.mrb[0].mxu0
        %v590 = vadd.f32 0.0, %v589
        %v591 = vpop.f32.mrb[0].mxu0
        %v592 = vpop.f32.mrb[0].mxu0
        %v593 = vadd.f32 0.0, %v592
        %v594 = vpop.f32.mrb[0].mxu0
        %595 = vdwg.mxu0
        %v596 = vlaneseq
        %v597 = vshrl.u32 %v596, 7
        %v598 = vsub.s32 0, %v597
        %v599 = vrot.slane %v226, %v598
        %v600 = vadd.f32 %v470, %v599
        %v601 = vadd.f32 %v473, %v599
        %v602 = vadd.f32 %v478, %v599
        %v603 = vadd.f32 %v481, %v599
        %v604 = vadd.f32 %v486, %v599
        %v605 = vadd.f32 %v489, %v599
        %v606 = vadd.f32 %v494, %v599
        %v607 = vadd.f32 %v497, %v599
        %v608 = vadd.f32 %v502, %v599
        %v609 = vadd.f32 %v505, %v599
        %v610 = vadd.f32 %v510, %v599
        %v611 = vadd.f32 %v513, %v599
        %v612 = vadd.f32 %v518, %v599
        %v613 = vadd.f32 %v521, %v599
        %v614 = vadd.f32 %v526, %v599
        %v615 = vadd.f32 %v529, %v599
        %v616 = vadd.f32 %v534, %v599
        %v617 = vadd.f32 %v537, %v599
        %v618 = vadd.f32 %v542, %v599
        %v619 = vadd.f32 %v545, %v599
        %v620 = vadd.f32 %v550, %v599
        %v621 = vadd.f32 %v553, %v599
        %v622 = vadd.f32 %v558, %v599
        %v623 = vadd.f32 %v561, %v599
        %v624 = vadd.f32 %v566, %v599
        %v625 = vadd.f32 %v569, %v599
        %v626 = vadd.f32 %v574, %v599
        %v627 = vadd.f32 %v577, %v599
        %v628 = vadd.f32 %v582, %v599
        %v629 = vadd.f32 %v585, %v599
        %v630 = vadd.f32 %v590, %v599
        %v631 = vadd.f32 %v593, %v599
        %v632 = vmax.f32 %v600, 0.0
        %v633 = vmax.f32 %v601, 0.0
        %v634 = vmax.f32 %v602, 0.0
        %v635 = vmax.f32 %v603, 0.0
        %v636 = vmax.f32 %v604, 0.0
        %v637 = vmax.f32 %v605, 0.0
        %v638 = vmax.f32 %v606, 0.0
        %v639 = vmax.f32 %v607, 0.0
        %v640 = vmax.f32 %v608, 0.0
        %v641 = vmax.f32 %v609, 0.0
        %v642 = vmax.f32 %v610, 0.0
        %v643 = vmax.f32 %v611, 0.0
        %v644 = vmax.f32 %v612, 0.0
        %v645 = vmax.f32 %v613, 0.0
        %v646 = vmax.f32 %v614, 0.0
        %v647 = vmax.f32 %v615, 0.0
        %v648 = vmax.f32 %v616, 0.0
        %v649 = vmax.f32 %v617, 0.0
        %v650 = vmax.f32 %v618, 0.0
        %v651 = vmax.f32 %v619, 0.0
        %v652 = vmax.f32 %v620, 0.0
        %v653 = vmax.f32 %v621, 0.0
        %v654 = vmax.f32 %v622, 0.0
        %v655 = vmax.f32 %v623, 0.0
        %v656 = vmax.f32 %v624, 0.0
        %v657 = vmax.f32 %v625, 0.0
        %v658 = vmax.f32 %v626, 0.0
        %v659 = vmax.f32 %v627, 0.0
        %v660 = vmax.f32 %v628, 0.0
        %v661 = vmax.f32 %v629, 0.0
        %v662 = vmax.f32 %v630, 0.0
        %v663 = vmax.f32 %v631, 0.0
        %v680 = vrot.slane %v633, 7
        %v681 = vrot.slane %v635, 7
        %v682 = vrot.slane %v637, 7
        %v683 = vrot.slane %v639, 7
        %v684 = vrot.slane %v641, 7
        %v685 = vrot.slane %v643, 7
        %v686 = vrot.slane %v645, 7
        %v687 = vrot.slane %v647, 7
        %v688 = vrot.slane %v649, 7
        %v689 = vrot.slane %v651, 7
        %v690 = vrot.slane %v653, 7
        %v691 = vrot.slane %v655, 7
        %v692 = vrot.slane %v657, 7
        %v693 = vrot.slane %v659, 7
        %v694 = vrot.slane %v661, 7
        %v695 = vrot.slane %v663, 7
        %vm728 = vcmask 1040384
        %v729 = vrot.slane %v632, 7
        %v730 = vsel %vm728, %v729, %v680
        %v731 = vrot.slane %v634, 7
        %v732 = vsel %vm728, %v731, %v681
        %v733 = vrot.slane %v636, 7
        %v734 = vsel %vm728, %v733, %v682
        %v735 = vrot.slane %v638, 7
        %v736 = vsel %vm728, %v735, %v683
        %v737 = vrot.slane %v640, 7
        %v738 = vsel %vm728, %v737, %v684
        %v739 = vrot.slane %v642, 7
        %v740 = vsel %vm728, %v739, %v685
        %v741 = vrot.slane %v644, 7
        %v742 = vsel %vm728, %v741, %v686
        %v743 = vrot.slane %v646, 7
        %v744 = vsel %vm728, %v743, %v687
        %v745 = vrot.slane %v648, 7
        %v746 = vsel %vm728, %v745, %v688
        %v747 = vrot.slane %v650, 7
        %v748 = vsel %vm728, %v747, %v689
        %v749 = vrot.slane %v652, 7
        %v750 = vsel %vm728, %v749, %v690
        %v751 = vrot.slane %v654, 7
        %v752 = vsel %vm728, %v751, %v691
        %v753 = vrot.slane %v656, 7
        %v754 = vsel %vm728, %v753, %v692
        %v755 = vrot.slane %v658, 7
        %v756 = vsel %vm728, %v755, %v693
        %v757 = vrot.slane %v660, 7
        %v758 = vsel %vm728, %v757, %v694
        %v759 = vrot.slane %v662, 7
        %v760 = vsel %vm728, %v759, %v695
        %v793 = vsel %vm728, %v680, %v729
        %v794 = vsel %vm728, %v681, %v731
        %v795 = vsel %vm728, %v682, %v733
        %v796 = vsel %vm728, %v683, %v735
        %v797 = vsel %vm728, %v684, %v737
        %v798 = vsel %vm728, %v685, %v739
        %v799 = vsel %vm728, %v686, %v741
        %v800 = vsel %vm728, %v687, %v743
        %v801 = vsel %vm728, %v688, %v745
        %v802 = vsel %vm728, %v689, %v747
        %v803 = vsel %vm728, %v690, %v749
        %v804 = vsel %vm728, %v691, %v751
        %v805 = vsel %vm728, %v692, %v753
        %v806 = vsel %vm728, %v693, %v755
        %v807 = vsel %vm728, %v694, %v757
        %v808 = vsel %vm728, %v695, %v759
        %v809 = vpack.c.bf16 %v730, %v793
        %v810 = vpack.c.bf16 %v732, %v794
        %v811 = vpack.c.bf16 %v734, %v795
        %v812 = vpack.c.bf16 %v736, %v796
        %v813 = vpack.c.bf16 %v738, %v797
        %v814 = vpack.c.bf16 %v740, %v798
        %v815 = vpack.c.bf16 %v742, %v799
        %v816 = vpack.c.bf16 %v744, %v800
        %v817 = vpack.c.bf16 %v746, %v801
        %v818 = vpack.c.bf16 %v748, %v802
        %v819 = vpack.c.bf16 %v750, %v803
        %v820 = vpack.c.bf16 %v752, %v804
        %v821 = vpack.c.bf16 %v754, %v805
        %v822 = vpack.c.bf16 %v756, %v806
        %v823 = vpack.c.bf16 %v758, %v807
        %v824 = vpack.c.bf16 %v760, %v808
        %v825 = vpack.c.bf16 %v633, %v632
        %v826 = vpack.c.bf16 %v635, %v634
        %v827 = vpack.c.bf16 %v637, %v636
        %v828 = vpack.c.bf16 %v639, %v638
        %v829 = vpack.c.bf16 %v641, %v640
        %v830 = vpack.c.bf16 %v643, %v642
        %v831 = vpack.c.bf16 %v645, %v644
        %v832 = vpack.c.bf16 %v647, %v646
        %v833 = vpack.c.bf16 %v649, %v648
        %v834 = vpack.c.bf16 %v651, %v650
        %v835 = vpack.c.bf16 %v653, %v652
        %v836 = vpack.c.bf16 %v655, %v654
        %v837 = vpack.c.bf16 %v657, %v656
        %v838 = vpack.c.bf16 %v659, %v658
        %v839 = vpack.c.bf16 %v661, %v660
        %v840 = vpack.c.bf16 %v663, %v662
        %vm841 = vcmask 1046528
        %v842 = vrot.slane %v632, 1
        %v843 = vrot.slane %v633, 1
        %v844 = vsel %vm841, %v842, %v843
        %v845 = vrot.slane %v634, 1
        %v846 = vrot.slane %v635, 1
        %v847 = vsel %vm841, %v845, %v846
        %v848 = vrot.slane %v636, 1
        %v849 = vrot.slane %v637, 1
        %v850 = vsel %vm841, %v848, %v849
        %v851 = vrot.slane %v638, 1
        %v852 = vrot.slane %v639, 1
        %v853 = vsel %vm841, %v851, %v852
        %v854 = vrot.slane %v640, 1
        %v855 = vrot.slane %v641, 1
        %v856 = vsel %vm841, %v854, %v855
        %v857 = vrot.slane %v642, 1
        %v858 = vrot.slane %v643, 1
        %v859 = vsel %vm841, %v857, %v858
        %v860 = vrot.slane %v644, 1
        %v861 = vrot.slane %v645, 1
        %v862 = vsel %vm841, %v860, %v861
        %v863 = vrot.slane %v646, 1
        %v864 = vrot.slane %v647, 1
        %v865 = vsel %vm841, %v863, %v864
        %v866 = vrot.slane %v648, 1
        %v867 = vrot.slane %v649, 1
        %v868 = vsel %vm841, %v866, %v867
        %v869 = vrot.slane %v650, 1
        %v870 = vrot.slane %v651, 1
        %v871 = vsel %vm841, %v869, %v870
        %v872 = vrot.slane %v652, 1
        %v873 = vrot.slane %v653, 1
        %v874 = vsel %vm841, %v872, %v873
        %v875 = vrot.slane %v654, 1
        %v876 = vrot.slane %v655, 1
        %v877 = vsel %vm841, %v875, %v876
        %v878 = vrot.slane %v656, 1
        %v879 = vrot.slane %v657, 1
        %v880 = vsel %vm841, %v878, %v879
        %v881 = vrot.slane %v658, 1
        %v882 = vrot.slane %v659, 1
        %v883 = vsel %vm841, %v881, %v882
        %v884 = vrot.slane %v660, 1
        %v885 = vrot.slane %v661, 1
        %v886 = vsel %vm841, %v884, %v885
        %v887 = vrot.slane %v662, 1
        %v888 = vrot.slane %v663, 1
        %v889 = vsel %vm841, %v887, %v888
        %v938 = vsel %vm841, %v843, %v842
        %v939 = vsel %vm841, %v846, %v845
        %v940 = vsel %vm841, %v849, %v848
        %v941 = vsel %vm841, %v852, %v851
        %v942 = vsel %vm841, %v855, %v854
        %v943 = vsel %vm841, %v858, %v857
        %v944 = vsel %vm841, %v861, %v860
        %v945 = vsel %vm841, %v864, %v863
        %v946 = vsel %vm841, %v867, %v866
        %v947 = vsel %vm841, %v870, %v869
        %v948 = vsel %vm841, %v873, %v872
        %v949 = vsel %vm841, %v876, %v875
        %v950 = vsel %vm841, %v879, %v878
        %v951 = vsel %vm841, %v882, %v881
        %v952 = vsel %vm841, %v885, %v884
        %v953 = vsel %vm841, %v888, %v887
        %v954 = vpack.c.bf16 %v938, %v844
        %v955 = vpack.c.bf16 %v939, %v847
        %v956 = vpack.c.bf16 %v940, %v850
        %v957 = vpack.c.bf16 %v941, %v853
        %v958 = vpack.c.bf16 %v942, %v856
        %v959 = vpack.c.bf16 %v943, %v859
        %v960 = vpack.c.bf16 %v944, %v862
        %v961 = vpack.c.bf16 %v945, %v865
        %v962 = vpack.c.bf16 %v946, %v868
        %v963 = vpack.c.bf16 %v947, %v871
        %v964 = vpack.c.bf16 %v948, %v874
        %v965 = vpack.c.bf16 %v949, %v877
        %v966 = vpack.c.bf16 %v950, %v880
        %v967 = vpack.c.bf16 %v951, %v883
        %v968 = vpack.c.bf16 %v952, %v886
        %v969 = vpack.c.bf16 %v953, %v889
        %986 = vrot.lane.b32.xlu0 %v825, 8
        %v987 = vpop.permute.xlu0 %986
        %988 = vrot.lane.b32.xlu0 %v826, 8
        %v989 = vpop.permute.xlu0 %988
        %990 = vrot.lane.b32.xlu0 %v827, 8
        %v991 = vpop.permute.xlu0 %990
        %992 = vrot.lane.b32.xlu0 %v828, 8
        %v993 = vpop.permute.xlu0 %992
        %994 = vrot.lane.b32.xlu0 %v829, 8
        %v995 = vpop.permute.xlu0 %994
        %996 = vrot.lane.b32.xlu0 %v830, 8
        %v997 = vpop.permute.xlu0 %996
        %998 = vrot.lane.b32.xlu0 %v831, 8
        %v999 = vpop.permute.xlu0 %998
        %1000 = vrot.lane.b32.xlu0 %v832, 8
        %v1001 = vpop.permute.xlu0 %1000
        %1002 = vrot.lane.b32.xlu0 %v833, 8
        %v1003 = vpop.permute.xlu0 %1002
        %1004 = vrot.lane.b32.xlu0 %v834, 8
        %v1005 = vpop.permute.xlu0 %1004
        %1006 = vrot.lane.b32.xlu0 %v835, 8
        %v1007 = vpop.permute.xlu0 %1006
        %1008 = vrot.lane.b32.xlu0 %v836, 8
        %v1009 = vpop.permute.xlu0 %1008
        %1010 = vrot.lane.b32.xlu0 %v837, 8
        %v1011 = vpop.permute.xlu0 %1010
        %1012 = vrot.lane.b32.xlu0 %v838, 8
        %v1013 = vpop.permute.xlu0 %1012
        %1014 = vrot.lane.b32.xlu0 %v839, 8
        %v1015 = vpop.permute.xlu0 %1014
        %1016 = vrot.lane.b32.xlu0 %v840, 8
        %v1017 = vpop.permute.xlu0 %1016
        %1034 = vrot.lane.b32.xlu0 %v954, 16
        %v1035 = vpop.permute.xlu0 %1034
        %1036 = vrot.lane.b32.xlu0 %v955, 16
        %v1037 = vpop.permute.xlu0 %1036
        %1038 = vrot.lane.b32.xlu0 %v956, 16
        %v1039 = vpop.permute.xlu0 %1038
        %1040 = vrot.lane.b32.xlu0 %v957, 16
        %v1041 = vpop.permute.xlu0 %1040
        %1042 = vrot.lane.b32.xlu0 %v958, 16
        %v1043 = vpop.permute.xlu0 %1042
        %1044 = vrot.lane.b32.xlu0 %v959, 16
        %v1045 = vpop.permute.xlu0 %1044
        %1046 = vrot.lane.b32.xlu0 %v960, 16
        %v1047 = vpop.permute.xlu0 %1046
        %1048 = vrot.lane.b32.xlu0 %v961, 16
        %v1049 = vpop.permute.xlu0 %1048
        %1050 = vrot.lane.b32.xlu0 %v962, 16
        %v1051 = vpop.permute.xlu0 %1050
        %1052 = vrot.lane.b32.xlu0 %v963, 16
        %v1053 = vpop.permute.xlu0 %1052
        %1054 = vrot.lane.b32.xlu0 %v964, 16
        %v1055 = vpop.permute.xlu0 %1054
        %1056 = vrot.lane.b32.xlu0 %v965, 16
        %v1057 = vpop.permute.xlu0 %1056
        %1058 = vrot.lane.b32.xlu0 %v966, 16
        %v1059 = vpop.permute.xlu0 %1058
        %1060 = vrot.lane.b32.xlu0 %v967, 16
        %v1061 = vpop.permute.xlu0 %1060
        %1062 = vrot.lane.b32.xlu0 %v968, 16
        %v1063 = vpop.permute.xlu0 %1062
        %1064 = vrot.lane.b32.xlu0 %v969, 16
        %v1065 = vpop.permute.xlu0 %1064
        %vm1066 = vcmask 64512
        %v1069 = vsel %vm1066, %v809, %v987
        %v1072 = vsel %vm1066, %v810, %v989
        %v1075 = vsel %vm1066, %v811, %v991
        %v1078 = vsel %vm1066, %v812, %v993
        %v1081 = vsel %vm1066, %v813, %v995
        %v1084 = vsel %vm1066, %v814, %v997
        %v1087 = vsel %vm1066, %v815, %v999
        %v1090 = vsel %vm1066, %v816, %v1001
        %v1093 = vsel %vm1066, %v817, %v1003
        %v1096 = vsel %vm1066, %v818, %v1005
        %v1099 = vsel %vm1066, %v819, %v1007
        %v1102 = vsel %vm1066, %v820, %v1009
        %v1105 = vsel %vm1066, %v821, %v1011
        %v1108 = vsel %vm1066, %v822, %v1013
        %v1111 = vsel %vm1066, %v823, %v1015
        %v1114 = vsel %vm1066, %v824, %v1017
        %vm1115 = vcmask 130048
        %v1117 = vsel %vm1115, %v1069, %v1035
        %v1119 = vsel %vm1115, %v1072, %v1037
        %v1121 = vsel %vm1115, %v1075, %v1039
        %v1123 = vsel %vm1115, %v1078, %v1041
        %v1125 = vsel %vm1115, %v1081, %v1043
        %v1127 = vsel %vm1115, %v1084, %v1045
        %v1129 = vsel %vm1115, %v1087, %v1047
        %v1131 = vsel %vm1115, %v1090, %v1049
        %v1133 = vsel %vm1115, %v1093, %v1051
        %v1135 = vsel %vm1115, %v1096, %v1053
        %v1137 = vsel %vm1115, %v1099, %v1055
        %v1139 = vsel %vm1115, %v1102, %v1057
        %v1141 = vsel %vm1115, %v1105, %v1059
        %v1143 = vsel %vm1115, %v1108, %v1061
        %v1145 = vsel %vm1115, %v1111, %v1063
        %v1147 = vsel %vm1115, %v1114, %v1065
        %v1148 = vld [vmem:[%s3] sm:$0xf]
        %v1149 = vld [vmem:[%s3 + $0x4] sm:$0xf]
        %v1150 = vld [vmem:[%s3 + $0x8] sm:$0xf]
        %v1154 = vunpack.c.l.b16 %v1148
        %v1155 = vunpack.c.l.b16 %v1149
        %v1156 = vunpack.c.l.b16 %v1150
        %v1157 = vpack.c.b16 %v1155, %v1154
        %v1158 = vpack.c.b16 %v1156, %v1156
        %vm1160 = vcmask 195584
        %v1161 = vsel %vm1160, %v1117, 0
        %v1163 = vsel %vm1160, %v1119, 0
        %v1165 = vsel %vm1160, %v1121, 0
        %v1167 = vsel %vm1160, %v1123, 0
        %v1169 = vsel %vm1160, %v1125, 0
        %v1171 = vsel %vm1160, %v1127, 0
        %v1173 = vsel %vm1160, %v1129, 0
        %v1175 = vsel %vm1160, %v1131, 0
        %v1177 = vsel %vm1160, %v1133, 0
        %v1179 = vsel %vm1160, %v1135, 0
        %v1181 = vsel %vm1160, %v1137, 0
        %v1183 = vsel %vm1160, %v1139, 0
        %v1185 = vsel %vm1160, %v1141, 0
        %v1187 = vsel %vm1160, %v1143, 0
        %v1189 = vsel %vm1160, %v1145, 0
        %v1191 = vsel %vm1160, %v1147, 0
        %vm1193 = vcmask 1043456
        %v1195 = vsel %vm1193, %v1158, 0
        %1197 = vmatprep.subr.bf16.mxu0 0
        %1198 = vmatpush1.bf16.msra.mxu0 %v1157
        %1199 = vmatprep.subr.bf16.mxu0 0
        %1200 = vmatpush1.bf16.msra.mxu0 %v1195
        %1201 = vmatprep.subr.bf16.mxu0 0
        %1202 = vmatpush1.bf16.msra.mxu0 0
        %1203 = vmatprep.subr.bf16.mxu0 0
        %1204 = vmatpush1.bf16.msra.mxu0 0
        %1205 = vmatprep.subr.bf16.mxu0 0
        %1206 = vmatpush1.bf16.msra.mxu0 0
        %1207 = vmatprep.subr.bf16.mxu0 0
        %1208 = vmatpush1.bf16.msra.mxu0 0
        %1209 = vmatprep.subr.bf16.mxu0 0
        %1210 = vmatpush1.bf16.msra.mxu0 0
        %1211 = vmatprep.subr.bf16.mxu0 0
        %1212 = vmatpush1.bf16.msra.mxu0 0
        %1213 = vmatprep.subr.bf16.mxu0 0
        %1214 = vmatpush1.bf16.msra.mxu0 0
        %1215 = vmatprep.subr.bf16.mxu0 0
        %1216 = vmatpush1.bf16.msra.mxu0 0
        %1217 = vmatprep.subr.bf16.mxu0 0
        %1218 = vmatpush1.bf16.msra.mxu0 0
        %1219 = vmatprep.subr.bf16.mxu0 0
        %1220 = vmatpush1.bf16.msra.mxu0 0
        %1221 = vmatprep.subr.bf16.mxu0 0
        %1222 = vmatpush1.bf16.msra.mxu0 0
        %1223 = vmatprep.subr.bf16.mxu0 0
        %1224 = vmatpush1.bf16.msra.mxu0 0
        %1225 = vmatprep.subr.bf16.mxu0 0
        %1226 = vmatpush1.bf16.msra.mxu0 0
        %1227 = vmatprep.subr.bf16.mxu0 0
        %1228 = vmatpush1.bf16.msra.mxu0 0
        %1229 = vmatprep.mubr.bf16.mxu0 0
        %1230 = vmatmul.mubr.bf16.gmra.mrb[0].mxu0 %v1161
        %v1231 = vpop.f32.mrb[0].mxu0
        %v1232 = vadd.f32 0.0, %v1231
        %v1233 = vpop.f32.mrb[0].mxu0
        %v1234 = vpop.f32.mrb[0].mxu0
        %v1235 = vadd.f32 0.0, %v1234
        %v1236 = vpop.f32.mrb[0].mxu0
        %1237 = vmatprep.mubr.bf16.mxu0 0
        %1238 = vmatmul.mubr.bf16.gmra.mrb[0].mxu0 %v1163
        %v1239 = vpop.f32.mrb[0].mxu0
        %v1240 = vadd.f32 0.0, %v1239
        %v1241 = vpop.f32.mrb[0].mxu0
        %v1242 = vpop.f32.mrb[0].mxu0
        %v1243 = vadd.f32 0.0, %v1242
        %v1244 = vpop.f32.mrb[0].mxu0
        %1245 = vmatprep.mubr.bf16.mxu0 0
        %1246 = vmatmul.mubr.bf16.gmra.mrb[0].mxu0 %v1165
        %v1247 = vpop.f32.mrb[0].mxu0
        %v1248 = vadd.f32 0.0, %v1247
        %v1249 = vpop.f32.mrb[0].mxu0
        %v1250 = vpop.f32.mrb[0].mxu0
        %v1251 = vadd.f32 0.0, %v1250
        %v1252 = vpop.f32.mrb[0].mxu0
        %1253 = vmatprep.mubr.bf16.mxu0 0
        %1254 = vmatmul.mubr.bf16.gmra.mrb[0].mxu0 %v1167
        %v1255 = vpop.f32.mrb[0].mxu0
        %v1256 = vadd.f32 0.0, %v1255
        %v1257 = vpop.f32.mrb[0].mxu0
        %v1258 = vpop.f32.mrb[0].mxu0
        %v1259 = vadd.f32 0.0, %v1258
        %v1260 = vpop.f32.mrb[0].mxu0
        %1261 = vmatprep.mubr.bf16.mxu0 0
        %1262 = vmatmul.mubr.bf16.gmra.mrb[0].mxu0 %v1169
        %v1263 = vpop.f32.mrb[0].mxu0
        %v1264 = vadd.f32 0.0, %v1263
        %v1265 = vpop.f32.mrb[0].mxu0
        %v1266 = vpop.f32.mrb[0].mxu0
        %v1267 = vadd.f32 0.0, %v1266
        %v1268 = vpop.f32.mrb[0].mxu0
        %1269 = vmatprep.mubr.bf16.mxu0 0
        %1270 = vmatmul.mubr.bf16.gmra.mrb[0].mxu0 %v1171
        %v1271 = vpop.f32.mrb[0].mxu0
        %v1272 = vadd.f32 0.0, %v1271
        %v1273 = vpop.f32.mrb[0].mxu0
        %v1274 = vpop.f32.mrb[0].mxu0
        %v1275 = vadd.f32 0.0, %v1274
        %v1276 = vpop.f32.mrb[0].mxu0
        %1277 = vmatprep.mubr.bf16.mxu0 0
        %1278 = vmatmul.mubr.bf16.gmra.mrb[0].mxu0 %v1173
        %v1279 = vpop.f32.mrb[0].mxu0
        %v1280 = vadd.f32 0.0, %v1279
        %v1281 = vpop.f32.mrb[0].mxu0
        %v1282 = vpop.f32.mrb[0].mxu0
        %v1283 = vadd.f32 0.0, %v1282
        %v1284 = vpop.f32.mrb[0].mxu0
        %1285 = vmatprep.mubr.bf16.mxu0 0
        %1286 = vmatmul.mubr.bf16.gmra.mrb[0].mxu0 %v1175
        %v1287 = vpop.f32.mrb[0].mxu0
        %v1288 = vadd.f32 0.0, %v1287
        %v1289 = vpop.f32.mrb[0].mxu0
        %v1290 = vpop.f32.mrb[0].mxu0
        %v1291 = vadd.f32 0.0, %v1290
        %v1292 = vpop.f32.mrb[0].mxu0
        %1293 = vmatprep.mubr.bf16.mxu0 0
        %1294 = vmatmul.mubr.bf16.gmra.mrb[0].mxu0 %v1177
        %v1295 = vpop.f32.mrb[0].mxu0
        %v1296 = vadd.f32 0.0, %v1295
        %v1297 = vpop.f32.mrb[0].mxu0
        %v1298 = vpop.f32.mrb[0].mxu0
        %v1299 = vadd.f32 0.0, %v1298
        %v1300 = vpop.f32.mrb[0].mxu0
        %1301 = vmatprep.mubr.bf16.mxu0 0
        %1302 = vmatmul.mubr.bf16.gmra.mrb[0].mxu0 %v1179
        %v1303 = vpop.f32.mrb[0].mxu0
        %v1304 = vadd.f32 0.0, %v1303
        %v1305 = vpop.f32.mrb[0].mxu0
        %v1306 = vpop.f32.mrb[0].mxu0
        %v1307 = vadd.f32 0.0, %v1306
        %v1308 = vpop.f32.mrb[0].mxu0
        %1309 = vmatprep.mubr.bf16.mxu0 0
        %1310 = vmatmul.mubr.bf16.gmra.mrb[0].mxu0 %v1181
        %v1311 = vpop.f32.mrb[0].mxu0
        %v1312 = vadd.f32 0.0, %v1311
        %v1313 = vpop.f32.mrb[0].mxu0
        %v1314 = vpop.f32.mrb[0].mxu0
        %v1315 = vadd.f32 0.0, %v1314
        %v1316 = vpop.f32.mrb[0].mxu0
        %1317 = vmatprep.mubr.bf16.mxu0 0
        %1318 = vmatmul.mubr.bf16.gmra.mrb[0].mxu0 %v1183
        %v1319 = vpop.f32.mrb[0].mxu0
        %v1320 = vadd.f32 0.0, %v1319
        %v1321 = vpop.f32.mrb[0].mxu0
        %v1322 = vpop.f32.mrb[0].mxu0
        %v1323 = vadd.f32 0.0, %v1322
        %v1324 = vpop.f32.mrb[0].mxu0
        %1325 = vmatprep.mubr.bf16.mxu0 0
        %1326 = vmatmul.mubr.bf16.gmra.mrb[0].mxu0 %v1185
        %v1327 = vpop.f32.mrb[0].mxu0
        %v1328 = vadd.f32 0.0, %v1327
        %v1329 = vpop.f32.mrb[0].mxu0
        %v1330 = vpop.f32.mrb[0].mxu0
        %v1331 = vadd.f32 0.0, %v1330
        %v1332 = vpop.f32.mrb[0].mxu0
        %1333 = vmatprep.mubr.bf16.mxu0 0
        %1334 = vmatmul.mubr.bf16.gmra.mrb[0].mxu0 %v1187
        %v1335 = vpop.f32.mrb[0].mxu0
        %v1336 = vadd.f32 0.0, %v1335
        %v1337 = vpop.f32.mrb[0].mxu0
        %v1338 = vpop.f32.mrb[0].mxu0
        %v1339 = vadd.f32 0.0, %v1338
        %v1340 = vpop.f32.mrb[0].mxu0
        %1341 = vmatprep.mubr.bf16.mxu0 0
        %1342 = vmatmul.mubr.bf16.gmra.mrb[0].mxu0 %v1189
        %v1343 = vpop.f32.mrb[0].mxu0
        %v1344 = vadd.f32 0.0, %v1343
        %v1345 = vpop.f32.mrb[0].mxu0
        %v1346 = vpop.f32.mrb[0].mxu0
        %v1347 = vadd.f32 0.0, %v1346
        %v1348 = vpop.f32.mrb[0].mxu0
        %1349 = vmatprep.mubr.bf16.mxu0 0
        %1350 = vmatmul.mubr.bf16.gmra.mrb[0].mxu0 %v1191
        %v1351 = vpop.f32.mrb[0].mxu0
        %v1352 = vadd.f32 0.0, %v1351
        %v1353 = vpop.f32.mrb[0].mxu0
        %v1354 = vpop.f32.mrb[0].mxu0
        %v1355 = vadd.f32 0.0, %v1354
        %v1356 = vpop.f32.mrb[0].mxu0
        %1357 = vdwg.mxu0
        %s1358 = scalar_lea.vmem %s3, 12
        %v1359 = vld [vmem:[%s1358] sm:$0xf]
        %v1360 = vld [vmem:[%s1358 + $0x4] sm:$0xf]
        %v1361 = vld [vmem:[%s1358 + $0x8] sm:$0xf]
        %v1365 = vunpack.c.l.b16 %v1359
        %v1366 = vunpack.c.l.b16 %v1360
        %v1367 = vunpack.c.l.b16 %v1361
        %v1368 = vpack.c.b16 %v1366, %v1365
        %v1369 = vpack.c.b16 %v1367, %v1367
        %v1372 = vsel %vm1193, %v1369, 0
        %1374 = vmatprep.subr.bf16.mxu0 0
        %1375 = vmatpush1.bf16.msra.mxu0 %v1368
        %1376 = vmatprep.subr.bf16.mxu0 0
        %1377 = vmatpush1.bf16.msra.mxu0 %v1372
        %1378 = vmatprep.subr.bf16.mxu0 0
        %1379 = vmatpush1.bf16.msra.mxu0 0
        %1380 = vmatprep.subr.bf16.mxu0 0
        %1381 = vmatpush1.bf16.msra.mxu0 0
        %1382 = vmatprep.subr.bf16.mxu0 0
        %1383 = vmatpush1.bf16.msra.mxu0 0
        %1384 = vmatprep.subr.bf16.mxu0 0
        %1385 = vmatpush1.bf16.msra.mxu0 0
        %1386 = vmatprep.subr.bf16.mxu0 0
        %1387 = vmatpush1.bf16.msra.mxu0 0
        %1388 = vmatprep.subr.bf16.mxu0 0
        %1389 = vmatpush1.bf16.msra.mxu0 0
        %1390 = vmatprep.subr.bf16.mxu0 0
        %1391 = vmatpush1.bf16.msra.mxu0 0
        %1392 = vmatprep.subr.bf16.mxu0 0
        %1393 = vmatpush1.bf16.msra.mxu0 0
        %1394 = vmatprep.subr.bf16.mxu0 0
        %1395 = vmatpush1.bf16.msra.mxu0 0
        %1396 = vmatprep.subr.bf16.mxu0 0
        %1397 = vmatpush1.bf16.msra.mxu0 0
        %1398 = vmatprep.subr.bf16.mxu0 0
        %1399 = vmatpush1.bf16.msra.mxu0 0
        %1400 = vmatprep.subr.bf16.mxu0 0
        %1401 = vmatpush1.bf16.msra.mxu0 0
        %1402 = vmatprep.subr.bf16.mxu0 0
        %1403 = vmatpush1.bf16.msra.mxu0 0
        %1404 = vmatprep.subr.bf16.mxu0 0
        %1405 = vmatpush1.bf16.msra.mxu0 0
        %1406 = vmatprep.mubr.bf16.mxu0 0
        %1407 = vmatmul.mubr.bf16.gmra.mrb[0].mxu0 %v1161
        %v1408 = vpop.f32.mrb[0].mxu0
        %v1409 = vadd.f32 0.0, %v1408
        %v1410 = vpop.f32.mrb[0].mxu0
        %v1411 = vpop.f32.mrb[0].mxu0
        %v1412 = vadd.f32 0.0, %v1411
        %v1413 = vpop.f32.mrb[0].mxu0
        %1414 = vmatprep.mubr.bf16.mxu0 0
        %1415 = vmatmul.mubr.bf16.gmra.mrb[0].mxu0 %v1163
        %v1416 = vpop.f32.mrb[0].mxu0
        %v1417 = vadd.f32 0.0, %v1416
        %v1418 = vpop.f32.mrb[0].mxu0
        %v1419 = vpop.f32.mrb[0].mxu0
        %v1420 = vadd.f32 0.0, %v1419
        %v1421 = vpop.f32.mrb[0].mxu0
        %1422 = vmatprep.mubr.bf16.mxu0 0
        %1423 = vmatmul.mubr.bf16.gmra.mrb[0].mxu0 %v1165
        %v1424 = vpop.f32.mrb[0].mxu0
        %v1425 = vadd.f32 0.0, %v1424
        %v1426 = vpop.f32.mrb[0].mxu0
        %v1427 = vpop.f32.mrb[0].mxu0
        %v1428 = vadd.f32 0.0, %v1427
        %v1429 = vpop.f32.mrb[0].mxu0
        %1430 = vmatprep.mubr.bf16.mxu0 0
        %1431 = vmatmul.mubr.bf16.gmra.mrb[0].mxu0 %v1167
        %v1432 = vpop.f32.mrb[0].mxu0
        %v1433 = vadd.f32 0.0, %v1432
        %v1434 = vpop.f32.mrb[0].mxu0
        %v1435 = vpop.f32.mrb[0].mxu0
        %v1436 = vadd.f32 0.0, %v1435
        %v1437 = vpop.f32.mrb[0].mxu0
        %1438 = vmatprep.mubr.bf16.mxu0 0
        %1439 = vmatmul.mubr.bf16.gmra.mrb[0].mxu0 %v1169
        %v1440 = vpop.f32.mrb[0].mxu0
        %v1441 = vadd.f32 0.0, %v1440
        %v1442 = vpop.f32.mrb[0].mxu0
        %v1443 = vpop.f32.mrb[0].mxu0
        %v1444 = vadd.f32 0.0, %v1443
        %v1445 = vpop.f32.mrb[0].mxu0
        %1446 = vmatprep.mubr.bf16.mxu0 0
        %1447 = vmatmul.mubr.bf16.gmra.mrb[0].mxu0 %v1171
        %v1448 = vpop.f32.mrb[0].mxu0
        %v1449 = vadd.f32 0.0, %v1448
        %v1450 = vpop.f32.mrb[0].mxu0
        %v1451 = vpop.f32.mrb[0].mxu0
        %v1452 = vadd.f32 0.0, %v1451
        %v1453 = vpop.f32.mrb[0].mxu0
        %1454 = vmatprep.mubr.bf16.mxu0 0
        %1455 = vmatmul.mubr.bf16.gmra.mrb[0].mxu0 %v1173
        %v1456 = vpop.f32.mrb[0].mxu0
        %v1457 = vadd.f32 0.0, %v1456
        %v1458 = vpop.f32.mrb[0].mxu0
        %v1459 = vpop.f32.mrb[0].mxu0
        %v1460 = vadd.f32 0.0, %v1459
        %v1461 = vpop.f32.mrb[0].mxu0
        %1462 = vmatprep.mubr.bf16.mxu0 0
        %1463 = vmatmul.mubr.bf16.gmra.mrb[0].mxu0 %v1175
        %v1464 = vpop.f32.mrb[0].mxu0
        %v1465 = vadd.f32 0.0, %v1464
        %v1466 = vpop.f32.mrb[0].mxu0
        %v1467 = vpop.f32.mrb[0].mxu0
        %v1468 = vadd.f32 0.0, %v1467
        %v1469 = vpop.f32.mrb[0].mxu0
        %1470 = vmatprep.mubr.bf16.mxu0 0
        %1471 = vmatmul.mubr.bf16.gmra.mrb[0].mxu0 %v1177
        %v1472 = vpop.f32.mrb[0].mxu0
        %v1473 = vadd.f32 0.0, %v1472
        %v1474 = vpop.f32.mrb[0].mxu0
        %v1475 = vpop.f32.mrb[0].mxu0
        %v1476 = vadd.f32 0.0, %v1475
        %v1477 = vpop.f32.mrb[0].mxu0
        %1478 = vmatprep.mubr.bf16.mxu0 0
        %1479 = vmatmul.mubr.bf16.gmra.mrb[0].mxu0 %v1179
        %v1480 = vpop.f32.mrb[0].mxu0
        %v1481 = vadd.f32 0.0, %v1480
        %v1482 = vpop.f32.mrb[0].mxu0
        %v1483 = vpop.f32.mrb[0].mxu0
        %v1484 = vadd.f32 0.0, %v1483
        %v1485 = vpop.f32.mrb[0].mxu0
        %1486 = vmatprep.mubr.bf16.mxu0 0
        %1487 = vmatmul.mubr.bf16.gmra.mrb[0].mxu0 %v1181
        %v1488 = vpop.f32.mrb[0].mxu0
        %v1489 = vadd.f32 0.0, %v1488
        %v1490 = vpop.f32.mrb[0].mxu0
        %v1491 = vpop.f32.mrb[0].mxu0
        %v1492 = vadd.f32 0.0, %v1491
        %v1493 = vpop.f32.mrb[0].mxu0
        %1494 = vmatprep.mubr.bf16.mxu0 0
        %1495 = vmatmul.mubr.bf16.gmra.mrb[0].mxu0 %v1183
        %v1496 = vpop.f32.mrb[0].mxu0
        %v1497 = vadd.f32 0.0, %v1496
        %v1498 = vpop.f32.mrb[0].mxu0
        %v1499 = vpop.f32.mrb[0].mxu0
        %v1500 = vadd.f32 0.0, %v1499
        %v1501 = vpop.f32.mrb[0].mxu0
        %1502 = vmatprep.mubr.bf16.mxu0 0
        %1503 = vmatmul.mubr.bf16.gmra.mrb[0].mxu0 %v1185
        %v1504 = vpop.f32.mrb[0].mxu0
        %v1505 = vadd.f32 0.0, %v1504
        %v1506 = vpop.f32.mrb[0].mxu0
        %v1507 = vpop.f32.mrb[0].mxu0
        %v1508 = vadd.f32 0.0, %v1507
        %v1509 = vpop.f32.mrb[0].mxu0
        %1510 = vmatprep.mubr.bf16.mxu0 0
        %1511 = vmatmul.mubr.bf16.gmra.mrb[0].mxu0 %v1187
        %v1512 = vpop.f32.mrb[0].mxu0
        %v1513 = vadd.f32 0.0, %v1512
        %v1514 = vpop.f32.mrb[0].mxu0
        %v1515 = vpop.f32.mrb[0].mxu0
        %v1516 = vadd.f32 0.0, %v1515
        %v1517 = vpop.f32.mrb[0].mxu0
        %1518 = vmatprep.mubr.bf16.mxu0 0
        %1519 = vmatmul.mubr.bf16.gmra.mrb[0].mxu0 %v1189
        %v1520 = vpop.f32.mrb[0].mxu0
        %v1521 = vadd.f32 0.0, %v1520
        %v1522 = vpop.f32.mrb[0].mxu0
        %v1523 = vpop.f32.mrb[0].mxu0
        %v1524 = vadd.f32 0.0, %v1523
        %v1525 = vpop.f32.mrb[0].mxu0
        %1526 = vmatprep.mubr.bf16.mxu0 0
        %1527 = vmatmul.mubr.bf16.gmra.mrb[0].mxu0 %v1191
        %v1528 = vpop.f32.mrb[0].mxu0
        %v1529 = vadd.f32 0.0, %v1528
        %v1530 = vpop.f32.mrb[0].mxu0
        %v1531 = vpop.f32.mrb[0].mxu0
        %v1532 = vadd.f32 0.0, %v1531
        %v1533 = vpop.f32.mrb[0].mxu0
        %1534 = vdwg.mxu0
        %v1535 = vadd.f32 %v1352, %v1409
        %v1536 = vadd.f32 %v1355, %v1412
        %v1537 = vadd.f32 %v1232, %v1417
        %v1538 = vadd.f32 %v1235, %v1420
        %v1539 = vadd.f32 %v1240, %v1425
        %v1540 = vadd.f32 %v1243, %v1428
        %v1541 = vadd.f32 %v1248, %v1433
        %v1542 = vadd.f32 %v1251, %v1436
        %v1543 = vadd.f32 %v1256, %v1441
        %v1544 = vadd.f32 %v1259, %v1444
        %v1545 = vadd.f32 %v1264, %v1449
        %v1546 = vadd.f32 %v1267, %v1452
        %v1547 = vadd.f32 %v1272, %v1457
        %v1548 = vadd.f32 %v1275, %v1460
        %v1549 = vadd.f32 %v1280, %v1465
        %v1550 = vadd.f32 %v1283, %v1468
        %v1551 = vadd.f32 %v1288, %v1473
        %v1552 = vadd.f32 %v1291, %v1476
        %v1553 = vadd.f32 %v1296, %v1481
        %v1554 = vadd.f32 %v1299, %v1484
        %v1555 = vadd.f32 %v1304, %v1489
        %v1556 = vadd.f32 %v1307, %v1492
        %v1557 = vadd.f32 %v1312, %v1497
        %v1558 = vadd.f32 %v1315, %v1500
        %v1559 = vadd.f32 %v1320, %v1505
        %v1560 = vadd.f32 %v1323, %v1508
        %v1561 = vadd.f32 %v1328, %v1513
        %v1562 = vadd.f32 %v1331, %v1516
        %v1563 = vadd.f32 %v1336, %v1521
        %v1564 = vadd.f32 %v1339, %v1524
        %v1565 = vadd.f32 %v1344, %v1529
        %v1566 = vadd.f32 %v1347, %v1532
        %s1567 = scalar_lea.vmem %s3, 24
        %v1568 = vld [vmem:[%s1567] sm:$0xf]
        %v1569 = vld [vmem:[%s1567 + $0x4] sm:$0xf]
        %v1570 = vld [vmem:[%s1567 + $0x8] sm:$0xf]
        %v1574 = vunpack.c.l.b16 %v1568
        %v1575 = vunpack.c.l.b16 %v1569
        %v1576 = vunpack.c.l.b16 %v1570
        %v1577 = vpack.c.b16 %v1575, %v1574
        %v1578 = vpack.c.b16 %v1576, %v1576
        %v1581 = vsel %vm1193, %v1578, 0
        %1583 = vmatprep.subr.bf16.mxu0 0
        %1584 = vmatpush1.bf16.msra.mxu0 %v1577
        %1585 = vmatprep.subr.bf16.mxu0 0
        %1586 = vmatpush1.bf16.msra.mxu0 %v1581
        %1587 = vmatprep.subr.bf16.mxu0 0
        %1588 = vmatpush1.bf16.msra.mxu0 0
        %1589 = vmatprep.subr.bf16.mxu0 0
        %1590 = vmatpush1.bf16.msra.mxu0 0
        %1591 = vmatprep.subr.bf16.mxu0 0
        %1592 = vmatpush1.bf16.msra.mxu0 0
        %1593 = vmatprep.subr.bf16.mxu0 0
        %1594 = vmatpush1.bf16.msra.mxu0 0
        %1595 = vmatprep.subr.bf16.mxu0 0
        %1596 = vmatpush1.bf16.msra.mxu0 0
        %1597 = vmatprep.subr.bf16.mxu0 0
        %1598 = vmatpush1.bf16.msra.mxu0 0
        %1599 = vmatprep.subr.bf16.mxu0 0
        %1600 = vmatpush1.bf16.msra.mxu0 0
        %1601 = vmatprep.subr.bf16.mxu0 0
        %1602 = vmatpush1.bf16.msra.mxu0 0
        %1603 = vmatprep.subr.bf16.mxu0 0
        %1604 = vmatpush1.bf16.msra.mxu0 0
        %1605 = vmatprep.subr.bf16.mxu0 0
        %1606 = vmatpush1.bf16.msra.mxu0 0
        %1607 = vmatprep.subr.bf16.mxu0 0
        %1608 = vmatpush1.bf16.msra.mxu0 0
        %1609 = vmatprep.subr.bf16.mxu0 0
        %1610 = vmatpush1.bf16.msra.mxu0 0
        %1611 = vmatprep.subr.bf16.mxu0 0
        %1612 = vmatpush1.bf16.msra.mxu0 0
        %1613 = vmatprep.subr.bf16.mxu0 0
        %1614 = vmatpush1.bf16.msra.mxu0 0
        %1615 = vmatprep.mubr.bf16.mxu0 0
        %1616 = vmatmul.mubr.bf16.gmra.mrb[0].mxu0 %v1161
        %v1617 = vpop.f32.mrb[0].mxu0
        %v1618 = vadd.f32 0.0, %v1617
        %v1619 = vpop.f32.mrb[0].mxu0
        %v1620 = vpop.f32.mrb[0].mxu0
        %v1621 = vadd.f32 0.0, %v1620
        %v1622 = vpop.f32.mrb[0].mxu0
        %1623 = vmatprep.mubr.bf16.mxu0 0
        %1624 = vmatmul.mubr.bf16.gmra.mrb[0].mxu0 %v1163
        %v1625 = vpop.f32.mrb[0].mxu0
        %v1626 = vadd.f32 0.0, %v1625
        %v1627 = vpop.f32.mrb[0].mxu0
        %v1628 = vpop.f32.mrb[0].mxu0
        %v1629 = vadd.f32 0.0, %v1628
        %v1630 = vpop.f32.mrb[0].mxu0
        %1631 = vmatprep.mubr.bf16.mxu0 0
        %1632 = vmatmul.mubr.bf16.gmra.mrb[0].mxu0 %v1165
        %v1633 = vpop.f32.mrb[0].mxu0
        %v1634 = vadd.f32 0.0, %v1633
        %v1635 = vpop.f32.mrb[0].mxu0
        %v1636 = vpop.f32.mrb[0].mxu0
        %v1637 = vadd.f32 0.0, %v1636
        %v1638 = vpop.f32.mrb[0].mxu0
        %1639 = vmatprep.mubr.bf16.mxu0 0
        %1640 = vmatmul.mubr.bf16.gmra.mrb[0].mxu0 %v1167
        %v1641 = vpop.f32.mrb[0].mxu0
        %v1642 = vadd.f32 0.0, %v1641
        %v1643 = vpop.f32.mrb[0].mxu0
        %v1644 = vpop.f32.mrb[0].mxu0
        %v1645 = vadd.f32 0.0, %v1644
        %v1646 = vpop.f32.mrb[0].mxu0
        %1647 = vmatprep.mubr.bf16.mxu0 0
        %1648 = vmatmul.mubr.bf16.gmra.mrb[0].mxu0 %v1169
        %v1649 = vpop.f32.mrb[0].mxu0
        %v1650 = vadd.f32 0.0, %v1649
        %v1651 = vpop.f32.mrb[0].mxu0
        %v1652 = vpop.f32.mrb[0].mxu0
        %v1653 = vadd.f32 0.0, %v1652
        %v1654 = vpop.f32.mrb[0].mxu0
        %1655 = vmatprep.mubr.bf16.mxu0 0
        %1656 = vmatmul.mubr.bf16.gmra.mrb[0].mxu0 %v1171
        %v1657 = vpop.f32.mrb[0].mxu0
        %v1658 = vadd.f32 0.0, %v1657
        %v1659 = vpop.f32.mrb[0].mxu0
        %v1660 = vpop.f32.mrb[0].mxu0
        %v1661 = vadd.f32 0.0, %v1660
        %v1662 = vpop.f32.mrb[0].mxu0
        %1663 = vmatprep.mubr.bf16.mxu0 0
        %1664 = vmatmul.mubr.bf16.gmra.mrb[0].mxu0 %v1173
        %v1665 = vpop.f32.mrb[0].mxu0
        %v1666 = vadd.f32 0.0, %v1665
        %v1667 = vpop.f32.mrb[0].mxu0
        %v1668 = vpop.f32.mrb[0].mxu0
        %v1669 = vadd.f32 0.0, %v1668
        %v1670 = vpop.f32.mrb[0].mxu0
        %1671 = vmatprep.mubr.bf16.mxu0 0
        %1672 = vmatmul.mubr.bf16.gmra.mrb[0].mxu0 %v1175
        %v1673 = vpop.f32.mrb[0].mxu0
        %v1674 = vadd.f32 0.0, %v1673
        %v1675 = vpop.f32.mrb[0].mxu0
        %v1676 = vpop.f32.mrb[0].mxu0
        %v1677 = vadd.f32 0.0, %v1676
        %v1678 = vpop.f32.mrb[0].mxu0
        %1679 = vmatprep.mubr.bf16.mxu0 0
        %1680 = vmatmul.mubr.bf16.gmra.mrb[0].mxu0 %v1177
        %v1681 = vpop.f32.mrb[0].mxu0
        %v1682 = vadd.f32 0.0, %v1681
        %v1683 = vpop.f32.mrb[0].mxu0
        %v1684 = vpop.f32.mrb[0].mxu0
        %v1685 = vadd.f32 0.0, %v1684
        %v1686 = vpop.f32.mrb[0].mxu0
        %1687 = vmatprep.mubr.bf16.mxu0 0
        %1688 = vmatmul.mubr.bf16.gmra.mrb[0].mxu0 %v1179
        %v1689 = vpop.f32.mrb[0].mxu0
        %v1690 = vadd.f32 0.0, %v1689
        %v1691 = vpop.f32.mrb[0].mxu0
        %v1692 = vpop.f32.mrb[0].mxu0
        %v1693 = vadd.f32 0.0, %v1692
        %v1694 = vpop.f32.mrb[0].mxu0
        %1695 = vmatprep.mubr.bf16.mxu0 0
        %1696 = vmatmul.mubr.bf16.gmra.mrb[0].mxu0 %v1181
        %v1697 = vpop.f32.mrb[0].mxu0
        %v1698 = vadd.f32 0.0, %v1697
        %v1699 = vpop.f32.mrb[0].mxu0
        %v1700 = vpop.f32.mrb[0].mxu0
        %v1701 = vadd.f32 0.0, %v1700
        %v1702 = vpop.f32.mrb[0].mxu0
        %1703 = vmatprep.mubr.bf16.mxu0 0
        %1704 = vmatmul.mubr.bf16.gmra.mrb[0].mxu0 %v1183
        %v1705 = vpop.f32.mrb[0].mxu0
        %v1706 = vadd.f32 0.0, %v1705
        %v1707 = vpop.f32.mrb[0].mxu0
        %v1708 = vpop.f32.mrb[0].mxu0
        %v1709 = vadd.f32 0.0, %v1708
        %v1710 = vpop.f32.mrb[0].mxu0
        %1711 = vmatprep.mubr.bf16.mxu0 0
        %1712 = vmatmul.mubr.bf16.gmra.mrb[0].mxu0 %v1185
        %v1713 = vpop.f32.mrb[0].mxu0
        %v1714 = vadd.f32 0.0, %v1713
        %v1715 = vpop.f32.mrb[0].mxu0
        %v1716 = vpop.f32.mrb[0].mxu0
        %v1717 = vadd.f32 0.0, %v1716
        %v1718 = vpop.f32.mrb[0].mxu0
        %1719 = vmatprep.mubr.bf16.mxu0 0
        %1720 = vmatmul.mubr.bf16.gmra.mrb[0].mxu0 %v1187
        %v1721 = vpop.f32.mrb[0].mxu0
        %v1722 = vadd.f32 0.0, %v1721
        %v1723 = vpop.f32.mrb[0].mxu0
        %v1724 = vpop.f32.mrb[0].mxu0
        %v1725 = vadd.f32 0.0, %v1724
        %v1726 = vpop.f32.mrb[0].mxu0
        %1727 = vmatprep.mubr.bf16.mxu0 0
        %1728 = vmatmul.mubr.bf16.gmra.mrb[0].mxu0 %v1189
        %v1729 = vpop.f32.mrb[0].mxu0
        %v1730 = vadd.f32 0.0, %v1729
        %v1731 = vpop.f32.mrb[0].mxu0
        %v1732 = vpop.f32.mrb[0].mxu0
        %v1733 = vadd.f32 0.0, %v1732
        %v1734 = vpop.f32.mrb[0].mxu0
        %1735 = vmatprep.mubr.bf16.mxu0 0
        %1736 = vmatmul.mubr.bf16.gmra.mrb[0].mxu0 %v1191
        %v1737 = vpop.f32.mrb[0].mxu0
        %v1738 = vadd.f32 0.0, %v1737
        %v1739 = vpop.f32.mrb[0].mxu0
        %v1740 = vpop.f32.mrb[0].mxu0
        %v1741 = vadd.f32 0.0, %v1740
        %v1742 = vpop.f32.mrb[0].mxu0
        %1743 = vdwg.mxu0
        %v1744 = vadd.f32 %v1535, %v1626
        %v1745 = vadd.f32 %v1536, %v1629
        %v1746 = vadd.f32 %v1537, %v1634
        %v1747 = vadd.f32 %v1538, %v1637
        %v1748 = vadd.f32 %v1539, %v1642
        %v1749 = vadd.f32 %v1540, %v1645
        %v1750 = vadd.f32 %v1541, %v1650
        %v1751 = vadd.f32 %v1542, %v1653
        %v1752 = vadd.f32 %v1543, %v1658
        %v1753 = vadd.f32 %v1544, %v1661
        %v1754 = vadd.f32 %v1545, %v1666
        %v1755 = vadd.f32 %v1546, %v1669
        %v1756 = vadd.f32 %v1547, %v1674
        %v1757 = vadd.f32 %v1548, %v1677
        %v1758 = vadd.f32 %v1549, %v1682
        %v1759 = vadd.f32 %v1550, %v1685
        %v1760 = vadd.f32 %v1551, %v1690
        %v1761 = vadd.f32 %v1552, %v1693
        %v1762 = vadd.f32 %v1553, %v1698
        %v1763 = vadd.f32 %v1554, %v1701
        %v1764 = vadd.f32 %v1555, %v1706
        %v1765 = vadd.f32 %v1556, %v1709
        %v1766 = vadd.f32 %v1557, %v1714
        %v1767 = vadd.f32 %v1558, %v1717
        %v1768 = vadd.f32 %v1559, %v1722
        %v1769 = vadd.f32 %v1560, %v1725
        %v1770 = vadd.f32 %v1561, %v1730
        %v1771 = vadd.f32 %v1562, %v1733
        %v1772 = vadd.f32 %v1563, %v1738
        %v1773 = vadd.f32 %v1564, %v1741
        %v1774 = vadd.f32 %v1565, %v1618
        %v1775 = vadd.f32 %v1566, %v1621
        %v1776 = vlaneseq
        %v1777 = vshrl.u32 %v1776, 7
        %v1778 = vsub.s32 0, %v1777
        %v1779 = vrot.slane %v227, %v1778
        %v1780 = vadd.f32 %v1744, %v1779
        %v1781 = vadd.f32 %v1745, %v1779
        %v1782 = vadd.f32 %v1746, %v1779
        %v1783 = vadd.f32 %v1747, %v1779
        %v1784 = vadd.f32 %v1748, %v1779
        %v1785 = vadd.f32 %v1749, %v1779
        %v1786 = vadd.f32 %v1750, %v1779
        %v1787 = vadd.f32 %v1751, %v1779
        %v1788 = vadd.f32 %v1752, %v1779
        %v1789 = vadd.f32 %v1753, %v1779
        %v1790 = vadd.f32 %v1754, %v1779
        %v1791 = vadd.f32 %v1755, %v1779
        %v1792 = vadd.f32 %v1756, %v1779
        %v1793 = vadd.f32 %v1757, %v1779
        %v1794 = vadd.f32 %v1758, %v1779
        %v1795 = vadd.f32 %v1759, %v1779
        %v1796 = vadd.f32 %v1760, %v1779
        %v1797 = vadd.f32 %v1761, %v1779
        %v1798 = vadd.f32 %v1762, %v1779
        %v1799 = vadd.f32 %v1763, %v1779
        %v1800 = vadd.f32 %v1764, %v1779
        %v1801 = vadd.f32 %v1765, %v1779
        %v1802 = vadd.f32 %v1766, %v1779
        %v1803 = vadd.f32 %v1767, %v1779
        %v1804 = vadd.f32 %v1768, %v1779
        %v1805 = vadd.f32 %v1769, %v1779
        %v1806 = vadd.f32 %v1770, %v1779
        %v1807 = vadd.f32 %v1771, %v1779
        %v1808 = vadd.f32 %v1772, %v1779
        %v1809 = vadd.f32 %v1773, %v1779
        %v1810 = vadd.f32 %v1774, %v1779
        %v1811 = vadd.f32 %v1775, %v1779
        %v1812 = vmax.f32 %v1780, 0.0
        %v1813 = vmax.f32 %v1781, 0.0
        %v1814 = vmax.f32 %v1782, 0.0
        %v1815 = vmax.f32 %v1783, 0.0
        %v1816 = vmax.f32 %v1784, 0.0
        %v1817 = vmax.f32 %v1785, 0.0
        %v1818 = vmax.f32 %v1786, 0.0
        %v1819 = vmax.f32 %v1787, 0.0
        %v1820 = vmax.f32 %v1788, 0.0
        %v1821 = vmax.f32 %v1789, 0.0
        %v1822 = vmax.f32 %v1790, 0.0
        %v1823 = vmax.f32 %v1791, 0.0
        %v1824 = vmax.f32 %v1792, 0.0
        %v1825 = vmax.f32 %v1793, 0.0
        %v1826 = vmax.f32 %v1794, 0.0
        %v1827 = vmax.f32 %v1795, 0.0
        %v1828 = vmax.f32 %v1796, 0.0
        %v1829 = vmax.f32 %v1797, 0.0
        %v1830 = vmax.f32 %v1798, 0.0
        %v1831 = vmax.f32 %v1799, 0.0
        %v1832 = vmax.f32 %v1800, 0.0
        %v1833 = vmax.f32 %v1801, 0.0
        %v1834 = vmax.f32 %v1802, 0.0
        %v1835 = vmax.f32 %v1803, 0.0
        %v1836 = vmax.f32 %v1804, 0.0
        %v1837 = vmax.f32 %v1805, 0.0
        %v1838 = vmax.f32 %v1806, 0.0
        %v1839 = vmax.f32 %v1807, 0.0
        %v1840 = vmax.f32 %v1808, 0.0
        %v1841 = vmax.f32 %v1809, 0.0
        %v1842 = vmax.f32 %v1810, 0.0
        %v1843 = vmax.f32 %v1811, 0.0
        %v1844 = vpack.c.bf16 %v1813, %v1812
        %v1845 = vpack.c.bf16 %v1815, %v1814
        %v1846 = vpack.c.bf16 %v1817, %v1816
        %v1847 = vpack.c.bf16 %v1819, %v1818
        %v1848 = vpack.c.bf16 %v1821, %v1820
        %v1849 = vpack.c.bf16 %v1823, %v1822
        %v1850 = vpack.c.bf16 %v1825, %v1824
        %v1851 = vpack.c.bf16 %v1827, %v1826
        %v1852 = vpack.c.bf16 %v1829, %v1828
        %v1853 = vpack.c.bf16 %v1831, %v1830
        %v1854 = vpack.c.bf16 %v1833, %v1832
        %v1855 = vpack.c.bf16 %v1835, %v1834
        %v1856 = vpack.c.bf16 %v1837, %v1836
        %v1857 = vpack.c.bf16 %v1839, %v1838
        %v1858 = vpack.c.bf16 %v1841, %v1840
        %v1859 = vpack.c.bf16 %v1843, %v1842
        %v1860 = vpack.c.bf16 %v230, %v229
        %v1861 = vpack.c.bf16 %v232, %v231
        %v1862 = vpack.c.bf16 %v234, %v233
        %v1863 = vpack.c.bf16 %v236, %v235
        %v1864 = vpack.c.bf16 %v238, %v237
        %v1865 = vpack.c.bf16 %v240, %v239
        %v1866 = vpack.c.bf16 %v242, %v241
        %v1867 = vpack.c.bf16 %v244, %v243
        %v1868 = vpack.c.bf16 %v246, %v245
        %v1869 = vpack.c.bf16 %v248, %v247
        %v1870 = vpack.c.bf16 %v250, %v249
        %v1871 = vpack.c.bf16 %v252, %v251
        %v1872 = vpack.c.bf16 %v254, %v253
        %v1873 = vpack.c.bf16 %v256, %v255
        %v1874 = vpack.c.bf16 %v258, %v257
        %v1875 = vpack.c.bf16 %v260, %v259
        %1892 = vrot.lane.b32.xlu0 %v1860, 8
        %v1893 = vpop.permute.xlu0 %1892
        %1894 = vrot.lane.b32.xlu0 %v1861, 8
        %v1895 = vpop.permute.xlu0 %1894
        %1896 = vrot.lane.b32.xlu0 %v1862, 8
        %v1897 = vpop.permute.xlu0 %1896
        %1898 = vrot.lane.b32.xlu0 %v1863, 8
        %v1899 = vpop.permute.xlu0 %1898
        %1900 = vrot.lane.b32.xlu0 %v1864, 8
        %v1901 = vpop.permute.xlu0 %1900
        %1902 = vrot.lane.b32.xlu0 %v1865, 8
        %v1903 = vpop.permute.xlu0 %1902
        %1904 = vrot.lane.b32.xlu0 %v1866, 8
        %v1905 = vpop.permute.xlu0 %1904
        %1906 = vrot.lane.b32.xlu0 %v1867, 8
        %v1907 = vpop.permute.xlu0 %1906
        %1908 = vrot.lane.b32.xlu0 %v1868, 8
        %v1909 = vpop.permute.xlu0 %1908
        %1910 = vrot.lane.b32.xlu0 %v1869, 8
        %v1911 = vpop.permute.xlu0 %1910
        %1912 = vrot.lane.b32.xlu0 %v1870, 8
        %v1913 = vpop.permute.xlu0 %1912
        %1914 = vrot.lane.b32.xlu0 %v1871, 8
        %v1915 = vpop.permute.xlu0 %1914
        %1916 = vrot.lane.b32.xlu0 %v1872, 8
        %v1917 = vpop.permute.xlu0 %1916
        %1918 = vrot.lane.b32.xlu0 %v1873, 8
        %v1919 = vpop.permute.xlu0 %1918
        %1920 = vrot.lane.b32.xlu0 %v1874, 8
        %v1921 = vpop.permute.xlu0 %1920
        %1922 = vrot.lane.b32.xlu0 %v1875, 8
        %v1923 = vpop.permute.xlu0 %1922
        %v1926 = vsel %vm1066, %v1844, %v1893
        %v1929 = vsel %vm1066, %v1845, %v1895
        %v1932 = vsel %vm1066, %v1846, %v1897
        %v1935 = vsel %vm1066, %v1847, %v1899
        %v1938 = vsel %vm1066, %v1848, %v1901
        %v1941 = vsel %vm1066, %v1849, %v1903
        %v1944 = vsel %vm1066, %v1850, %v1905
        %v1947 = vsel %vm1066, %v1851, %v1907
        %v1950 = vsel %vm1066, %v1852, %v1909
        %v1953 = vsel %vm1066, %v1853, %v1911
        %v1956 = vsel %vm1066, %v1854, %v1913
        %v1959 = vsel %vm1066, %v1855, %v1915
        %v1962 = vsel %vm1066, %v1856, %v1917
        %v1965 = vsel %vm1066, %v1857, %v1919
        %v1968 = vsel %vm1066, %v1858, %v1921
        %v1971 = vsel %vm1066, %v1859, %v1923
        %v1972 = vld [vmem:[%s4] sm:$0xf]
        %v1973 = vld [vmem:[%s4 + $0x4] sm:$0x3]
        %v1976 = vunpack.c.l.b16 %v1972
        %v1977 = vunpack.c.l.b16 %v1973
        %v1978 = vpack.c.b16 %v1977, %v1976
        %vm1979 = vcmask 97280
        %v1980 = vsel %vm1979, %v1926, 0
        %v1982 = vsel %vm1979, %v1929, 0
        %v1984 = vsel %vm1979, %v1932, 0
        %v1986 = vsel %vm1979, %v1935, 0
        %v1988 = vsel %vm1979, %v1938, 0
        %v1990 = vsel %vm1979, %v1941, 0
        %v1992 = vsel %vm1979, %v1944, 0
        %v1994 = vsel %vm1979, %v1947, 0
        %v1996 = vsel %vm1979, %v1950, 0
        %v1998 = vsel %vm1979, %v1953, 0
        %v2000 = vsel %vm1979, %v1956, 0
        %v2002 = vsel %vm1979, %v1959, 0
        %v2004 = vsel %vm1979, %v1962, 0
        %v2006 = vsel %vm1979, %v1965, 0
        %v2008 = vsel %vm1979, %v1968, 0
        %v2010 = vsel %vm1979, %v1971, 0
        %vm2012 = vcmask 1045504
        %v2014 = vsel %vm2012, %v1978, 0
        %2016 = vmatprep.subr.bf16.mxu0 0
        %2017 = vmatpush1.bf16.msra.mxu0 %v2014
        %2018 = vmatprep.subr.bf16.mxu0 0
        %2019 = vmatpush1.bf16.msra.mxu0 0
        %2020 = vmatprep.subr.bf16.mxu0 0
        %2021 = vmatpush1.bf16.msra.mxu0 0
        %2022 = vmatprep.subr.bf16.mxu0 0
        %2023 = vmatpush1.bf16.msra.mxu0 0
        %2024 = vmatprep.subr.bf16.mxu0 0
        %2025 = vmatpush1.bf16.msra.mxu0 0
        %2026 = vmatprep.subr.bf16.mxu0 0
        %2027 = vmatpush1.bf16.msra.mxu0 0
        %2028 = vmatprep.subr.bf16.mxu0 0
        %2029 = vmatpush1.bf16.msra.mxu0 0
        %2030 = vmatprep.subr.bf16.mxu0 0
        %2031 = vmatpush1.bf16.msra.mxu0 0
        %2032 = vmatprep.subr.bf16.mxu0 0
        %2033 = vmatpush1.bf16.msra.mxu0 0
        %2034 = vmatprep.subr.bf16.mxu0 0
        %2035 = vmatpush1.bf16.msra.mxu0 0
        %2036 = vmatprep.subr.bf16.mxu0 0
        %2037 = vmatpush1.bf16.msra.mxu0 0
        %2038 = vmatprep.subr.bf16.mxu0 0
        %2039 = vmatpush1.bf16.msra.mxu0 0
        %2040 = vmatprep.subr.bf16.mxu0 0
        %2041 = vmatpush1.bf16.msra.mxu0 0
        %2042 = vmatprep.subr.bf16.mxu0 0
        %2043 = vmatpush1.bf16.msra.mxu0 0
        %2044 = vmatprep.subr.bf16.mxu0 0
        %2045 = vmatpush1.bf16.msra.mxu0 0
        %2046 = vmatprep.subr.bf16.mxu0 0
        %2047 = vmatpush1.bf16.msra.mxu0 0
        %2048 = vmatprep.mubr.bf16.mxu0 0
        %2049 = vmatmul.mubr.bf16.gmra.mrb[0].mxu0 %v1980
        %v2050 = vpop.f32.mrb[0].mxu0
        %v2051 = vadd.f32 0.0, %v2050
        %v2052 = vpop.f32.mrb[0].mxu0
        %v2053 = vpop.f32.mrb[0].mxu0
        %v2054 = vadd.f32 0.0, %v2053
        %v2055 = vpop.f32.mrb[0].mxu0
        %2056 = vmatprep.mubr.bf16.mxu0 0
        %2057 = vmatmul.mubr.bf16.gmra.mrb[0].mxu0 %v1982
        %v2058 = vpop.f32.mrb[0].mxu0
        %v2059 = vadd.f32 0.0, %v2058
        %v2060 = vpop.f32.mrb[0].mxu0
        %v2061 = vpop.f32.mrb[0].mxu0
        %v2062 = vadd.f32 0.0, %v2061
        %v2063 = vpop.f32.mrb[0].mxu0
        %2064 = vmatprep.mubr.bf16.mxu0 0
        %2065 = vmatmul.mubr.bf16.gmra.mrb[0].mxu0 %v1984
        %v2066 = vpop.f32.mrb[0].mxu0
        %v2067 = vadd.f32 0.0, %v2066
        %v2068 = vpop.f32.mrb[0].mxu0
        %v2069 = vpop.f32.mrb[0].mxu0
        %v2070 = vadd.f32 0.0, %v2069
        %v2071 = vpop.f32.mrb[0].mxu0
        %2072 = vmatprep.mubr.bf16.mxu0 0
        %2073 = vmatmul.mubr.bf16.gmra.mrb[0].mxu0 %v1986
        %v2074 = vpop.f32.mrb[0].mxu0
        %v2075 = vadd.f32 0.0, %v2074
        %v2076 = vpop.f32.mrb[0].mxu0
        %v2077 = vpop.f32.mrb[0].mxu0
        %v2078 = vadd.f32 0.0, %v2077
        %v2079 = vpop.f32.mrb[0].mxu0
        %2080 = vmatprep.mubr.bf16.mxu0 0
        %2081 = vmatmul.mubr.bf16.gmra.mrb[0].mxu0 %v1988
        %v2082 = vpop.f32.mrb[0].mxu0
        %v2083 = vadd.f32 0.0, %v2082
        %v2084 = vpop.f32.mrb[0].mxu0
        %v2085 = vpop.f32.mrb[0].mxu0
        %v2086 = vadd.f32 0.0, %v2085
        %v2087 = vpop.f32.mrb[0].mxu0
        %2088 = vmatprep.mubr.bf16.mxu0 0
        %2089 = vmatmul.mubr.bf16.gmra.mrb[0].mxu0 %v1990
        %v2090 = vpop.f32.mrb[0].mxu0
        %v2091 = vadd.f32 0.0, %v2090
        %v2092 = vpop.f32.mrb[0].mxu0
        %v2093 = vpop.f32.mrb[0].mxu0
        %v2094 = vadd.f32 0.0, %v2093
        %v2095 = vpop.f32.mrb[0].mxu0
        %2096 = vmatprep.mubr.bf16.mxu0 0
        %2097 = vmatmul.mubr.bf16.gmra.mrb[0].mxu0 %v1992
        %v2098 = vpop.f32.mrb[0].mxu0
        %v2099 = vadd.f32 0.0, %v2098
        %v2100 = vpop.f32.mrb[0].mxu0
        %v2101 = vpop.f32.mrb[0].mxu0
        %v2102 = vadd.f32 0.0, %v2101
        %v2103 = vpop.f32.mrb[0].mxu0
        %2104 = vmatprep.mubr.bf16.mxu0 0
        %2105 = vmatmul.mubr.bf16.gmra.mrb[0].mxu0 %v1994
        %v2106 = vpop.f32.mrb[0].mxu0
        %v2107 = vadd.f32 0.0, %v2106
        %v2108 = vpop.f32.mrb[0].mxu0
        %v2109 = vpop.f32.mrb[0].mxu0
        %v2110 = vadd.f32 0.0, %v2109
        %v2111 = vpop.f32.mrb[0].mxu0
        %2112 = vmatprep.mubr.bf16.mxu0 0
        %2113 = vmatmul.mubr.bf16.gmra.mrb[0].mxu0 %v1996
        %v2114 = vpop.f32.mrb[0].mxu0
        %v2115 = vadd.f32 0.0, %v2114
        %v2116 = vpop.f32.mrb[0].mxu0
        %v2117 = vpop.f32.mrb[0].mxu0
        %v2118 = vadd.f32 0.0, %v2117
        %v2119 = vpop.f32.mrb[0].mxu0
        %2120 = vmatprep.mubr.bf16.mxu0 0
        %2121 = vmatmul.mubr.bf16.gmra.mrb[0].mxu0 %v1998
        %v2122 = vpop.f32.mrb[0].mxu0
        %v2123 = vadd.f32 0.0, %v2122
        %v2124 = vpop.f32.mrb[0].mxu0
        %v2125 = vpop.f32.mrb[0].mxu0
        %v2126 = vadd.f32 0.0, %v2125
        %v2127 = vpop.f32.mrb[0].mxu0
        %2128 = vmatprep.mubr.bf16.mxu0 0
        %2129 = vmatmul.mubr.bf16.gmra.mrb[0].mxu0 %v2000
        %v2130 = vpop.f32.mrb[0].mxu0
        %v2131 = vadd.f32 0.0, %v2130
        %v2132 = vpop.f32.mrb[0].mxu0
        %v2133 = vpop.f32.mrb[0].mxu0
        %v2134 = vadd.f32 0.0, %v2133
        %v2135 = vpop.f32.mrb[0].mxu0
        %2136 = vmatprep.mubr.bf16.mxu0 0
        %2137 = vmatmul.mubr.bf16.gmra.mrb[0].mxu0 %v2002
        %v2138 = vpop.f32.mrb[0].mxu0
        %v2139 = vadd.f32 0.0, %v2138
        %v2140 = vpop.f32.mrb[0].mxu0
        %v2141 = vpop.f32.mrb[0].mxu0
        %v2142 = vadd.f32 0.0, %v2141
        %v2143 = vpop.f32.mrb[0].mxu0
        %2144 = vmatprep.mubr.bf16.mxu0 0
        %2145 = vmatmul.mubr.bf16.gmra.mrb[0].mxu0 %v2004
        %v2146 = vpop.f32.mrb[0].mxu0
        %v2147 = vadd.f32 0.0, %v2146
        %v2148 = vpop.f32.mrb[0].mxu0
        %v2149 = vpop.f32.mrb[0].mxu0
        %v2150 = vadd.f32 0.0, %v2149
        %v2151 = vpop.f32.mrb[0].mxu0
        %2152 = vmatprep.mubr.bf16.mxu0 0
        %2153 = vmatmul.mubr.bf16.gmra.mrb[0].mxu0 %v2006
        %v2154 = vpop.f32.mrb[0].mxu0
        %v2155 = vadd.f32 0.0, %v2154
        %v2156 = vpop.f32.mrb[0].mxu0
        %v2157 = vpop.f32.mrb[0].mxu0
        %v2158 = vadd.f32 0.0, %v2157
        %v2159 = vpop.f32.mrb[0].mxu0
        %2160 = vmatprep.mubr.bf16.mxu0 0
        %2161 = vmatmul.mubr.bf16.gmra.mrb[0].mxu0 %v2008
        %v2162 = vpop.f32.mrb[0].mxu0
        %v2163 = vadd.f32 0.0, %v2162
        %v2164 = vpop.f32.mrb[0].mxu0
        %v2165 = vpop.f32.mrb[0].mxu0
        %v2166 = vadd.f32 0.0, %v2165
        %v2167 = vpop.f32.mrb[0].mxu0
        %2168 = vmatprep.mubr.bf16.mxu0 0
        %2169 = vmatmul.mubr.bf16.gmra.mrb[0].mxu0 %v2010
        %v2170 = vpop.f32.mrb[0].mxu0
        %v2171 = vadd.f32 0.0, %v2170
        %v2172 = vpop.f32.mrb[0].mxu0
        %v2173 = vpop.f32.mrb[0].mxu0
        %v2174 = vadd.f32 0.0, %v2173
        %v2175 = vpop.f32.mrb[0].mxu0
        %2176 = vdwg.mxu0
        %v2177 = vlaneseq
        %v2178 = vshrl.u32 %v2177, 7
        %v2179 = vsub.s32 0, %v2178
        %v2180 = vrot.slane %v228, %v2179
        %v2181 = vadd.f32 %v2051, %v2180
        %v2182 = vadd.f32 %v2054, %v2180
        %v2183 = vadd.f32 %v2059, %v2180
        %v2184 = vadd.f32 %v2062, %v2180
        %v2185 = vadd.f32 %v2067, %v2180
        %v2186 = vadd.f32 %v2070, %v2180
        %v2187 = vadd.f32 %v2075, %v2180
        %v2188 = vadd.f32 %v2078, %v2180
        %v2189 = vadd.f32 %v2083, %v2180
        %v2190 = vadd.f32 %v2086, %v2180
        %v2191 = vadd.f32 %v2091, %v2180
        %v2192 = vadd.f32 %v2094, %v2180
        %v2193 = vadd.f32 %v2099, %v2180
        %v2194 = vadd.f32 %v2102, %v2180
        %v2195 = vadd.f32 %v2107, %v2180
        %v2196 = vadd.f32 %v2110, %v2180
        %v2197 = vadd.f32 %v2115, %v2180
        %v2198 = vadd.f32 %v2118, %v2180
        %v2199 = vadd.f32 %v2123, %v2180
        %v2200 = vadd.f32 %v2126, %v2180
        %v2201 = vadd.f32 %v2131, %v2180
        %v2202 = vadd.f32 %v2134, %v2180
        %v2203 = vadd.f32 %v2139, %v2180
        %v2204 = vadd.f32 %v2142, %v2180
        %v2205 = vadd.f32 %v2147, %v2180
        %v2206 = vadd.f32 %v2150, %v2180
        %v2207 = vadd.f32 %v2155, %v2180
        %v2208 = vadd.f32 %v2158, %v2180
        %v2209 = vadd.f32 %v2163, %v2180
        %v2210 = vadd.f32 %v2166, %v2180
        %v2211 = vadd.f32 %v2171, %v2180
        %v2212 = vadd.f32 %v2174, %v2180
        %v2213 = vcombine.low %v2181, %v2185
        %v2214 = vcombine.high %v2181, %v2185
        %v2216 = vunpack.c.l.s4 1983009808
        %v2217 = vunpack.c.0.s8 %v2216
        %v2218 = vlaneseq
        %v2219 = vshrl.u32 %v2218, 7
        %v2220 = vsub.s32 %v2217, %v2219
        %v2221 = vrot.slane %v2213, %v2220
        %v2223 = vunpack.c.l.s4 1983009808
        %v2224 = vunpack.c.0.s8 %v2223
        %v2225 = vlaneseq
        %v2226 = vshrl.u32 %v2225, 7
        %v2227 = vsub.s32 %v2224, %v2226
        %v2228 = vrot.slane %v2214, %v2227
        %v2229 = vcombine.low %v2183, %v2187
        %v2230 = vcombine.high %v2183, %v2187
        %v2232 = vunpack.c.l.s4 1983009808
        %v2233 = vunpack.c.0.s8 %v2232
        %v2234 = vlaneseq
        %v2235 = vshrl.u32 %v2234, 7
        %v2236 = vsub.s32 %v2233, %v2235
        %v2237 = vrot.slane %v2229, %v2236
        %v2239 = vunpack.c.l.s4 1983009808
        %v2240 = vunpack.c.0.s8 %v2239
        %v2241 = vlaneseq
        %v2242 = vshrl.u32 %v2241, 7
        %v2243 = vsub.s32 %v2240, %v2242
        %v2244 = vrot.slane %v2230, %v2243
        %v2245 = vcombine.low %v2189, %v2193
        %v2246 = vcombine.high %v2189, %v2193
        %v2248 = vunpack.c.l.s4 1983009808
        %v2249 = vunpack.c.0.s8 %v2248
        %v2250 = vlaneseq
        %v2251 = vshrl.u32 %v2250, 7
        %v2252 = vsub.s32 %v2249, %v2251
        %v2253 = vrot.slane %v2245, %v2252
        %v2255 = vunpack.c.l.s4 1983009808
        %v2256 = vunpack.c.0.s8 %v2255
        %v2257 = vlaneseq
        %v2258 = vshrl.u32 %v2257, 7
        %v2259 = vsub.s32 %v2256, %v2258
        %v2260 = vrot.slane %v2246, %v2259
        %v2261 = vcombine.low %v2191, %v2195
        %v2262 = vcombine.high %v2191, %v2195
        %v2264 = vunpack.c.l.s4 1983009808
        %v2265 = vunpack.c.0.s8 %v2264
        %v2266 = vlaneseq
        %v2267 = vshrl.u32 %v2266, 7
        %v2268 = vsub.s32 %v2265, %v2267
        %v2269 = vrot.slane %v2261, %v2268
        %v2271 = vunpack.c.l.s4 1983009808
        %v2272 = vunpack.c.0.s8 %v2271
        %v2273 = vlaneseq
        %v2274 = vshrl.u32 %v2273, 7
        %v2275 = vsub.s32 %v2272, %v2274
        %v2276 = vrot.slane %v2262, %v2275
        %v2277 = vcombine.low %v2221, %v2237
        %v2278 = vcombine.high %v2221, %v2237
        %v2280 = vunpack.c.l.s4 1934713408
        %v2281 = vunpack.c.0.s8 %v2280
        %v2282 = vlaneseq
        %v2283 = vshrl.u32 %v2282, 7
        %v2284 = vsub.s32 %v2281, %v2283
        %v2285 = vrot.slane %v2277, %v2284
        %v2287 = vunpack.c.l.s4 1934713408
        %v2288 = vunpack.c.0.s8 %v2287
        %v2289 = vlaneseq
        %v2290 = vshrl.u32 %v2289, 7
        %v2291 = vsub.s32 %v2288, %v2290
        %v2292 = vrot.slane %v2278, %v2291
        %v2293 = vcombine.low %v2228, %v2244
        %v2294 = vcombine.high %v2228, %v2244
        %v2296 = vunpack.c.l.s4 1934713408
        %v2297 = vunpack.c.0.s8 %v2296
        %v2298 = vlaneseq
        %v2299 = vshrl.u32 %v2298, 7
        %v2300 = vsub.s32 %v2297, %v2299
        %v2301 = vrot.slane %v2293, %v2300
        %v2303 = vunpack.c.l.s4 1934713408
        %v2304 = vunpack.c.0.s8 %v2303
        %v2305 = vlaneseq
        %v2306 = vshrl.u32 %v2305, 7
        %v2307 = vsub.s32 %v2304, %v2306
        %v2308 = vrot.slane %v2294, %v2307
        %v2309 = vcombine.low %v2253, %v2269
        %v2310 = vcombine.high %v2253, %v2269
        %v2312 = vunpack.c.l.s4 1934713408
        %v2313 = vunpack.c.0.s8 %v2312
        %v2314 = vlaneseq
        %v2315 = vshrl.u32 %v2314, 7
        %v2316 = vsub.s32 %v2313, %v2315
        %v2317 = vrot.slane %v2309, %v2316
        %v2319 = vunpack.c.l.s4 1934713408
        %v2320 = vunpack.c.0.s8 %v2319
        %v2321 = vlaneseq
        %v2322 = vshrl.u32 %v2321, 7
        %v2323 = vsub.s32 %v2320, %v2322
        %v2324 = vrot.slane %v2310, %v2323
        %v2325 = vcombine.low %v2260, %v2276
        %v2326 = vcombine.high %v2260, %v2276
        %v2328 = vunpack.c.l.s4 1934713408
        %v2329 = vunpack.c.0.s8 %v2328
        %v2330 = vlaneseq
        %v2331 = vshrl.u32 %v2330, 7
        %v2332 = vsub.s32 %v2329, %v2331
        %v2333 = vrot.slane %v2325, %v2332
        %v2335 = vunpack.c.l.s4 1934713408
        %v2336 = vunpack.c.0.s8 %v2335
        %v2337 = vlaneseq
        %v2338 = vshrl.u32 %v2337, 7
        %v2339 = vsub.s32 %v2336, %v2338
        %v2340 = vrot.slane %v2326, %v2339
        %v2341 = vcombine.low %v2285, %v2317
        %v2342 = vcombine.high %v2285, %v2317
        %v2343 = vcombine.low %v2292, %v2324
        %v2344 = vcombine.high %v2292, %v2324
        %v2345 = vcombine.low %v2301, %v2333
        %v2346 = vcombine.high %v2301, %v2333
        %v2347 = vcombine.low %v2308, %v2340
        %v2348 = vcombine.high %v2308, %v2340
        %v2349 = vcombine.low %v2197, %v2201
        %v2350 = vcombine.high %v2197, %v2201
        %v2352 = vunpack.c.l.s4 1983009808
        %v2353 = vunpack.c.0.s8 %v2352
        %v2354 = vlaneseq
        %v2355 = vshrl.u32 %v2354, 7
        %v2356 = vsub.s32 %v2353, %v2355
        %v2357 = vrot.slane %v2349, %v2356
        %v2359 = vunpack.c.l.s4 1983009808
        %v2360 = vunpack.c.0.s8 %v2359
        %v2361 = vlaneseq
        %v2362 = vshrl.u32 %v2361, 7
        %v2363 = vsub.s32 %v2360, %v2362
        %v2364 = vrot.slane %v2350, %v2363
        %v2365 = vcombine.low %v2199, %v2203
        %v2366 = vcombine.high %v2199, %v2203
        %v2368 = vunpack.c.l.s4 1983009808
        %v2369 = vunpack.c.0.s8 %v2368
        %v2370 = vlaneseq
        %v2371 = vshrl.u32 %v2370, 7
        %v2372 = vsub.s32 %v2369, %v2371
        %v2373 = vrot.slane %v2365, %v2372
        %v2375 = vunpack.c.l.s4 1983009808
        %v2376 = vunpack.c.0.s8 %v2375
        %v2377 = vlaneseq
        %v2378 = vshrl.u32 %v2377, 7
        %v2379 = vsub.s32 %v2376, %v2378
        %v2380 = vrot.slane %v2366, %v2379
        %v2381 = vcombine.low %v2205, %v2209
        %v2382 = vcombine.high %v2205, %v2209
        %v2384 = vunpack.c.l.s4 1983009808
        %v2385 = vunpack.c.0.s8 %v2384
        %v2386 = vlaneseq
        %v2387 = vshrl.u32 %v2386, 7
        %v2388 = vsub.s32 %v2385, %v2387
        %v2389 = vrot.slane %v2381, %v2388
        %v2391 = vunpack.c.l.s4 1983009808
        %v2392 = vunpack.c.0.s8 %v2391
        %v2393 = vlaneseq
        %v2394 = vshrl.u32 %v2393, 7
        %v2395 = vsub.s32 %v2392, %v2394
        %v2396 = vrot.slane %v2382, %v2395
        %v2397 = vcombine.low %v2207, %v2211
        %v2398 = vcombine.high %v2207, %v2211
        %v2400 = vunpack.c.l.s4 1983009808
        %v2401 = vunpack.c.0.s8 %v2400
        %v2402 = vlaneseq
        %v2403 = vshrl.u32 %v2402, 7
        %v2404 = vsub.s32 %v2401, %v2403
        %v2405 = vrot.slane %v2397, %v2404
        %v2407 = vunpack.c.l.s4 1983009808
        %v2408 = vunpack.c.0.s8 %v2407
        %v2409 = vlaneseq
        %v2410 = vshrl.u32 %v2409, 7
        %v2411 = vsub.s32 %v2408, %v2410
        %v2412 = vrot.slane %v2398, %v2411
        %v2413 = vcombine.low %v2357, %v2373
        %v2414 = vcombine.high %v2357, %v2373
        %v2416 = vunpack.c.l.s4 1934713408
        %v2417 = vunpack.c.0.s8 %v2416
        %v2418 = vlaneseq
        %v2419 = vshrl.u32 %v2418, 7
        %v2420 = vsub.s32 %v2417, %v2419
        %v2421 = vrot.slane %v2413, %v2420
        %v2423 = vunpack.c.l.s4 1934713408
        %v2424 = vunpack.c.0.s8 %v2423
        %v2425 = vlaneseq
        %v2426 = vshrl.u32 %v2425, 7
        %v2427 = vsub.s32 %v2424, %v2426
        %v2428 = vrot.slane %v2414, %v2427
        %v2429 = vcombine.low %v2364, %v2380
        %v2430 = vcombine.high %v2364, %v2380
        %v2432 = vunpack.c.l.s4 1934713408
        %v2433 = vunpack.c.0.s8 %v2432
        %v2434 = vlaneseq
        %v2435 = vshrl.u32 %v2434, 7
        %v2436 = vsub.s32 %v2433, %v2435
        %v2437 = vrot.slane %v2429, %v2436
        %v2439 = vunpack.c.l.s4 1934713408
        %v2440 = vunpack.c.0.s8 %v2439
        %v2441 = vlaneseq
        %v2442 = vshrl.u32 %v2441, 7
        %v2443 = vsub.s32 %v2440, %v2442
        %v2444 = vrot.slane %v2430, %v2443
        %v2445 = vcombine.low %v2389, %v2405
        %v2446 = vcombine.high %v2389, %v2405
        %v2448 = vunpack.c.l.s4 1934713408
        %v2449 = vunpack.c.0.s8 %v2448
        %v2450 = vlaneseq
        %v2451 = vshrl.u32 %v2450, 7
        %v2452 = vsub.s32 %v2449, %v2451
        %v2453 = vrot.slane %v2445, %v2452
        %v2455 = vunpack.c.l.s4 1934713408
        %v2456 = vunpack.c.0.s8 %v2455
        %v2457 = vlaneseq
        %v2458 = vshrl.u32 %v2457, 7
        %v2459 = vsub.s32 %v2456, %v2458
        %v2460 = vrot.slane %v2446, %v2459
        %v2461 = vcombine.low %v2396, %v2412
        %v2462 = vcombine.high %v2396, %v2412
        %v2464 = vunpack.c.l.s4 1934713408
        %v2465 = vunpack.c.0.s8 %v2464
        %v2466 = vlaneseq
        %v2467 = vshrl.u32 %v2466, 7
        %v2468 = vsub.s32 %v2465, %v2467
        %v2469 = vrot.slane %v2461, %v2468
        %v2471 = vunpack.c.l.s4 1934713408
        %v2472 = vunpack.c.0.s8 %v2471
        %v2473 = vlaneseq
        %v2474 = vshrl.u32 %v2473, 7
        %v2475 = vsub.s32 %v2472, %v2474
        %v2476 = vrot.slane %v2462, %v2475
        %v2477 = vcombine.low %v2421, %v2453
        %v2478 = vcombine.high %v2421, %v2453
        %v2479 = vcombine.low %v2428, %v2460
        %v2480 = vcombine.high %v2428, %v2460
        %v2481 = vcombine.low %v2437, %v2469
        %v2482 = vcombine.high %v2437, %v2469
        %v2483 = vcombine.low %v2444, %v2476
        %v2484 = vcombine.high %v2444, %v2476
        %v2485 = vcombine.low %v2182, %v2186
        %v2486 = vcombine.high %v2182, %v2186
        %v2488 = vunpack.c.l.s4 1983009808
        %v2489 = vunpack.c.0.s8 %v2488
        %v2490 = vlaneseq
        %v2491 = vshrl.u32 %v2490, 7
        %v2492 = vsub.s32 %v2489, %v2491
        %v2493 = vrot.slane %v2485, %v2492
        %v2495 = vunpack.c.l.s4 1983009808
        %v2496 = vunpack.c.0.s8 %v2495
        %v2497 = vlaneseq
        %v2498 = vshrl.u32 %v2497, 7
        %v2499 = vsub.s32 %v2496, %v2498
        %v2500 = vrot.slane %v2486, %v2499
        %v2501 = vcombine.low %v2184, %v2188
        %v2502 = vcombine.high %v2184, %v2188
        %v2504 = vunpack.c.l.s4 1983009808
        %v2505 = vunpack.c.0.s8 %v2504
        %v2506 = vlaneseq
        %v2507 = vshrl.u32 %v2506, 7
        %v2508 = vsub.s32 %v2505, %v2507
        %v2509 = vrot.slane %v2501, %v2508
        %v2511 = vunpack.c.l.s4 1983009808
        %v2512 = vunpack.c.0.s8 %v2511
        %v2513 = vlaneseq
        %v2514 = vshrl.u32 %v2513, 7
        %v2515 = vsub.s32 %v2512, %v2514
        %v2516 = vrot.slane %v2502, %v2515
        %v2517 = vcombine.low %v2190, %v2194
        %v2518 = vcombine.high %v2190, %v2194
        %v2520 = vunpack.c.l.s4 1983009808
        %v2521 = vunpack.c.0.s8 %v2520
        %v2522 = vlaneseq
        %v2523 = vshrl.u32 %v2522, 7
        %v2524 = vsub.s32 %v2521, %v2523
        %v2525 = vrot.slane %v2517, %v2524
        %v2527 = vunpack.c.l.s4 1983009808
        %v2528 = vunpack.c.0.s8 %v2527
        %v2529 = vlaneseq
        %v2530 = vshrl.u32 %v2529, 7
        %v2531 = vsub.s32 %v2528, %v2530
        %v2532 = vrot.slane %v2518, %v2531
        %v2533 = vcombine.low %v2192, %v2196
        %v2534 = vcombine.high %v2192, %v2196
        %v2536 = vunpack.c.l.s4 1983009808
        %v2537 = vunpack.c.0.s8 %v2536
        %v2538 = vlaneseq
        %v2539 = vshrl.u32 %v2538, 7
        %v2540 = vsub.s32 %v2537, %v2539
        %v2541 = vrot.slane %v2533, %v2540
        %v2543 = vunpack.c.l.s4 1983009808
        %v2544 = vunpack.c.0.s8 %v2543
        %v2545 = vlaneseq
        %v2546 = vshrl.u32 %v2545, 7
        %v2547 = vsub.s32 %v2544, %v2546
        %v2548 = vrot.slane %v2534, %v2547
        %v2549 = vcombine.low %v2493, %v2509
        %v2550 = vcombine.high %v2493, %v2509
        %v2552 = vunpack.c.l.s4 1934713408
        %v2553 = vunpack.c.0.s8 %v2552
        %v2554 = vlaneseq
        %v2555 = vshrl.u32 %v2554, 7
        %v2556 = vsub.s32 %v2553, %v2555
        %v2557 = vrot.slane %v2549, %v2556
        %v2559 = vunpack.c.l.s4 1934713408
        %v2560 = vunpack.c.0.s8 %v2559
        %v2561 = vlaneseq
        %v2562 = vshrl.u32 %v2561, 7
        %v2563 = vsub.s32 %v2560, %v2562
        %v2564 = vrot.slane %v2550, %v2563
        %v2565 = vcombine.low %v2500, %v2516
        %v2566 = vcombine.high %v2500, %v2516
        %v2568 = vunpack.c.l.s4 1934713408
        %v2569 = vunpack.c.0.s8 %v2568
        %v2570 = vlaneseq
        %v2571 = vshrl.u32 %v2570, 7
        %v2572 = vsub.s32 %v2569, %v2571
        %v2573 = vrot.slane %v2565, %v2572
        %v2575 = vunpack.c.l.s4 1934713408
        %v2576 = vunpack.c.0.s8 %v2575
        %v2577 = vlaneseq
        %v2578 = vshrl.u32 %v2577, 7
        %v2579 = vsub.s32 %v2576, %v2578
        %v2580 = vrot.slane %v2566, %v2579
        %v2581 = vcombine.low %v2525, %v2541
        %v2582 = vcombine.high %v2525, %v2541
        %v2584 = vunpack.c.l.s4 1934713408
        %v2585 = vunpack.c.0.s8 %v2584
        %v2586 = vlaneseq
        %v2587 = vshrl.u32 %v2586, 7
        %v2588 = vsub.s32 %v2585, %v2587
        %v2589 = vrot.slane %v2581, %v2588
        %v2591 = vunpack.c.l.s4 1934713408
        %v2592 = vunpack.c.0.s8 %v2591
        %v2593 = vlaneseq
        %v2594 = vshrl.u32 %v2593, 7
        %v2595 = vsub.s32 %v2592, %v2594
        %v2596 = vrot.slane %v2582, %v2595
        %v2597 = vcombine.low %v2532, %v2548
        %v2598 = vcombine.high %v2532, %v2548
        %v2600 = vunpack.c.l.s4 1934713408
        %v2601 = vunpack.c.0.s8 %v2600
        %v2602 = vlaneseq
        %v2603 = vshrl.u32 %v2602, 7
        %v2604 = vsub.s32 %v2601, %v2603
        %v2605 = vrot.slane %v2597, %v2604
        %v2607 = vunpack.c.l.s4 1934713408
        %v2608 = vunpack.c.0.s8 %v2607
        %v2609 = vlaneseq
        %v2610 = vshrl.u32 %v2609, 7
        %v2611 = vsub.s32 %v2608, %v2610
        %v2612 = vrot.slane %v2598, %v2611
        %v2613 = vcombine.low %v2557, %v2589
        %v2614 = vcombine.high %v2557, %v2589
        %v2615 = vcombine.low %v2564, %v2596
        %v2616 = vcombine.high %v2564, %v2596
        %v2617 = vcombine.low %v2573, %v2605
        %v2618 = vcombine.high %v2573, %v2605
        %v2619 = vcombine.low %v2580, %v2612
        %v2620 = vcombine.high %v2580, %v2612
        %v2621 = vcombine.low %v2198, %v2202
        %v2622 = vcombine.high %v2198, %v2202
        %v2624 = vunpack.c.l.s4 1983009808
        %v2625 = vunpack.c.0.s8 %v2624
        %v2626 = vlaneseq
        %v2627 = vshrl.u32 %v2626, 7
        %v2628 = vsub.s32 %v2625, %v2627
        %v2629 = vrot.slane %v2621, %v2628
        %v2631 = vunpack.c.l.s4 1983009808
        %v2632 = vunpack.c.0.s8 %v2631
        %v2633 = vlaneseq
        %v2634 = vshrl.u32 %v2633, 7
        %v2635 = vsub.s32 %v2632, %v2634
        %v2636 = vrot.slane %v2622, %v2635
        %v2637 = vcombine.low %v2200, %v2204
        %v2638 = vcombine.high %v2200, %v2204
        %v2640 = vunpack.c.l.s4 1983009808
        %v2641 = vunpack.c.0.s8 %v2640
        %v2642 = vlaneseq
        %v2643 = vshrl.u32 %v2642, 7
        %v2644 = vsub.s32 %v2641, %v2643
        %v2645 = vrot.slane %v2637, %v2644
        %v2647 = vunpack.c.l.s4 1983009808
        %v2648 = vunpack.c.0.s8 %v2647
        %v2649 = vlaneseq
        %v2650 = vshrl.u32 %v2649, 7
        %v2651 = vsub.s32 %v2648, %v2650
        %v2652 = vrot.slane %v2638, %v2651
        %v2653 = vcombine.low %v2206, %v2210
        %v2654 = vcombine.high %v2206, %v2210
        %v2656 = vunpack.c.l.s4 1983009808
        %v2657 = vunpack.c.0.s8 %v2656
        %v2658 = vlaneseq
        %v2659 = vshrl.u32 %v2658, 7
        %v2660 = vsub.s32 %v2657, %v2659
        %v2661 = vrot.slane %v2653, %v2660
        %v2663 = vunpack.c.l.s4 1983009808
        %v2664 = vunpack.c.0.s8 %v2663
        %v2665 = vlaneseq
        %v2666 = vshrl.u32 %v2665, 7
        %v2667 = vsub.s32 %v2664, %v2666
        %v2668 = vrot.slane %v2654, %v2667
        %v2669 = vcombine.low %v2208, %v2212
        %v2670 = vcombine.high %v2208, %v2212
        %v2672 = vunpack.c.l.s4 1983009808
        %v2673 = vunpack.c.0.s8 %v2672
        %v2674 = vlaneseq
        %v2675 = vshrl.u32 %v2674, 7
        %v2676 = vsub.s32 %v2673, %v2675
        %v2677 = vrot.slane %v2669, %v2676
        %v2679 = vunpack.c.l.s4 1983009808
        %v2680 = vunpack.c.0.s8 %v2679
        %v2681 = vlaneseq
        %v2682 = vshrl.u32 %v2681, 7
        %v2683 = vsub.s32 %v2680, %v2682
        %v2684 = vrot.slane %v2670, %v2683
        %v2685 = vcombine.low %v2629, %v2645
        %v2686 = vcombine.high %v2629, %v2645
        %v2688 = vunpack.c.l.s4 1934713408
        %v2689 = vunpack.c.0.s8 %v2688
        %v2690 = vlaneseq
        %v2691 = vshrl.u32 %v2690, 7
        %v2692 = vsub.s32 %v2689, %v2691
        %v2693 = vrot.slane %v2685, %v2692
        %v2695 = vunpack.c.l.s4 1934713408
        %v2696 = vunpack.c.0.s8 %v2695
        %v2697 = vlaneseq
        %v2698 = vshrl.u32 %v2697, 7
        %v2699 = vsub.s32 %v2696, %v2698
        %v2700 = vrot.slane %v2686, %v2699
        %v2701 = vcombine.low %v2636, %v2652
        %v2702 = vcombine.high %v2636, %v2652
        %v2704 = vunpack.c.l.s4 1934713408
        %v2705 = vunpack.c.0.s8 %v2704
        %v2706 = vlaneseq
        %v2707 = vshrl.u32 %v2706, 7
        %v2708 = vsub.s32 %v2705, %v2707
        %v2709 = vrot.slane %v2701, %v2708
        %v2711 = vunpack.c.l.s4 1934713408
        %v2712 = vunpack.c.0.s8 %v2711
        %v2713 = vlaneseq
        %v2714 = vshrl.u32 %v2713, 7
        %v2715 = vsub.s32 %v2712, %v2714
        %v2716 = vrot.slane %v2702, %v2715
        %v2717 = vcombine.low %v2661, %v2677
        %v2718 = vcombine.high %v2661, %v2677
        %v2720 = vunpack.c.l.s4 1934713408
        %v2721 = vunpack.c.0.s8 %v2720
        %v2722 = vlaneseq
        %v2723 = vshrl.u32 %v2722, 7
        %v2724 = vsub.s32 %v2721, %v2723
        %v2725 = vrot.slane %v2717, %v2724
        %v2727 = vunpack.c.l.s4 1934713408
        %v2728 = vunpack.c.0.s8 %v2727
        %v2729 = vlaneseq
        %v2730 = vshrl.u32 %v2729, 7
        %v2731 = vsub.s32 %v2728, %v2730
        %v2732 = vrot.slane %v2718, %v2731
        %v2733 = vcombine.low %v2668, %v2684
        %v2734 = vcombine.high %v2668, %v2684
        %v2736 = vunpack.c.l.s4 1934713408
        %v2737 = vunpack.c.0.s8 %v2736
        %v2738 = vlaneseq
        %v2739 = vshrl.u32 %v2738, 7
        %v2740 = vsub.s32 %v2737, %v2739
        %v2741 = vrot.slane %v2733, %v2740
        %v2743 = vunpack.c.l.s4 1934713408
        %v2744 = vunpack.c.0.s8 %v2743
        %v2745 = vlaneseq
        %v2746 = vshrl.u32 %v2745, 7
        %v2747 = vsub.s32 %v2744, %v2746
        %v2748 = vrot.slane %v2734, %v2747
        %v2749 = vcombine.low %v2693, %v2725
        %v2750 = vcombine.high %v2693, %v2725
        %v2751 = vcombine.low %v2700, %v2732
        %v2752 = vcombine.high %v2700, %v2732
        %v2753 = vcombine.low %v2709, %v2741
        %v2754 = vcombine.high %v2709, %v2741
        %v2755 = vcombine.low %v2716, %v2748
        %v2756 = vcombine.high %v2716, %v2748
        %2759 = vrot.lane.b32.xlu0 %v2342, 16
        %v2760 = vpop.permute.xlu0 %2759
        %2761 = vrot.lane.b32.xlu0 %v2478, 16
        %v2762 = vpop.permute.xlu0 %2761
        %2767 = vrot.lane.b32.xlu0 %v2343, 32
        %v2768 = vpop.permute.xlu0 %2767
        %2769 = vrot.lane.b32.xlu0 %v2479, 32
        %v2770 = vpop.permute.xlu0 %2769
        %2775 = vrot.lane.b32.xlu0 %v2344, 48
        %v2776 = vpop.permute.xlu0 %2775
        %2777 = vrot.lane.b32.xlu0 %v2480, 48
        %v2778 = vpop.permute.xlu0 %2777
        %2783 = vrot.lane.b32.xlu0 %v2345, 64
        %v2784 = vpop.permute.xlu0 %2783
        %2785 = vrot.lane.b32.xlu0 %v2481, 64
        %v2786 = vpop.permute.xlu0 %2785
        %2791 = vrot.lane.b32.xlu0 %v2346, 80
        %v2792 = vpop.permute.xlu0 %2791
        %2793 = vrot.lane.b32.xlu0 %v2482, 80
        %v2794 = vpop.permute.xlu0 %2793
        %2799 = vrot.lane.b32.xlu0 %v2347, 96
        %v2800 = vpop.permute.xlu0 %2799
        %2801 = vrot.lane.b32.xlu0 %v2483, 96
        %v2802 = vpop.permute.xlu0 %2801
        %2807 = vrot.lane.b32.xlu0 %v2348, 112
        %v2808 = vpop.permute.xlu0 %2807
        %2809 = vrot.lane.b32.xlu0 %v2484, 112
        %v2810 = vpop.permute.xlu0 %2809
        %2815 = vrot.lane.b32.xlu0 %v2614, 16
        %v2816 = vpop.permute.xlu0 %2815
        %2817 = vrot.lane.b32.xlu0 %v2750, 16
        %v2818 = vpop.permute.xlu0 %2817
        %2823 = vrot.lane.b32.xlu0 %v2615, 32
        %v2824 = vpop.permute.xlu0 %2823
        %2825 = vrot.lane.b32.xlu0 %v2751, 32
        %v2826 = vpop.permute.xlu0 %2825
        %2831 = vrot.lane.b32.xlu0 %v2616, 48
        %v2832 = vpop.permute.xlu0 %2831
        %2833 = vrot.lane.b32.xlu0 %v2752, 48
        %v2834 = vpop.permute.xlu0 %2833
        %2839 = vrot.lane.b32.xlu0 %v2617, 64
        %v2840 = vpop.permute.xlu0 %2839
        %2841 = vrot.lane.b32.xlu0 %v2753, 64
        %v2842 = vpop.permute.xlu0 %2841
        %2847 = vrot.lane.b32.xlu0 %v2618, 80
        %v2848 = vpop.permute.xlu0 %2847
        %2849 = vrot.lane.b32.xlu0 %v2754, 80
        %v2850 = vpop.permute.xlu0 %2849
        %2855 = vrot.lane.b32.xlu0 %v2619, 96
        %v2856 = vpop.permute.xlu0 %2855
        %2857 = vrot.lane.b32.xlu0 %v2755, 96
        %v2858 = vpop.permute.xlu0 %2857
        %2863 = vrot.lane.b32.xlu0 %v2620, 112
        %v2864 = vpop.permute.xlu0 %2863
        %2865 = vrot.lane.b32.xlu0 %v2756, 112
        %v2866 = vpop.permute.xlu0 %2865
        %v2869 = vsel %vm1115, %v2341, %v2760
        %v2870 = vsel %vm1115, %v2477, %v2762
        %vm2871 = vcmask 261120
        %v2872 = vsel %vm2871, %v2869, %v2768
        %v2873 = vsel %vm2871, %v2870, %v2770
        %vm2874 = vcmask 392192
        %v2875 = vsel %vm2874, %v2872, %v2776
        %v2876 = vsel %vm2874, %v2873, %v2778
        %vm2877 = vcmask 523264
        %v2878 = vsel %vm2877, %v2875, %v2784
        %v2879 = vsel %vm2877, %v2876, %v2786
        %vm2880 = vcmask 654336
        %v2881 = vsel %vm2880, %v2878, %v2792
        %v2882 = vsel %vm2880, %v2879, %v2794
        %vm2883 = vcmask 785408
        %v2884 = vsel %vm2883, %v2881, %v2800
        %v2885 = vsel %vm2883, %v2882, %v2802
        %vm2886 = vcmask 916480
        %v2887 = vsel %vm2886, %v2884, %v2808
        %v2888 = vsel %vm2886, %v2885, %v2810
        %v2889 = vsel %vm1115, %v2613, %v2816
        %v2890 = vsel %vm1115, %v2749, %v2818
        %v2891 = vsel %vm2871, %v2889, %v2824
        %v2892 = vsel %vm2871, %v2890, %v2826
        %v2893 = vsel %vm2874, %v2891, %v2832
        %v2894 = vsel %vm2874, %v2892, %v2834
        %v2895 = vsel %vm2877, %v2893, %v2840
        %v2896 = vsel %vm2877, %v2894, %v2842
        %v2897 = vsel %vm2880, %v2895, %v2848
        %v2898 = vsel %vm2880, %v2896, %v2850
        %v2899 = vsel %vm2883, %v2897, %v2856
        %v2900 = vsel %vm2883, %v2898, %v2858
        %v2901 = vsel %vm2886, %v2899, %v2864
        %v2902 = vsel %vm2886, %v2900, %v2866
        %2903 = vst [vmem:[%s217] sm:$0xff] %v2887
        %2904 = vst [vmem:[%s217 + $0x8] sm:$0xff] %v2901
        %2905 = vst [vmem:[%s217 + $0x10] sm:$0xff] %v2888
        %2906 = vst [vmem:[%s217 + $0x18] sm:$0xff] %v2902
        %s2907 = sand.u32 %s137, 1
        %s2908 = scalar_lea.sflag [#allocation3], %s2907
        %s2909 = sand.u32 %s137, 1
        %s2910 = smul.addr %s2909, 32
        %s2911 = scalar_lea.vmem [#allocation2], %s2910
        // Predicated region
        $region41: #{tpu_custom_call.1} parent=39 // pred_check
          %p2912 = pneg %p147
        $region42: #{tpu_custom_call.1} parent=39 // pred_check_branch
          %2914 = sbr.rel (%p2912) target = $region44
        $region43: #{tpu_custom_call.1} parent=39 // pred_region
          %s2916 = ssub.s32 512, 512
          %2917 = vsyncadd %s2908, %s2916
          %s2918 = smul.addr %s19, 4
          %s2919 = smul.addr %s2918, 128
          %s2920 = scalar_lea.hbm %s5, %s2919
          %s2921 = sshll.u32 %s2911, 4
          %s2922 = int_to_ptr.vmem [resolvable:$true] %s2921
          %2927 = dma.vmem_to_hbm [thread:$0]  %s2922, 512, %s2920, %s2908, 256, 256, 16
        $region44: #{tpu_custom_call.1} parent=39 // pred_fallthru
          _
      $region40: #{tpu_custom_call.1} parent=5 // pred_fallthru
        _
      %p2928 = scmp.le.s32.totalorder 2, %s14
      // Predicated region
      $region45: #{tpu_custom_call.1} parent=5 // pred_check
        %p2929 = pneg %p2928
      $region46: #{tpu_custom_call.1} parent=5 // pred_check_branch
        %2931 = sbr.rel (%p2929) target = $region48
      $region47: #{tpu_custom_call.1} parent=5 // pred_region
        %s2932 = ssub.s32 %s14, 2
        // Predicated region
        $region49: #{tpu_custom_call.1} parent=47 // pred_check
          %p2933 = pneg %p153
        $region50: #{tpu_custom_call.1} parent=47 // pred_check_branch
          %2935 = sbr.rel (%p2933) target = $region52
        $region51: #{tpu_custom_call.1} parent=47 // pred_region
          %s2936 = sand.u32 %s138, 1
          %s2937 = scalar_lea.sflag [#allocation3], %s2936
          %s2938 = sand.u32 %s138, 1
          %s2939 = smul.addr %s2938, 32
          %s2940 = scalar_lea.vmem [#allocation2], %s2939
          %2941 = dma.done %s2937, 512
        $region52: #{tpu_custom_call.1} parent=47 // pred_fallthru
          _
      $region48: #{tpu_custom_call.1} parent=5 // pred_fallthru
        _
    $region6: #{tpu_custom_call.1} parent=1 // loop_footer
      %s18 = sadd.s32 1, %s14
    $region7: #{tpu_custom_call.1} parent=1 // loop_footer_branch
      %13 = sbr.rel target = $region3
    $region8: #{tpu_custom_call.1} parent=1 // loop_exit
      _
    %2942 = vsyncpa [#allocation3], 1
    %s2943 = scalar_lea.sflag [#allocation3], 1
    %2944 = vsyncpa %s2943, 1

// kernel: tpu_custom_call.1
$region0: #{tpu_custom_call.1}
  #allocation0 [shape = 'u32[]', space=smem, size = 0x4, offset = 0x4, fixed_abs, tag = 'smem constant byte address 0x4 - core index']
  #allocation1 [shape = 'u32[144,128]{1,0:T(1,128)}', space=vmem, size = 0x12000, scoped, tag = 'internal scratch']
  %s0 = inlined_call_operand.vmem [shape: f32[2,16,16,4], index: 0, kind: input, shape index: {}]
  %s1 = inlined_call_operand.vmem [shape: f32[8,16], index: 1, kind: input, shape index: {}]
  %s2 = inlined_call_operand.vmem [shape: bf16[4,8], index: 2, kind: input, shape index: {}]
  %s3 = inlined_call_operand.vmem [shape: bf16[3,24,8], index: 3, kind: input, shape index: {}]
  %s4 = inlined_call_operand.vmem [shape: bf16[12,16], index: 4, kind: input, shape index: {}]
  %s5 = inlined_call_operand.hbm [shape: f32[2,16,16,16], index: 5, kind: output, shape index: {}]
  %s6 = sld [smem:[#allocation0]]
  $region53: #{tpu_custom_call.1} parent=0
    _
  %s8 = ssub.s32 1, %s6
  %s9 = scalar_select 0, %s8, %s6
  $region1: #{tpu_custom_call.1} parent=0
    #allocation2 [shape = 'u8[262144]{0}', space=vmem, size = 0x40000, scoped, tag = 'output window, operand 0']
    #allocation3 [shape = 's32[2]{0}', space=sflag, size = 0x8, scoped, tag = 'scoped memory for tpu_custom_call.1']
    %10 = vsyncpa [#allocation3], 0
    %s11 = scalar_lea.sflag [#allocation3], 1
    %12 = vsyncpa %s11, 0
    loop: start=0, step=1, limit=4
    $region2: #{tpu_custom_call.1} parent=1 // loop_pre_header
      _
    $region3: #{tpu_custom_call.1} parent=1 // loop_header
      %s14 = sphi 0, %s18
      %p15 = scmp.ge.s32.totalorder %s14, 4
      %s24 = sphi 0, %s26
      %s27 = sphi 0, %s24
      %s28 = sphi 0, %s27
      %s44 = sphi 0, %s28
      %s48 = sphi 0, %s48
      %s50 = sphi 0, %s48
      %s51 = sphi 0, %s50
      %s65 = sphi 0, %s51
      %s69 = sphi 0, %s69
      %s71 = sphi 0, %s69
      %s72 = sphi 0, %s71
      %s86 = sphi 0, %s72
      %s90 = sphi 0, %s90
      %s92 = sphi 0, %s90
      %s93 = sphi 0, %s92
      %s107 = sphi 0, %s93
      %s111 = sphi 0, %s111
      %s113 = sphi 0, %s111
      %s114 = sphi 0, %s113
      %s128 = sphi 0, %s114
      %s134 = sphi 0, %s136
      %s137 = sphi 0, %s134
      %s138 = sphi 0, %s137
      %s154 = sphi 0, %s138
    $region4: #{tpu_custom_call.1} parent=1 // loop_header_branch
      %17 = sbr.rel (%p15) target = $region8
    $region5: #{tpu_custom_call.1} parent=1 // loop_body
      %s19 = ssub.s32 %s14, 1
      %s20 = ssub.s32 %s14, 2
      %s21 = sadd.s32 %s14, 1
      %s22 = ssub.s32 %s14, %s21
      %p23 = scmp.eq.s32.totalorder %s22, 0
      %s25 = sadd.s32 %s24, 1
      %s26 = scalar_select %p23, %s24, %s25
      %p29 = pneg %p23
      %p30 = scmp.eq.s32.totalorder %s14, 1
      %p31 = por %p29, %p30
      %p32 = scmp.ne.s32.totalorder %s24, %s27
      %p33 = scmp.eq.s32.totalorder %s14, 0
      %p34 = por %p32, %p33
      %p35 = scmp.ne.s32.totalorder %s24, %s27
      %p36 = scmp.eq.s32.totalorder %s19, 1
      %p37 = por %p35, %p36
      %p38 = scmp.ne.s32.totalorder %s27, %s28
      %p39 = scmp.eq.s32.totalorder %s19, 0
      %p40 = por %p38, %p39
      %p41 = scmp.ne.s32.totalorder %s27, %s28
      %p42 = scmp.eq.s32.totalorder %s20, 1
      %p43 = por %p41, %p42
      %p45 = scmp.ne.s32.totalorder %s28, %s44
      %p46 = scmp.eq.s32.totalorder %s20, 0
      %p47 = por %p45, %p46
      %s49 = sadd.s32 %s48, 1
      %p52 = scmp.eq.s32.totalorder %s14, 1
      %p53 = scmp.ne.s32.totalorder %s48, %s50
      %p54 = scmp.eq.s32.totalorder %s14, 0
      %p55 = por %p53, %p54
      %p56 = scmp.ne.s32.totalorder %s48, %s50
      %p57 = scmp.eq.s32.totalorder %s19, 1
      %p58 = por %p56, %p57
      %p59 = scmp.ne.s32.totalorder %s50, %s51
      %p60 = scmp.eq.s32.totalorder %s19, 0
      %p61 = por %p59, %p60
      %p62 = scmp.ne.s32.totalorder %s50, %s51
      %p63 = scmp.eq.s32.totalorder %s20, 1
      %p64 = por %p62, %p63
      %p66 = scmp.ne.s32.totalorder %s51, %s65
      %p67 = scmp.eq.s32.totalorder %s20, 0
      %p68 = por %p66, %p67
      %s70 = sadd.s32 %s69, 1
      %p73 = scmp.eq.s32.totalorder %s14, 1
      %p74 = scmp.ne.s32.totalorder %s69, %s71
      %p75 = scmp.eq.s32.totalorder %s14, 0
      %p76 = por %p74, %p75
      %p77 = scmp.ne.s32.totalorder %s69, %s71
      %p78 = scmp.eq.s32.totalorder %s19, 1
      %p79 = por %p77, %p78
      %p80 = scmp.ne.s32.totalorder %s71, %s72
      %p81 = scmp.eq.s32.totalorder %s19, 0
      %p82 = por %p80, %p81
      %p83 = scmp.ne.s32.totalorder %s71, %s72
      %p84 = scmp.eq.s32.totalorder %s20, 1
      %p85 = por %p83, %p84
      %p87 = scmp.ne.s32.totalorder %s72, %s86
      %p88 = scmp.eq.s32.totalorder %s20, 0
      %p89 = por %p87, %p88
      %s91 = sadd.s32 %s90, 1
      %p94 = scmp.eq.s32.totalorder %s14, 1
      %p95 = scmp.ne.s32.totalorder %s90, %s92
      %p96 = scmp.eq.s32.totalorder %s14, 0
      %p97 = por %p95, %p96
      %p98 = scmp.ne.s32.totalorder %s90, %s92
      %p99 = scmp.eq.s32.totalorder %s19, 1
      %p100 = por %p98, %p99
      %p101 = scmp.ne.s32.totalorder %s92, %s93
      %p102 = scmp.eq.s32.totalorder %s19, 0
      %p103 = por %p101, %p102
      %p104 = scmp.ne.s32.totalorder %s92, %s93
      %p105 = scmp.eq.s32.totalorder %s20, 1
      %p106 = por %p104, %p105
      %p108 = scmp.ne.s32.totalorder %s93, %s107
      %p109 = scmp.eq.s32.totalorder %s20, 0
      %p110 = por %p108, %p109
      %s112 = sadd.s32 %s111, 1
      %p115 = scmp.eq.s32.totalorder %s14, 1
      %p116 = scmp.ne.s32.totalorder %s111, %s113
      %p117 = scmp.eq.s32.totalorder %s14, 0
      %p118 = por %p116, %p117
      %p119 = scmp.ne.s32.totalorder %s111, %s113
      %p120 = scmp.eq.s32.totalorder %s19, 1
      %p121 = por %p119, %p120
      %p122 = scmp.ne.s32.totalorder %s113, %s114
      %p123 = scmp.eq.s32.totalorder %s19, 0
      %p124 = por %p122, %p123
      %p125 = scmp.ne.s32.totalorder %s113, %s114
      %p126 = scmp.eq.s32.totalorder %s20, 1
      %p127 = por %p125, %p126
      %p129 = scmp.ne.s32.totalorder %s114, %s128
      %p130 = scmp.eq.s32.totalorder %s20, 0
      %p131 = por %p129, %p130
      %s132 = ssub.s32 %s14, %s21
      %p133 = scmp.eq.s32.totalorder %s132, 0
      %s135 = sadd.s32 %s134, 1
      %s136 = scalar_select %p133, %s134, %s135
      %p139 = pneg %p133
      %p140 = scmp.eq.s32.totalorder %s14, 1
      %p141 = por %p139, %p140
      %p142 = scmp.ne.s32.totalorder %s134, %s137
      %p143 = scmp.eq.s32.totalorder %s14, 0
      %p144 = por %p142, %p143
      %p145 = scmp.ne.s32.totalorder %s134, %s137
      %p146 = scmp.eq.s32.totalorder %s19, 1
      %p147 = por %p145, %p146
      %p148 = scmp.ne.s32.totalorder %s137, %s138
      %p149 = scmp.eq.s32.totalorder %s19, 0
      %p150 = por %p148, %p149
      %p151 = scmp.ne.s32.totalorder %s137, %s138
      %p152 = scmp.eq.s32.totalorder %s20, 1
      %p153 = por %p151, %p152
      %p155 = scmp.ne.s32.totalorder %s138, %s154
      %p156 = scmp.eq.s32.totalorder %s20, 0
      %p157 = por %p155, %p156
      %p158 = scmp.le.s32.totalorder 1, %s14
      %p159 = scmp.lt.s32.totalorder %s14, 3
      %p160 = pnand %p158, %p159
      %p161 = pneg %p160
      // Predicated region
      $region9: #{tpu_custom_call.1} parent=5 // pred_check
        _
      $region10: #{tpu_custom_call.1} parent=5 // pred_check_branch
        %163 = sbr.rel (%p160) target = $region12
      $region11: #{tpu_custom_call.1} parent=5 // pred_region
        %s164 = ssub.s32 %s14, 1
        // Predicated region
        $region13: #{tpu_custom_call.1} parent=11 // pred_check
          %p165 = pneg %p61
        $region14: #{tpu_custom_call.1} parent=11 // pred_check_branch
          %167 = sbr.rel (%p165) target = $region16
        $region15: #{tpu_custom_call.1} parent=11 // pred_region
          _
        $region16: #{tpu_custom_call.1} parent=11 // pred_fallthru
          _
        // Predicated region
        $region17: #{tpu_custom_call.1} parent=11 // pred_check
          %p168 = pneg %p82
        $region18: #{tpu_custom_call.1} parent=11 // pred_check_branch
          %170 = sbr.rel (%p168) target = $region20
        $region19: #{tpu_custom_call.1} parent=11 // pred_region
          _
        $region20: #{tpu_custom_call.1} parent=11 // pred_fallthru
          _
        // Predicated region
        $region21: #{tpu_custom_call.1} parent=11 // pred_check
          %p171 = pneg %p103
        $region22: #{tpu_custom_call.1} parent=11 // pred_check_branch
          %173 = sbr.rel (%p171) target = $region24
        $region23: #{tpu_custom_call.1} parent=11 // pred_region
          _
        $region24: #{tpu_custom_call.1} parent=11 // pred_fallthru
          _
        // Predicated region
        $region25: #{tpu_custom_call.1} parent=11 // pred_check
          %p174 = pneg %p124
        $region26: #{tpu_custom_call.1} parent=11 // pred_check_branch
          %176 = sbr.rel (%p174) target = $region28
        $region27: #{tpu_custom_call.1} parent=11 // pred_region
          _
        $region28: #{tpu_custom_call.1} parent=11 // pred_fallthru
          _
      $region12: #{tpu_custom_call.1} parent=5 // pred_fallthru
        _
      %p177 = scmp.lt.s32.totalorder %s14, 2
      // Predicated region
      $region29: #{tpu_custom_call.1} parent=5 // pred_check
        %p178 = pneg %p177
      $region30: #{tpu_custom_call.1} parent=5 // pred_check_branch
        %180 = sbr.rel (%p178) target = $region32
      $region31: #{tpu_custom_call.1} parent=5 // pred_region
        // Predicated region
        $region33: #{tpu_custom_call.1} parent=31 // pred_check
          %p181 = pneg %p34
        $region34: #{tpu_custom_call.1} parent=31 // pred_check_branch
          %183 = sbr.rel (%p181) target = $region36
        $region35: #{tpu_custom_call.1} parent=31 // pred_region
          %p184 = scmp.lt.s32.totalorder %s14, 1
          %s185 = scalar_select %p184, %s14, 1
          %s186 = smul.addr %s185, 32
          %s187 = smul.addr %s186, 8
          %s188 = scalar_lea.vmem %s0, %s187
        $region36: #{tpu_custom_call.1} parent=31 // pred_fallthru
          _
      $region32: #{tpu_custom_call.1} parent=5 // pred_fallthru
        _
      %p189 = scmp.le.s32.totalorder 1, %s14
      %p190 = scmp.lt.s32.totalorder %s14, 3
      %p191 = pnand %p189, %p190
      %p192 = pneg %p191
      // Predicated region
      $region37: #{tpu_custom_call.1} parent=5 // pred_check
        _
      $region38: #{tpu_custom_call.1} parent=5 // pred_check_branch
        %194 = sbr.rel (%p191) target = $region40
      $region39: #{tpu_custom_call.1} parent=5 // pred_region
        %s195 = ssub.s32 %s14, 1
        %p196 = scmp.lt.s32.totalorder %s19, 1
        %s197 = scalar_select %p196, %s19, 1
        %s198 = smul.addr %s197, 32
        %s199 = smul.addr %s198, 8
        %s200 = scalar_lea.vmem %s0, %s199
        %p201 = pneg %p40
        %p202 = pneg %p37
        %p203 = pneg %p61
        %p204 = pneg %p58
        %p205 = pneg %p82
        %p206 = pneg %p79
        %p207 = pneg %p103
        %p208 = pneg %p100
        %p209 = pneg %p124
        %p210 = pneg %p121
        %p211 = pneg %p150
        %p212 = pneg %p147
        %s213 = sand.u32 %s137, 1
        %s214 = scalar_lea.sflag [#allocation3], %s213
        %s215 = sand.u32 %s137, 1
        %s216 = smul.addr %s215, 256
        %s217 = scalar_lea.vmem [#allocation2], %s216
        %p218 = scmp.lt.s32.totalorder %s19, 1
        %s219 = scalar_select %p218, %s19, 1
        %s220 = smul.addr %s219, 32
        %s221 = smul.addr %s220, 8
        %s222 = scalar_lea.vmem %s0, %s221
        %v224 = vld [vmem:[%s1] sm:$0x1]
        %v225 = vld [vmem:[%s1 + $0x1] sm:$0x1]
        %v226 = vld [vmem:[%s1 + $0x2] sm:$0x1]
        %v227 = vld [vmem:[%s1 + $0x3] sm:$0x1]
        %v228 = vld [vmem:[%s1 + $0x4] sm:$0x1]
        %v229 = vld [vmem:[%s222] sm:$0xff]
        %v230 = vld [vmem:[%s222 + $0x8] sm:$0xff]
        %v231 = vld [vmem:[%s222 + $0x10] sm:$0xff]
        %v232 = vld [vmem:[%s222 + $0x18] sm:$0xff]
        %v233 = vld [vmem:[%s222 + $0x20] sm:$0xff]
        %v234 = vld [vmem:[%s222 + $0x28] sm:$0xff]
        %v235 = vld [vmem:[%s222 + $0x30] sm:$0xff]
        %v236 = vld [vmem:[%s222 + $0x38] sm:$0xff]
        %v237 = vld [vmem:[%s222 + $0x40] sm:$0xff]
        %v238 = vld [vmem:[%s222 + $0x48] sm:$0xff]
        %v239 = vld [vmem:[%s222 + $0x50] sm:$0xff]
        %v240 = vld [vmem:[%s222 + $0x58] sm:$0xff]
        %v241 = vld [vmem:[%s222 + $0x60] sm:$0xff]
        %v242 = vld [vmem:[%s222 + $0x68] sm:$0xff]
        %v243 = vld [vmem:[%s222 + $0x70] sm:$0xff]
        %v244 = vld [vmem:[%s222 + $0x78] sm:$0xff]
        %v245 = vld [vmem:[%s222 + $0x80] sm:$0xff]
        %v246 = vld [vmem:[%s222 + $0x88] sm:$0xff]
        %v247 = vld [vmem:[%s222 + $0x90] sm:$0xff]
        %v248 = vld [vmem:[%s222 + $0x98] sm:$0xff]
        %v249 = vld [vmem:[%s222 + $0xa0] sm:$0xff]
        %v250 = vld [vmem:[%s222 + $0xa8] sm:$0xff]
        %v251 = vld [vmem:[%s222 + $0xb0] sm:$0xff]
        %v252 = vld [vmem:[%s222 + $0xb8] sm:$0xff]
        %v253 = vld [vmem:[%s222 + $0xc0] sm:$0xff]
        %v254 = vld [vmem:[%s222 + $0xc8] sm:$0xff]
        %v255 = vld [vmem:[%s222 + $0xd0] sm:$0xff]
        %v256 = vld [vmem:[%s222 + $0xd8] sm:$0xff]
        %v257 = vld [vmem:[%s222 + $0xe0] sm:$0xff]
        %v258 = vld [vmem:[%s222 + $0xe8] sm:$0xff]
        %v259 = vld [vmem:[%s222 + $0xf0] sm:$0xff]
        %v260 = vld [vmem:[%s222 + $0xf8] sm:$0xff]
        %v261 = vlaneseq
        %v262 = vshrl.u32 %v261, 7
        %v263 = vsub.s32 0, %v262
        %v264 = vrot.slane %v224, %v263
        %v265 = vmul.f32 %v229, %v264
        %v266 = vmul.f32 %v230, %v264
        %v267 = vmul.f32 %v231, %v264
        %v268 = vmul.f32 %v232, %v264
        %v269 = vmul.f32 %v233, %v264
        %v270 = vmul.f32 %v234, %v264
        %v271 = vmul.f32 %v235, %v264
        %v272 = vmul.f32 %v236, %v264
        %v273 = vmul.f32 %v237, %v264
        %v274 = vmul.f32 %v238, %v264
        %v275 = vmul.f32 %v239, %v264
        %v276 = vmul.f32 %v240, %v264
        %v277 = vmul.f32 %v241, %v264
        %v278 = vmul.f32 %v242, %v264
        %v279 = vmul.f32 %v243, %v264
        %v280 = vmul.f32 %v244, %v264
        %v281 = vmul.f32 %v245, %v264
        %v282 = vmul.f32 %v246, %v264
        %v283 = vmul.f32 %v247, %v264
        %v284 = vmul.f32 %v248, %v264
        %v285 = vmul.f32 %v249, %v264
        %v286 = vmul.f32 %v250, %v264
        %v287 = vmul.f32 %v251, %v264
        %v288 = vmul.f32 %v252, %v264
        %v289 = vmul.f32 %v253, %v264
        %v290 = vmul.f32 %v254, %v264
        %v291 = vmul.f32 %v255, %v264
        %v292 = vmul.f32 %v256, %v264
        %v293 = vmul.f32 %v257, %v264
        %v294 = vmul.f32 %v258, %v264
        %v295 = vmul.f32 %v259, %v264
        %v296 = vmul.f32 %v260, %v264
        %v297 = vlaneseq
        %v298 = vshrl.u32 %v297, 7
        %v299 = vsub.s32 0, %v298
        %v300 = vrot.slane %v225, %v299
        %v301 = vadd.f32 %v265, %v300
        %v302 = vadd.f32 %v266, %v300
        %v303 = vadd.f32 %v267, %v300
        %v304 = vadd.f32 %v268, %v300
        %v305 = vadd.f32 %v269, %v300
        %v306 = vadd.f32 %v270, %v300
        %v307 = vadd.f32 %v271, %v300
        %v308 = vadd.f32 %v272, %v300
        %v309 = vadd.f32 %v273, %v300
        %v310 = vadd.f32 %v274, %v300
        %v311 = vadd.f32 %v275, %v300
        %v312 = vadd.f32 %v276, %v300
        %v313 = vadd.f32 %v277, %v300
        %v314 = vadd.f32 %v278, %v300
        %v315 = vadd.f32 %v279, %v300
        %v316 = vadd.f32 %v280, %v300
        %v317 = vadd.f32 %v281, %v300
        %v318 = vadd.f32 %v282, %v300
        %v319 = vadd.f32 %v283, %v300
        %v320 = vadd.f32 %v284, %v300
        %v321 = vadd.f32 %v285, %v300
        %v322 = vadd.f32 %v286, %v300
        %v323 = vadd.f32 %v287, %v300
        %v324 = vadd.f32 %v288, %v300
        %v325 = vadd.f32 %v289, %v300
        %v326 = vadd.f32 %v290, %v300
        %v327 = vadd.f32 %v291, %v300
        %v328 = vadd.f32 %v292, %v300
        %v329 = vadd.f32 %v293, %v300
        %v330 = vadd.f32 %v294, %v300
        %v331 = vadd.f32 %v295, %v300
        %v332 = vadd.f32 %v296, %v300
        %v333 = vmax.f32 %v301, 0.0
        %v334 = vmax.f32 %v302, 0.0
        %v335 = vmax.f32 %v303, 0.0
        %v336 = vmax.f32 %v304, 0.0
        %v337 = vmax.f32 %v305, 0.0
        %v338 = vmax.f32 %v306, 0.0
        %v339 = vmax.f32 %v307, 0.0
        %v340 = vmax.f32 %v308, 0.0
        %v341 = vmax.f32 %v309, 0.0
        %v342 = vmax.f32 %v310, 0.0
        %v343 = vmax.f32 %v311, 0.0
        %v344 = vmax.f32 %v312, 0.0
        %v345 = vmax.f32 %v313, 0.0
        %v346 = vmax.f32 %v314, 0.0
        %v347 = vmax.f32 %v315, 0.0
        %v348 = vmax.f32 %v316, 0.0
        %v349 = vmax.f32 %v317, 0.0
        %v350 = vmax.f32 %v318, 0.0
        %v351 = vmax.f32 %v319, 0.0
        %v352 = vmax.f32 %v320, 0.0
        %v353 = vmax.f32 %v321, 0.0
        %v354 = vmax.f32 %v322, 0.0
        %v355 = vmax.f32 %v323, 0.0
        %v356 = vmax.f32 %v324, 0.0
        %v357 = vmax.f32 %v325, 0.0
        %v358 = vmax.f32 %v326, 0.0
        %v359 = vmax.f32 %v327, 0.0
        %v360 = vmax.f32 %v328, 0.0
        %v361 = vmax.f32 %v329, 0.0
        %v362 = vmax.f32 %v330, 0.0
        %v363 = vmax.f32 %v331, 0.0
        %v364 = vmax.f32 %v332, 0.0
        %v365 = vpack.c.bf16 %v334, %v333
        %v366 = vpack.c.bf16 %v336, %v335
        %v367 = vpack.c.bf16 %v338, %v337
        %v368 = vpack.c.bf16 %v340, %v339
        %v369 = vpack.c.bf16 %v342, %v341
        %v370 = vpack.c.bf16 %v344, %v343
        %v371 = vpack.c.bf16 %v346, %v345
        %v372 = vpack.c.bf16 %v348, %v347
        %v373 = vpack.c.bf16 %v350, %v349
        %v374 = vpack.c.bf16 %v352, %v351
        %v375 = vpack.c.bf16 %v354, %v353
        %v376 = vpack.c.bf16 %v356, %v355
        %v377 = vpack.c.bf16 %v358, %v357
        %v378 = vpack.c.bf16 %v360, %v359
        %v379 = vpack.c.bf16 %v362, %v361
        %v380 = vpack.c.bf16 %v364, %v363
        %v381 = vld [vmem:[%s2] sm:$0x3]
        %vm382 = vcmask 31744
        %v384 = vsel %vm382, %v365, 0
        %v387 = vsel %vm382, %v366, 0
        %v390 = vsel %vm382, %v367, 0
        %v393 = vsel %vm382, %v368, 0
        %v396 = vsel %vm382, %v369, 0
        %v399 = vsel %vm382, %v370, 0
        %v402 = vsel %vm382, %v371, 0
        %v405 = vsel %vm382, %v372, 0
        %v408 = vsel %vm382, %v373, 0
        %v411 = vsel %vm382, %v374, 0
        %v414 = vsel %vm382, %v375, 0
        %v417 = vsel %vm382, %v376, 0
        %v420 = vsel %vm382, %v377, 0
        %v423 = vsel %vm382, %v378, 0
        %v426 = vsel %vm382, %v379, 0
        %v429 = vsel %vm382, %v380, 0
        %vm431 = vcmask 1041408
        %v433 = vsel %vm431, %v381, 0
        %435 = vmatprep.subr.bf16.mxu0 0
        %436 = vmatpush1.bf16.msra.mxu0 %v433
        %437 = vmatprep.subr.bf16.mxu0 0
        %438 = vmatpush1.bf16.msra.mxu0 0
        %439 = vmatprep.subr.bf16.mxu0 0
        %440 = vmatpush1.bf16.msra.mxu0 0
        %441 = vmatprep.subr.bf16.mxu0 0
        %442 = vmatpush1.bf16.msra.mxu0 0
        %443 = vmatprep.subr.bf16.mxu0 0
        %444 = vmatpush1.bf16.msra.mxu0 0
        %445 = vmatprep.subr.bf16.mxu0 0
        %446 = vmatpush1.bf16.msra.mxu0 0
        %447 = vmatprep.subr.bf16.mxu0 0
        %448 = vmatpush1.bf16.msra.mxu0 0
        %449 = vmatprep.subr.bf16.mxu0 0
        %450 = vmatpush1.bf16.msra.mxu0 0
        %451 = vmatprep.subr.bf16.mxu0 0
        %452 = vmatpush1.bf16.msra.mxu0 0
        %453 = vmatprep.subr.bf16.mxu0 0
        %454 = vmatpush1.bf16.msra.mxu0 0
        %455 = vmatprep.subr.bf16.mxu0 0
        %456 = vmatpush1.bf16.msra.mxu0 0
        %457 = vmatprep.subr.bf16.mxu0 0
        %458 = vmatpush1.bf16.msra.mxu0 0
        %459 = vmatprep.subr.bf16.mxu0 0
        %460 = vmatpush1.bf16.msra.mxu0 0
        %461 = vmatprep.subr.bf16.mxu0 0
        %462 = vmatpush1.bf16.msra.mxu0 0
        %463 = vmatprep.subr.bf16.mxu0 0
        %464 = vmatpush1.bf16.msra.mxu0 0
        %465 = vmatprep.subr.bf16.mxu0 0
        %466 = vmatpush1.bf16.msra.mxu0 0
        %467 = vmatprep.mubr.bf16.mxu0 0
        %468 = vmatmul.mubr.bf16.gmra.mrb[0].mxu0 %v384
        %v469 = vpop.f32.mrb[0].mxu0
        %v470 = vadd.f32 0.0, %v469
        %v471 = vpop.f32.mrb[0].mxu0
        %v472 = vpop.f32.mrb[0].mxu0
        %v473 = vadd.f32 0.0, %v472
        %v474 = vpop.f32.mrb[0].mxu0
        %475 = vmatprep.mubr.bf16.mxu0 0
        %476 = vmatmul.mubr.bf16.gmra.mrb[0].mxu0 %v387
        %v477 = vpop.f32.mrb[0].mxu0
        %v478 = vadd.f32 0.0, %v477
        %v479 = vpop.f32.mrb[0].mxu0
        %v480 = vpop.f32.mrb[0].mxu0
        %v481 = vadd.f32 0.0, %v480
        %v482 = vpop.f32.mrb[0].mxu0
        %483 = vmatprep.mubr.bf16.mxu0 0
        %484 = vmatmul.mubr.bf16.gmra.mrb[0].mxu0 %v390
        %v485 = vpop.f32.mrb[0].mxu0
        %v486 = vadd.f32 0.0, %v485
        %v487 = vpop.f32.mrb[0].mxu0
        %v488 = vpop.f32.mrb[0].mxu0
        %v489 = vadd.f32 0.0, %v488
        %v490 = vpop.f32.mrb[0].mxu0
        %491 = vmatprep.mubr.bf16.mxu0 0
        %492 = vmatmul.mubr.bf16.gmra.mrb[0].mxu0 %v393
        %v493 = vpop.f32.mrb[0].mxu0
        %v494 = vadd.f32 0.0, %v493
        %v495 = vpop.f32.mrb[0].mxu0
        %v496 = vpop.f32.mrb[0].mxu0
        %v497 = vadd.f32 0.0, %v496
        %v498 = vpop.f32.mrb[0].mxu0
        %499 = vmatprep.mubr.bf16.mxu0 0
        %500 = vmatmul.mubr.bf16.gmra.mrb[0].mxu0 %v396
        %v501 = vpop.f32.mrb[0].mxu0
        %v502 = vadd.f32 0.0, %v501
        %v503 = vpop.f32.mrb[0].mxu0
        %v504 = vpop.f32.mrb[0].mxu0
        %v505 = vadd.f32 0.0, %v504
        %v506 = vpop.f32.mrb[0].mxu0
        %507 = vmatprep.mubr.bf16.mxu0 0
        %508 = vmatmul.mubr.bf16.gmra.mrb[0].mxu0 %v399
        %v509 = vpop.f32.mrb[0].mxu0
        %v510 = vadd.f32 0.0, %v509
        %v511 = vpop.f32.mrb[0].mxu0
        %v512 = vpop.f32.mrb[0].mxu0
        %v513 = vadd.f32 0.0, %v512
        %v514 = vpop.f32.mrb[0].mxu0
        %515 = vmatprep.mubr.bf16.mxu0 0
        %516 = vmatmul.mubr.bf16.gmra.mrb[0].mxu0 %v402
        %v517 = vpop.f32.mrb[0].mxu0
        %v518 = vadd.f32 0.0, %v517
        %v519 = vpop.f32.mrb[0].mxu0
        %v520 = vpop.f32.mrb[0].mxu0
        %v521 = vadd.f32 0.0, %v520
        %v522 = vpop.f32.mrb[0].mxu0
        %523 = vmatprep.mubr.bf16.mxu0 0
        %524 = vmatmul.mubr.bf16.gmra.mrb[0].mxu0 %v405
        %v525 = vpop.f32.mrb[0].mxu0
        %v526 = vadd.f32 0.0, %v525
        %v527 = vpop.f32.mrb[0].mxu0
        %v528 = vpop.f32.mrb[0].mxu0
        %v529 = vadd.f32 0.0, %v528
        %v530 = vpop.f32.mrb[0].mxu0
        %531 = vmatprep.mubr.bf16.mxu0 0
        %532 = vmatmul.mubr.bf16.gmra.mrb[0].mxu0 %v408
        %v533 = vpop.f32.mrb[0].mxu0
        %v534 = vadd.f32 0.0, %v533
        %v535 = vpop.f32.mrb[0].mxu0
        %v536 = vpop.f32.mrb[0].mxu0
        %v537 = vadd.f32 0.0, %v536
        %v538 = vpop.f32.mrb[0].mxu0
        %539 = vmatprep.mubr.bf16.mxu0 0
        %540 = vmatmul.mubr.bf16.gmra.mrb[0].mxu0 %v411
        %v541 = vpop.f32.mrb[0].mxu0
        %v542 = vadd.f32 0.0, %v541
        %v543 = vpop.f32.mrb[0].mxu0
        %v544 = vpop.f32.mrb[0].mxu0
        %v545 = vadd.f32 0.0, %v544
        %v546 = vpop.f32.mrb[0].mxu0
        %547 = vmatprep.mubr.bf16.mxu0 0
        %548 = vmatmul.mubr.bf16.gmra.mrb[0].mxu0 %v414
        %v549 = vpop.f32.mrb[0].mxu0
        %v550 = vadd.f32 0.0, %v549
        %v551 = vpop.f32.mrb[0].mxu0
        %v552 = vpop.f32.mrb[0].mxu0
        %v553 = vadd.f32 0.0, %v552
        %v554 = vpop.f32.mrb[0].mxu0
        %555 = vmatprep.mubr.bf16.mxu0 0
        %556 = vmatmul.mubr.bf16.gmra.mrb[0].mxu0 %v417
        %v557 = vpop.f32.mrb[0].mxu0
        %v558 = vadd.f32 0.0, %v557
        %v559 = vpop.f32.mrb[0].mxu0
        %v560 = vpop.f32.mrb[0].mxu0
        %v561 = vadd.f32 0.0, %v560
        %v562 = vpop.f32.mrb[0].mxu0
        %563 = vmatprep.mubr.bf16.mxu0 0
        %564 = vmatmul.mubr.bf16.gmra.mrb[0].mxu0 %v420
        %v565 = vpop.f32.mrb[0].mxu0
        %v566 = vadd.f32 0.0, %v565
        %v567 = vpop.f32.mrb[0].mxu0
        %v568 = vpop.f32.mrb[0].mxu0
        %v569 = vadd.f32 0.0, %v568
        %v570 = vpop.f32.mrb[0].mxu0
        %571 = vmatprep.mubr.bf16.mxu0 0
        %572 = vmatmul.mubr.bf16.gmra.mrb[0].mxu0 %v423
        %v573 = vpop.f32.mrb[0].mxu0
        %v574 = vadd.f32 0.0, %v573
        %v575 = vpop.f32.mrb[0].mxu0
        %v576 = vpop.f32.mrb[0].mxu0
        %v577 = vadd.f32 0.0, %v576
        %v578 = vpop.f32.mrb[0].mxu0
        %579 = vmatprep.mubr.bf16.mxu0 0
        %580 = vmatmul.mubr.bf16.gmra.mrb[0].mxu0 %v426
        %v581 = vpop.f32.mrb[0].mxu0
        %v582 = vadd.f32 0.0, %v581
        %v583 = vpop.f32.mrb[0].mxu0
        %v584 = vpop.f32.mrb[0].mxu0
        %v585 = vadd.f32 0.0, %v584
        %v586 = vpop.f32.mrb[0].mxu0
        %587 = vmatprep.mubr.bf16.mxu0 0
        %588 = vmatmul.mubr.bf16.gmra.mrb[0].mxu0 %v429
        %v589 = vpop.f32.mrb[0].mxu0
        %v590 = vadd.f32 0.0, %v589
        %v591 = vpop.f32.mrb[0].mxu0
        %v592 = vpop.f32.mrb[0].mxu0
        %v593 = vadd.f32 0.0, %v592
        %v594 = vpop.f32.mrb[0].mxu0
        %595 = vdwg.mxu0
        %v596 = vlaneseq
        %v597 = vshrl.u32 %v596, 7
        %v598 = vsub.s32 0, %v597
        %v599 = vrot.slane %v226, %v598
        %v600 = vadd.f32 %v470, %v599
        %v601 = vadd.f32 %v473, %v599
        %v602 = vadd.f32 %v478, %v599
        %v603 = vadd.f32 %v481, %v599
        %v604 = vadd.f32 %v486, %v599
        %v605 = vadd.f32 %v489, %v599
        %v606 = vadd.f32 %v494, %v599
        %v607 = vadd.f32 %v497, %v599
        %v608 = vadd.f32 %v502, %v599
        %v609 = vadd.f32 %v505, %v599
        %v610 = vadd.f32 %v510, %v599
        %v611 = vadd.f32 %v513, %v599
        %v612 = vadd.f32 %v518, %v599
        %v613 = vadd.f32 %v521, %v599
        %v614 = vadd.f32 %v526, %v599
        %v615 = vadd.f32 %v529, %v599
        %v616 = vadd.f32 %v534, %v599
        %v617 = vadd.f32 %v537, %v599
        %v618 = vadd.f32 %v542, %v599
        %v619 = vadd.f32 %v545, %v599
        %v620 = vadd.f32 %v550, %v599
        %v621 = vadd.f32 %v553, %v599
        %v622 = vadd.f32 %v558, %v599
        %v623 = vadd.f32 %v561, %v599
        %v624 = vadd.f32 %v566, %v599
        %v625 = vadd.f32 %v569, %v599
        %v626 = vadd.f32 %v574, %v599
        %v627 = vadd.f32 %v577, %v599
        %v628 = vadd.f32 %v582, %v599
        %v629 = vadd.f32 %v585, %v599
        %v630 = vadd.f32 %v590, %v599
        %v631 = vadd.f32 %v593, %v599
        %v632 = vmax.f32 %v600, 0.0
        %v633 = vmax.f32 %v601, 0.0
        %v634 = vmax.f32 %v602, 0.0
        %v635 = vmax.f32 %v603, 0.0
        %v636 = vmax.f32 %v604, 0.0
        %v637 = vmax.f32 %v605, 0.0
        %v638 = vmax.f32 %v606, 0.0
        %v639 = vmax.f32 %v607, 0.0
        %v640 = vmax.f32 %v608, 0.0
        %v641 = vmax.f32 %v609, 0.0
        %v642 = vmax.f32 %v610, 0.0
        %v643 = vmax.f32 %v611, 0.0
        %v644 = vmax.f32 %v612, 0.0
        %v645 = vmax.f32 %v613, 0.0
        %v646 = vmax.f32 %v614, 0.0
        %v647 = vmax.f32 %v615, 0.0
        %v648 = vmax.f32 %v616, 0.0
        %v649 = vmax.f32 %v617, 0.0
        %v650 = vmax.f32 %v618, 0.0
        %v651 = vmax.f32 %v619, 0.0
        %v652 = vmax.f32 %v620, 0.0
        %v653 = vmax.f32 %v621, 0.0
        %v654 = vmax.f32 %v622, 0.0
        %v655 = vmax.f32 %v623, 0.0
        %v656 = vmax.f32 %v624, 0.0
        %v657 = vmax.f32 %v625, 0.0
        %v658 = vmax.f32 %v626, 0.0
        %v659 = vmax.f32 %v627, 0.0
        %v660 = vmax.f32 %v628, 0.0
        %v661 = vmax.f32 %v629, 0.0
        %v662 = vmax.f32 %v630, 0.0
        %v663 = vmax.f32 %v631, 0.0
        %v680 = vrot.slane %v633, 7
        %v681 = vrot.slane %v635, 7
        %v682 = vrot.slane %v637, 7
        %v683 = vrot.slane %v639, 7
        %v684 = vrot.slane %v641, 7
        %v685 = vrot.slane %v643, 7
        %v686 = vrot.slane %v645, 7
        %v687 = vrot.slane %v647, 7
        %v688 = vrot.slane %v649, 7
        %v689 = vrot.slane %v651, 7
        %v690 = vrot.slane %v653, 7
        %v691 = vrot.slane %v655, 7
        %v692 = vrot.slane %v657, 7
        %v693 = vrot.slane %v659, 7
        %v694 = vrot.slane %v661, 7
        %v695 = vrot.slane %v663, 7
        %vm728 = vcmask 1040384
        %v729 = vrot.slane %v632, 7
        %v730 = vsel %vm728, %v729, %v680
        %v731 = vrot.slane %v634, 7
        %v732 = vsel %vm728, %v731, %v681
        %v733 = vrot.slane %v636, 7
        %v734 = vsel %vm728, %v733, %v682
        %v735 = vrot.slane %v638, 7
        %v736 = vsel %vm728, %v735, %v683
        %v737 = vrot.slane %v640, 7
        %v738 = vsel %vm728, %v737, %v684
        %v739 = vrot.slane %v642, 7
        %v740 = vsel %vm728, %v739, %v685
        %v741 = vrot.slane %v644, 7
        %v742 = vsel %vm728, %v741, %v686
        %v743 = vrot.slane %v646, 7
        %v744 = vsel %vm728, %v743, %v687
        %v745 = vrot.slane %v648, 7
        %v746 = vsel %vm728, %v745, %v688
        %v747 = vrot.slane %v650, 7
        %v748 = vsel %vm728, %v747, %v689
        %v749 = vrot.slane %v652, 7
        %v750 = vsel %vm728, %v749, %v690
        %v751 = vrot.slane %v654, 7
        %v752 = vsel %vm728, %v751, %v691
        %v753 = vrot.slane %v656, 7
        %v754 = vsel %vm728, %v753, %v692
        %v755 = vrot.slane %v658, 7
        %v756 = vsel %vm728, %v755, %v693
        %v757 = vrot.slane %v660, 7
        %v758 = vsel %vm728, %v757, %v694
        %v759 = vrot.slane %v662, 7
        %v760 = vsel %vm728, %v759, %v695
        %v793 = vsel %vm728, %v680, %v729
        %v794 = vsel %vm728, %v681, %v731
        %v795 = vsel %vm728, %v682, %v733
        %v796 = vsel %vm728, %v683, %v735
        %v797 = vsel %vm728, %v684, %v737
        %v798 = vsel %vm728, %v685, %v739
        %v799 = vsel %vm728, %v686, %v741
        %v800 = vsel %vm728, %v687, %v743
        %v801 = vsel %vm728, %v688, %v745
        %v802 = vsel %vm728, %v689, %v747
        %v803 = vsel %vm728, %v690, %v749
        %v804 = vsel %vm728, %v691, %v751
        %v805 = vsel %vm728, %v692, %v753
        %v806 = vsel %vm728, %v693, %v755
        %v807 = vsel %vm728, %v694, %v757
        %v808 = vsel %vm728, %v695, %v759
        %v809 = vpack.c.bf16 %v730, %v793
        %v810 = vpack.c.bf16 %v732, %v794
        %v811 = vpack.c.bf16 %v734, %v795
        %v812 = vpack.c.bf16 %v736, %v796
        %v813 = vpack.c.bf16 %v738, %v797
        %v814 = vpack.c.bf16 %v740, %v798
        %v815 = vpack.c.bf16 %v742, %v799
        %v816 = vpack.c.bf16 %v744, %v800
        %v817 = vpack.c.bf16 %v746, %v801
        %v818 = vpack.c.bf16 %v748, %v802
        %v819 = vpack.c.bf16 %v750, %v803
        %v820 = vpack.c.bf16 %v752, %v804
        %v821 = vpack.c.bf16 %v754, %v805
        %v822 = vpack.c.bf16 %v756, %v806
        %v823 = vpack.c.bf16 %v758, %v807
        %v824 = vpack.c.bf16 %v760, %v808
        %v825 = vpack.c.bf16 %v633, %v632
        %v826 = vpack.c.bf16 %v635, %v634
        %v827 = vpack.c.bf16 %v637, %v636
        %v828 = vpack.c.bf16 %v639, %v638
        %v829 = vpack.c.bf16 %v641, %v640
        %v830 = vpack.c.bf16 %v643, %v642
        %v831 = vpack.c.bf16 %v645, %v644
        %v832 = vpack.c.bf16 %v647, %v646
        %v833 = vpack.c.bf16 %v649, %v648
        %v834 = vpack.c.bf16 %v651, %v650
        %v835 = vpack.c.bf16 %v653, %v652
        %v836 = vpack.c.bf16 %v655, %v654
        %v837 = vpack.c.bf16 %v657, %v656
        %v838 = vpack.c.bf16 %v659, %v658
        %v839 = vpack.c.bf16 %v661, %v660
        %v840 = vpack.c.bf16 %v663, %v662
        %vm841 = vcmask 1046528
        %v842 = vrot.slane %v632, 1
        %v843 = vrot.slane %v633, 1
        %v844 = vsel %vm841, %v842, %v843
        %v845 = vrot.slane %v634, 1
        %v846 = vrot.slane %v635, 1
        %v847 = vsel %vm841, %v845, %v846
        %v848 = vrot.slane %v636, 1
        %v849 = vrot.slane %v637, 1
        %v850 = vsel %vm841, %v848, %v849
        %v851 = vrot.slane %v638, 1
        %v852 = vrot.slane %v639, 1
        %v853 = vsel %vm841, %v851, %v852
        %v854 = vrot.slane %v640, 1
        %v855 = vrot.slane %v641, 1
        %v856 = vsel %vm841, %v854, %v855
        %v857 = vrot.slane %v642, 1
        %v858 = vrot.slane %v643, 1
        %v859 = vsel %vm841, %v857, %v858
        %v860 = vrot.slane %v644, 1
        %v861 = vrot.slane %v645, 1
        %v862 = vsel %vm841, %v860, %v861
        %v863 = vrot.slane %v646, 1
        %v864 = vrot.slane %v647, 1
        %v865 = vsel %vm841, %v863, %v864
        %v866 = vrot.slane %v648, 1
        %v867 = vrot.slane %v649, 1
        %v868 = vsel %vm841, %v866, %v867
        %v869 = vrot.slane %v650, 1
        %v870 = vrot.slane %v651, 1
        %v871 = vsel %vm841, %v869, %v870
        %v872 = vrot.slane %v652, 1
        %v873 = vrot.slane %v653, 1
        %v874 = vsel %vm841, %v872, %v873
        %v875 = vrot.slane %v654, 1
        %v876 = vrot.slane %v655, 1
        %v877 = vsel %vm841, %v875, %v876
        %v878 = vrot.slane %v656, 1
        %v879 = vrot.slane %v657, 1
        %v880 = vsel %vm841, %v878, %v879
        %v881 = vrot.slane %v658, 1
        %v882 = vrot.slane %v659, 1
        %v883 = vsel %vm841, %v881, %v882
        %v884 = vrot.slane %v660, 1
        %v885 = vrot.slane %v661, 1
        %v886 = vsel %vm841, %v884, %v885
        %v887 = vrot.slane %v662, 1
        %v888 = vrot.slane %v663, 1
        %v889 = vsel %vm841, %v887, %v888
        %v938 = vsel %vm841, %v843, %v842
        %v939 = vsel %vm841, %v846, %v845
        %v940 = vsel %vm841, %v849, %v848
        %v941 = vsel %vm841, %v852, %v851
        %v942 = vsel %vm841, %v855, %v854
        %v943 = vsel %vm841, %v858, %v857
        %v944 = vsel %vm841, %v861, %v860
        %v945 = vsel %vm841, %v864, %v863
        %v946 = vsel %vm841, %v867, %v866
        %v947 = vsel %vm841, %v870, %v869
        %v948 = vsel %vm841, %v873, %v872
        %v949 = vsel %vm841, %v876, %v875
        %v950 = vsel %vm841, %v879, %v878
        %v951 = vsel %vm841, %v882, %v881
        %v952 = vsel %vm841, %v885, %v884
        %v953 = vsel %vm841, %v888, %v887
        %v954 = vpack.c.bf16 %v938, %v844
        %v955 = vpack.c.bf16 %v939, %v847
        %v956 = vpack.c.bf16 %v940, %v850
        %v957 = vpack.c.bf16 %v941, %v853
        %v958 = vpack.c.bf16 %v942, %v856
        %v959 = vpack.c.bf16 %v943, %v859
        %v960 = vpack.c.bf16 %v944, %v862
        %v961 = vpack.c.bf16 %v945, %v865
        %v962 = vpack.c.bf16 %v946, %v868
        %v963 = vpack.c.bf16 %v947, %v871
        %v964 = vpack.c.bf16 %v948, %v874
        %v965 = vpack.c.bf16 %v949, %v877
        %v966 = vpack.c.bf16 %v950, %v880
        %v967 = vpack.c.bf16 %v951, %v883
        %v968 = vpack.c.bf16 %v952, %v886
        %v969 = vpack.c.bf16 %v953, %v889
        %986 = vrot.lane.b32.xlu0 %v825, 8
        %v987 = vpop.permute.xlu0 %986
        %988 = vrot.lane.b32.xlu0 %v826, 8
        %v989 = vpop.permute.xlu0 %988
        %990 = vrot.lane.b32.xlu0 %v827, 8
        %v991 = vpop.permute.xlu0 %990
        %992 = vrot.lane.b32.xlu0 %v828, 8
        %v993 = vpop.permute.xlu0 %992
        %994 = vrot.lane.b32.xlu0 %v829, 8
        %v995 = vpop.permute.xlu0 %994
        %996 = vrot.lane.b32.xlu0 %v830, 8
        %v997 = vpop.permute.xlu0 %996
        %998 = vrot.lane.b32.xlu0 %v831, 8
        %v999 = vpop.permute.xlu0 %998
        %1000 = vrot.lane.b32.xlu0 %v832, 8
        %v1001 = vpop.permute.xlu0 %1000
        %1002 = vrot.lane.b32.xlu0 %v833, 8
        %v1003 = vpop.permute.xlu0 %1002
        %1004 = vrot.lane.b32.xlu0 %v834, 8
        %v1005 = vpop.permute.xlu0 %1004
        %1006 = vrot.lane.b32.xlu0 %v835, 8
        %v1007 = vpop.permute.xlu0 %1006
        %1008 = vrot.lane.b32.xlu0 %v836, 8
        %v1009 = vpop.permute.xlu0 %1008
        %1010 = vrot.lane.b32.xlu0 %v837, 8
        %v1011 = vpop.permute.xlu0 %1010
        %1012 = vrot.lane.b32.xlu0 %v838, 8
        %v1013 = vpop.permute.xlu0 %1012
        %1014 = vrot.lane.b32.xlu0 %v839, 8
        %v1015 = vpop.permute.xlu0 %1014
        %1016 = vrot.lane.b32.xlu0 %v840, 8
        %v1017 = vpop.permute.xlu0 %1016
        %1034 = vrot.lane.b32.xlu0 %v954, 16
        %v1035 = vpop.permute.xlu0 %1034
        %1036 = vrot.lane.b32.xlu0 %v955, 16
        %v1037 = vpop.permute.xlu0 %1036
        %1038 = vrot.lane.b32.xlu0 %v956, 16
        %v1039 = vpop.permute.xlu0 %1038
        %1040 = vrot.lane.b32.xlu0 %v957, 16
        %v1041 = vpop.permute.xlu0 %1040
        %1042 = vrot.lane.b32.xlu0 %v958, 16
        %v1043 = vpop.permute.xlu0 %1042
        %1044 = vrot.lane.b32.xlu0 %v959, 16
        %v1045 = vpop.permute.xlu0 %1044
        %1046 = vrot.lane.b32.xlu0 %v960, 16
        %v1047 = vpop.permute.xlu0 %1046
        %1048 = vrot.lane.b32.xlu0 %v961, 16
        %v1049 = vpop.permute.xlu0 %1048
        %1050 = vrot.lane.b32.xlu0 %v962, 16
        %v1051 = vpop.permute.xlu0 %1050
        %1052 = vrot.lane.b32.xlu0 %v963, 16
        %v1053 = vpop.permute.xlu0 %1052
        %1054 = vrot.lane.b32.xlu0 %v964, 16
        %v1055 = vpop.permute.xlu0 %1054
        %1056 = vrot.lane.b32.xlu0 %v965, 16
        %v1057 = vpop.permute.xlu0 %1056
        %1058 = vrot.lane.b32.xlu0 %v966, 16
        %v1059 = vpop.permute.xlu0 %1058
        %1060 = vrot.lane.b32.xlu0 %v967, 16
        %v1061 = vpop.permute.xlu0 %1060
        %1062 = vrot.lane.b32.xlu0 %v968, 16
        %v1063 = vpop.permute.xlu0 %1062
        %1064 = vrot.lane.b32.xlu0 %v969, 16
        %v1065 = vpop.permute.xlu0 %1064
        %vm1066 = vcmask 64512
        %v1069 = vsel %vm1066, %v809, %v987
        %v1072 = vsel %vm1066, %v810, %v989
        %v1075 = vsel %vm1066, %v811, %v991
        %v1078 = vsel %vm1066, %v812, %v993
        %v1081 = vsel %vm1066, %v813, %v995
        %v1084 = vsel %vm1066, %v814, %v997
        %v1087 = vsel %vm1066, %v815, %v999
        %v1090 = vsel %vm1066, %v816, %v1001
        %v1093 = vsel %vm1066, %v817, %v1003
        %v1096 = vsel %vm1066, %v818, %v1005
        %v1099 = vsel %vm1066, %v819, %v1007
        %v1102 = vsel %vm1066, %v820, %v1009
        %v1105 = vsel %vm1066, %v821, %v1011
        %v1108 = vsel %vm1066, %v822, %v1013
        %v1111 = vsel %vm1066, %v823, %v1015
        %v1114 = vsel %vm1066, %v824, %v1017
        %vm1115 = vcmask 130048
        %v1117 = vsel %vm1115, %v1069, %v1035
        %v1119 = vsel %vm1115, %v1072, %v1037
        %v1121 = vsel %vm1115, %v1075, %v1039
        %v1123 = vsel %vm1115, %v1078, %v1041
        %v1125 = vsel %vm1115, %v1081, %v1043
        %v1127 = vsel %vm1115, %v1084, %v1045
        %v1129 = vsel %vm1115, %v1087, %v1047
        %v1131 = vsel %vm1115, %v1090, %v1049
        %v1133 = vsel %vm1115, %v1093, %v1051
        %v1135 = vsel %vm1115, %v1096, %v1053
        %v1137 = vsel %vm1115, %v1099, %v1055
        %v1139 = vsel %vm1115, %v1102, %v1057
        %v1141 = vsel %vm1115, %v1105, %v1059
        %v1143 = vsel %vm1115, %v1108, %v1061
        %v1145 = vsel %vm1115, %v1111, %v1063
        %v1147 = vsel %vm1115, %v1114, %v1065
        %v1148 = vld [vmem:[%s3] sm:$0xf]
        %v1149 = vld [vmem:[%s3 + $0x4] sm:$0xf]
        %v1150 = vld [vmem:[%s3 + $0x8] sm:$0xf]
        %v1154 = vunpack.c.l.b16 %v1148
        %v1155 = vunpack.c.l.b16 %v1149
        %v1156 = vunpack.c.l.b16 %v1150
        %v1157 = vpack.c.b16 %v1155, %v1154
        %v1158 = vpack.c.b16 %v1156, %v1156
        %vm1160 = vcmask 195584
        %v1161 = vsel %vm1160, %v1117, 0
        %v1163 = vsel %vm1160, %v1119, 0
        %v1165 = vsel %vm1160, %v1121, 0
        %v1167 = vsel %vm1160, %v1123, 0
        %v1169 = vsel %vm1160, %v1125, 0
        %v1171 = vsel %vm1160, %v1127, 0
        %v1173 = vsel %vm1160, %v1129, 0
        %v1175 = vsel %vm1160, %v1131, 0
        %v1177 = vsel %vm1160, %v1133, 0
        %v1179 = vsel %vm1160, %v1135, 0
        %v1181 = vsel %vm1160, %v1137, 0
        %v1183 = vsel %vm1160, %v1139, 0
        %v1185 = vsel %vm1160, %v1141, 0
        %v1187 = vsel %vm1160, %v1143, 0
        %v1189 = vsel %vm1160, %v1145, 0
        %v1191 = vsel %vm1160, %v1147, 0
        %vm1193 = vcmask 1043456
        %v1195 = vsel %vm1193, %v1158, 0
        %1197 = vmatprep.subr.bf16.mxu0 0
        %1198 = vmatpush1.bf16.msra.mxu0 %v1157
        %1199 = vmatprep.subr.bf16.mxu0 0
        %1200 = vmatpush1.bf16.msra.mxu0 %v1195
        %1201 = vmatprep.subr.bf16.mxu0 0
        %1202 = vmatpush1.bf16.msra.mxu0 0
        %1203 = vmatprep.subr.bf16.mxu0 0
        %1204 = vmatpush1.bf16.msra.mxu0 0
        %1205 = vmatprep.subr.bf16.mxu0 0
        %1206 = vmatpush1.bf16.msra.mxu0 0
        %1207 = vmatprep.subr.bf16.mxu0 0
        %1208 = vmatpush1.bf16.msra.mxu0 0
        %1209 = vmatprep.subr.bf16.mxu0 0
        %1210 = vmatpush1.bf16.msra.mxu0 0
        %1211 = vmatprep.subr.bf16.mxu0 0
        %1212 = vmatpush1.bf16.msra.mxu0 0
        %1213 = vmatprep.subr.bf16.mxu0 0
        %1214 = vmatpush1.bf16.msra.mxu0 0
        %1215 = vmatprep.subr.bf16.mxu0 0
        %1216 = vmatpush1.bf16.msra.mxu0 0
        %1217 = vmatprep.subr.bf16.mxu0 0
        %1218 = vmatpush1.bf16.msra.mxu0 0
        %1219 = vmatprep.subr.bf16.mxu0 0
        %1220 = vmatpush1.bf16.msra.mxu0 0
        %1221 = vmatprep.subr.bf16.mxu0 0
        %1222 = vmatpush1.bf16.msra.mxu0 0
        %1223 = vmatprep.subr.bf16.mxu0 0
        %1224 = vmatpush1.bf16.msra.mxu0 0
        %1225 = vmatprep.subr.bf16.mxu0 0
        %1226 = vmatpush1.bf16.msra.mxu0 0
        %1227 = vmatprep.subr.bf16.mxu0 0
        %1228 = vmatpush1.bf16.msra.mxu0 0
        %1229 = vmatprep.mubr.bf16.mxu0 0
        %1230 = vmatmul.mubr.bf16.gmra.mrb[0].mxu0 %v1161
        %v1231 = vpop.f32.mrb[0].mxu0
        %v1232 = vadd.f32 0.0, %v1231
        %v1233 = vpop.f32.mrb[0].mxu0
        %v1234 = vpop.f32.mrb[0].mxu0
        %v1235 = vadd.f32 0.0, %v1234
        %v1236 = vpop.f32.mrb[0].mxu0
        %1237 = vmatprep.mubr.bf16.mxu0 0
        %1238 = vmatmul.mubr.bf16.gmra.mrb[0].mxu0 %v1163
        %v1239 = vpop.f32.mrb[0].mxu0
        %v1240 = vadd.f32 0.0, %v1239
        %v1241 = vpop.f32.mrb[0].mxu0
        %v1242 = vpop.f32.mrb[0].mxu0
        %v1243 = vadd.f32 0.0, %v1242
        %v1244 = vpop.f32.mrb[0].mxu0
        %1245 = vmatprep.mubr.bf16.mxu0 0
        %1246 = vmatmul.mubr.bf16.gmra.mrb[0].mxu0 %v1165
        %v1247 = vpop.f32.mrb[0].mxu0
        %v1248 = vadd.f32 0.0, %v1247
        %v1249 = vpop.f32.mrb[0].mxu0
        %v1250 = vpop.f32.mrb[0].mxu0
        %v1251 = vadd.f32 0.0, %v1250
        %v1252 = vpop.f32.mrb[0].mxu0
        %1253 = vmatprep.mubr.bf16.mxu0 0
        %1254 = vmatmul.mubr.bf16.gmra.mrb[0].mxu0 %v1167
        %v1255 = vpop.f32.mrb[0].mxu0
        %v1256 = vadd.f32 0.0, %v1255
        %v1257 = vpop.f32.mrb[0].mxu0
        %v1258 = vpop.f32.mrb[0].mxu0
        %v1259 = vadd.f32 0.0, %v1258
        %v1260 = vpop.f32.mrb[0].mxu0
        %1261 = vmatprep.mubr.bf16.mxu0 0
        %1262 = vmatmul.mubr.bf16.gmra.mrb[0].mxu0 %v1169
        %v1263 = vpop.f32.mrb[0].mxu0
        %v1264 = vadd.f32 0.0, %v1263
        %v1265 = vpop.f32.mrb[0].mxu0
        %v1266 = vpop.f32.mrb[0].mxu0
        %v1267 = vadd.f32 0.0, %v1266
        %v1268 = vpop.f32.mrb[0].mxu0
        %1269 = vmatprep.mubr.bf16.mxu0 0
        %1270 = vmatmul.mubr.bf16.gmra.mrb[0].mxu0 %v1171
        %v1271 = vpop.f32.mrb[0].mxu0
        %v1272 = vadd.f32 0.0, %v1271
        %v1273 = vpop.f32.mrb[0].mxu0
        %v1274 = vpop.f32.mrb[0].mxu0
        %v1275 = vadd.f32 0.0, %v1274
        %v1276 = vpop.f32.mrb[0].mxu0
        %1277 = vmatprep.mubr.bf16.mxu0 0
        %1278 = vmatmul.mubr.bf16.gmra.mrb[0].mxu0 %v1173
        %v1279 = vpop.f32.mrb[0].mxu0
        %v1280 = vadd.f32 0.0, %v1279
        %v1281 = vpop.f32.mrb[0].mxu0
        %v1282 = vpop.f32.mrb[0].mxu0
        %v1283 = vadd.f32 0.0, %v1282
        %v1284 = vpop.f32.mrb[0].mxu0
        %1285 = vmatprep.mubr.bf16.mxu0 0
        %1286 = vmatmul.mubr.bf16.gmra.mrb[0].mxu0 %v1175
        %v1287 = vpop.f32.mrb[0].mxu0
        %v1288 = vadd.f32 0.0, %v1287
        %v1289 = vpop.f32.mrb[0].mxu0
        %v1290 = vpop.f32.mrb[0].mxu0
        %v1291 = vadd.f32 0.0, %v1290
        %v1292 = vpop.f32.mrb[0].mxu0
        %1293 = vmatprep.mubr.bf16.mxu0 0
        %1294 = vmatmul.mubr.bf16.gmra.mrb[0].mxu0 %v1177
        %v1295 = vpop.f32.mrb[0].mxu0
        %v1296 = vadd.f32 0.0, %v1295
        %v1297 = vpop.f32.mrb[0].mxu0
        %v1298 = vpop.f32.mrb[0].mxu0
        %v1299 = vadd.f32 0.0, %v1298
        %v1300 = vpop.f32.mrb[0].mxu0
        %1301 = vmatprep.mubr.bf16.mxu0 0
        %1302 = vmatmul.mubr.bf16.gmra.mrb[0].mxu0 %v1179
        %v1303 = vpop.f32.mrb[0].mxu0
        %v1304 = vadd.f32 0.0, %v1303
        %v1305 = vpop.f32.mrb[0].mxu0
        %v1306 = vpop.f32.mrb[0].mxu0
        %v1307 = vadd.f32 0.0, %v1306
        %v1308 = vpop.f32.mrb[0].mxu0
        %1309 = vmatprep.mubr.bf16.mxu0 0
        %1310 = vmatmul.mubr.bf16.gmra.mrb[0].mxu0 %v1181
        %v1311 = vpop.f32.mrb[0].mxu0
        %v1312 = vadd.f32 0.0, %v1311
        %v1313 = vpop.f32.mrb[0].mxu0
        %v1314 = vpop.f32.mrb[0].mxu0
        %v1315 = vadd.f32 0.0, %v1314
        %v1316 = vpop.f32.mrb[0].mxu0
        %1317 = vmatprep.mubr.bf16.mxu0 0
        %1318 = vmatmul.mubr.bf16.gmra.mrb[0].mxu0 %v1183
        %v1319 = vpop.f32.mrb[0].mxu0
        %v1320 = vadd.f32 0.0, %v1319
        %v1321 = vpop.f32.mrb[0].mxu0
        %v1322 = vpop.f32.mrb[0].mxu0
        %v1323 = vadd.f32 0.0, %v1322
        %v1324 = vpop.f32.mrb[0].mxu0
        %1325 = vmatprep.mubr.bf16.mxu0 0
        %1326 = vmatmul.mubr.bf16.gmra.mrb[0].mxu0 %v1185
        %v1327 = vpop.f32.mrb[0].mxu0
        %v1328 = vadd.f32 0.0, %v1327
        %v1329 = vpop.f32.mrb[0].mxu0
        %v1330 = vpop.f32.mrb[0].mxu0
        %v1331 = vadd.f32 0.0, %v1330
        %v1332 = vpop.f32.mrb[0].mxu0
        %1333 = vmatprep.mubr.bf16.mxu0 0
        %1334 = vmatmul.mubr.bf16.gmra.mrb[0].mxu0 %v1187
        %v1335 = vpop.f32.mrb[0].mxu0
        %v1336 = vadd.f32 0.0, %v1335
        %v1337 = vpop.f32.mrb[0].mxu0
        %v1338 = vpop.f32.mrb[0].mxu0
        %v1339 = vadd.f32 0.0, %v1338
        %v1340 = vpop.f32.mrb[0].mxu0
        %1341 = vmatprep.mubr.bf16.mxu0 0
        %1342 = vmatmul.mubr.bf16.gmra.mrb[0].mxu0 %v1189
        %v1343 = vpop.f32.mrb[0].mxu0
        %v1344 = vadd.f32 0.0, %v1343
        %v1345 = vpop.f32.mrb[0].mxu0
        %v1346 = vpop.f32.mrb[0].mxu0
        %v1347 = vadd.f32 0.0, %v1346
        %v1348 = vpop.f32.mrb[0].mxu0
        %1349 = vmatprep.mubr.bf16.mxu0 0
        %1350 = vmatmul.mubr.bf16.gmra.mrb[0].mxu0 %v1191
        %v1351 = vpop.f32.mrb[0].mxu0
        %v1352 = vadd.f32 0.0, %v1351
        %v1353 = vpop.f32.mrb[0].mxu0
        %v1354 = vpop.f32.mrb[0].mxu0
        %v1355 = vadd.f32 0.0, %v1354
        %v1356 = vpop.f32.mrb[0].mxu0
        %1357 = vdwg.mxu0
        %s1358 = scalar_lea.vmem %s3, 12
        %v1359 = vld [vmem:[%s1358] sm:$0xf]
        %v1360 = vld [vmem:[%s1358 + $0x4] sm:$0xf]
        %v1361 = vld [vmem:[%s1358 + $0x8] sm:$0xf]
        %v1365 = vunpack.c.l.b16 %v1359
        %v1366 = vunpack.c.l.b16 %v1360
        %v1367 = vunpack.c.l.b16 %v1361
        %v1368 = vpack.c.b16 %v1366, %v1365
        %v1369 = vpack.c.b16 %v1367, %v1367
        %v1372 = vsel %vm1193, %v1369, 0
        %1374 = vmatprep.subr.bf16.mxu0 0
        %1375 = vmatpush1.bf16.msra.mxu0 %v1368
        %1376 = vmatprep.subr.bf16.mxu0 0
        %1377 = vmatpush1.bf16.msra.mxu0 %v1372
        %1378 = vmatprep.subr.bf16.mxu0 0
        %1379 = vmatpush1.bf16.msra.mxu0 0
        %1380 = vmatprep.subr.bf16.mxu0 0
        %1381 = vmatpush1.bf16.msra.mxu0 0
        %1382 = vmatprep.subr.bf16.mxu0 0
        %1383 = vmatpush1.bf16.msra.mxu0 0
        %1384 = vmatprep.subr.bf16.mxu0 0
        %1385 = vmatpush1.bf16.msra.mxu0 0
        %1386 = vmatprep.subr.bf16.mxu0 0
        %1387 = vmatpush1.bf16.msra.mxu0 0
        %1388 = vmatprep.subr.bf16.mxu0 0
        %1389 = vmatpush1.bf16.msra.mxu0 0
        %1390 = vmatprep.subr.bf16.mxu0 0
        %1391 = vmatpush1.bf16.msra.mxu0 0
        %1392 = vmatprep.subr.bf16.mxu0 0
        %1393 = vmatpush1.bf16.msra.mxu0 0
        %1394 = vmatprep.subr.bf16.mxu0 0
        %1395 = vmatpush1.bf16.msra.mxu0 0
        %1396 = vmatprep.subr.bf16.mxu0 0
        %1397 = vmatpush1.bf16.msra.mxu0 0
        %1398 = vmatprep.subr.bf16.mxu0 0
        %1399 = vmatpush1.bf16.msra.mxu0 0
        %1400 = vmatprep.subr.bf16.mxu0 0
        %1401 = vmatpush1.bf16.msra.mxu0 0
        %1402 = vmatprep.subr.bf16.mxu0 0
        %1403 = vmatpush1.bf16.msra.mxu0 0
        %1404 = vmatprep.subr.bf16.mxu0 0
        %1405 = vmatpush1.bf16.msra.mxu0 0
        %1406 = vmatprep.mubr.bf16.mxu0 0
        %1407 = vmatmul.mubr.bf16.gmra.mrb[0].mxu0 %v1161
        %v1408 = vpop.f32.mrb[0].mxu0
        %v1409 = vadd.f32 0.0, %v1408
        %v1410 = vpop.f32.mrb[0].mxu0
        %v1411 = vpop.f32.mrb[0].mxu0
        %v1412 = vadd.f32 0.0, %v1411
        %v1413 = vpop.f32.mrb[0].mxu0
        %1414 = vmatprep.mubr.bf16.mxu0 0
        %1415 = vmatmul.mubr.bf16.gmra.mrb[0].mxu0 %v1163
        %v1416 = vpop.f32.mrb[0].mxu0
        %v1417 = vadd.f32 0.0, %v1416
        %v1418 = vpop.f32.mrb[0].mxu0
        %v1419 = vpop.f32.mrb[0].mxu0
        %v1420 = vadd.f32 0.0, %v1419
        %v1421 = vpop.f32.mrb[0].mxu0
        %1422 = vmatprep.mubr.bf16.mxu0 0
        %1423 = vmatmul.mubr.bf16.gmra.mrb[0].mxu0 %v1165
        %v1424 = vpop.f32.mrb[0].mxu0
        %v1425 = vadd.f32 0.0, %v1424
        %v1426 = vpop.f32.mrb[0].mxu0
        %v1427 = vpop.f32.mrb[0].mxu0
        %v1428 = vadd.f32 0.0, %v1427
        %v1429 = vpop.f32.mrb[0].mxu0
        %1430 = vmatprep.mubr.bf16.mxu0 0
        %1431 = vmatmul.mubr.bf16.gmra.mrb[0].mxu0 %v1167
        %v1432 = vpop.f32.mrb[0].mxu0
        %v1433 = vadd.f32 0.0, %v1432
        %v1434 = vpop.f32.mrb[0].mxu0
        %v1435 = vpop.f32.mrb[0].mxu0
        %v1436 = vadd.f32 0.0, %v1435
        %v1437 = vpop.f32.mrb[0].mxu0
        %1438 = vmatprep.mubr.bf16.mxu0 0
        %1439 = vmatmul.mubr.bf16.gmra.mrb[0].mxu0 %v1169
        %v1440 = vpop.f32.mrb[0].mxu0
        %v1441 = vadd.f32 0.0, %v1440
        %v1442 = vpop.f32.mrb[0].mxu0
        %v1443 = vpop.f32.mrb[0].mxu0
        %v1444 = vadd.f32 0.0, %v1443
        %v1445 = vpop.f32.mrb[0].mxu0
        %1446 = vmatprep.mubr.bf16.mxu0 0
        %1447 = vmatmul.mubr.bf16.gmra.mrb[0].mxu0 %v1171
        %v1448 = vpop.f32.mrb[0].mxu0
        %v1449 = vadd.f32 0.0, %v1448
        %v1450 = vpop.f32.mrb[0].mxu0
        %v1451 = vpop.f32.mrb[0].mxu0
        %v1452 = vadd.f32 0.0, %v1451
        %v1453 = vpop.f32.mrb[0].mxu0
        %1454 = vmatprep.mubr.bf16.mxu0 0
        %1455 = vmatmul.mubr.bf16.gmra.mrb[0].mxu0 %v1173
        %v1456 = vpop.f32.mrb[0].mxu0
        %v1457 = vadd.f32 0.0, %v1456
        %v1458 = vpop.f32.mrb[0].mxu0
        %v1459 = vpop.f32.mrb[0].mxu0
        %v1460 = vadd.f32 0.0, %v1459
        %v1461 = vpop.f32.mrb[0].mxu0
        %1462 = vmatprep.mubr.bf16.mxu0 0
        %1463 = vmatmul.mubr.bf16.gmra.mrb[0].mxu0 %v1175
        %v1464 = vpop.f32.mrb[0].mxu0
        %v1465 = vadd.f32 0.0, %v1464
        %v1466 = vpop.f32.mrb[0].mxu0
        %v1467 = vpop.f32.mrb[0].mxu0
        %v1468 = vadd.f32 0.0, %v1467
        %v1469 = vpop.f32.mrb[0].mxu0
        %1470 = vmatprep.mubr.bf16.mxu0 0
        %1471 = vmatmul.mubr.bf16.gmra.mrb[0].mxu0 %v1177
        %v1472 = vpop.f32.mrb[0].mxu0
        %v1473 = vadd.f32 0.0, %v1472
        %v1474 = vpop.f32.mrb[0].mxu0
        %v1475 = vpop.f32.mrb[0].mxu0
        %v1476 = vadd.f32 0.0, %v1475
        %v1477 = vpop.f32.mrb[0].mxu0
        %1478 = vmatprep.mubr.bf16.mxu0 0
        %1479 = vmatmul.mubr.bf16.gmra.mrb[0].mxu0 %v1179
        %v1480 = vpop.f32.mrb[0].mxu0
        %v1481 = vadd.f32 0.0, %v1480
        %v1482 = vpop.f32.mrb[0].mxu0
        %v1483 = vpop.f32.mrb[0].mxu0
        %v1484 = vadd.f32 0.0, %v1483
        %v1485 = vpop.f32.mrb[0].mxu0
        %1486 = vmatprep.mubr.bf16.mxu0 0
        %1487 = vmatmul.mubr.bf16.gmra.mrb[0].mxu0 %v1181
        %v1488 = vpop.f32.mrb[0].mxu0
        %v1489 = vadd.f32 0.0, %v1488
        %v1490 = vpop.f32.mrb[0].mxu0
        %v1491 = vpop.f32.mrb[0].mxu0
        %v1492 = vadd.f32 0.0, %v1491
        %v1493 = vpop.f32.mrb[0].mxu0
        %1494 = vmatprep.mubr.bf16.mxu0 0
        %1495 = vmatmul.mubr.bf16.gmra.mrb[0].mxu0 %v1183
        %v1496 = vpop.f32.mrb[0].mxu0
        %v1497 = vadd.f32 0.0, %v1496
        %v1498 = vpop.f32.mrb[0].mxu0
        %v1499 = vpop.f32.mrb[0].mxu0
        %v1500 = vadd.f32 0.0, %v1499
        %v1501 = vpop.f32.mrb[0].mxu0
        %1502 = vmatprep.mubr.bf16.mxu0 0
        %1503 = vmatmul.mubr.bf16.gmra.mrb[0].mxu0 %v1185
        %v1504 = vpop.f32.mrb[0].mxu0
        %v1505 = vadd.f32 0.0, %v1504
        %v1506 = vpop.f32.mrb[0].mxu0
        %v1507 = vpop.f32.mrb[0].mxu0
        %v1508 = vadd.f32 0.0, %v1507
        %v1509 = vpop.f32.mrb[0].mxu0
        %1510 = vmatprep.mubr.bf16.mxu0 0
        %1511 = vmatmul.mubr.bf16.gmra.mrb[0].mxu0 %v1187
        %v1512 = vpop.f32.mrb[0].mxu0
        %v1513 = vadd.f32 0.0, %v1512
        %v1514 = vpop.f32.mrb[0].mxu0
        %v1515 = vpop.f32.mrb[0].mxu0
        %v1516 = vadd.f32 0.0, %v1515
        %v1517 = vpop.f32.mrb[0].mxu0
        %1518 = vmatprep.mubr.bf16.mxu0 0
        %1519 = vmatmul.mubr.bf16.gmra.mrb[0].mxu0 %v1189
        %v1520 = vpop.f32.mrb[0].mxu0
        %v1521 = vadd.f32 0.0, %v1520
        %v1522 = vpop.f32.mrb[0].mxu0
        %v1523 = vpop.f32.mrb[0].mxu0
        %v1524 = vadd.f32 0.0, %v1523
        %v1525 = vpop.f32.mrb[0].mxu0
        %1526 = vmatprep.mubr.bf16.mxu0 0
        %1527 = vmatmul.mubr.bf16.gmra.mrb[0].mxu0 %v1191
        %v1528 = vpop.f32.mrb[0].mxu0
        %v1529 = vadd.f32 0.0, %v1528
        %v1530 = vpop.f32.mrb[0].mxu0
        %v1531 = vpop.f32.mrb[0].mxu0
        %v1532 = vadd.f32 0.0, %v1531
        %v1533 = vpop.f32.mrb[0].mxu0
        %1534 = vdwg.mxu0
        %v1535 = vadd.f32 %v1352, %v1409
        %v1536 = vadd.f32 %v1355, %v1412
        %v1537 = vadd.f32 %v1232, %v1417
        %v1538 = vadd.f32 %v1235, %v1420
        %v1539 = vadd.f32 %v1240, %v1425
        %v1540 = vadd.f32 %v1243, %v1428
        %v1541 = vadd.f32 %v1248, %v1433
        %v1542 = vadd.f32 %v1251, %v1436
        %v1543 = vadd.f32 %v1256, %v1441
        %v1544 = vadd.f32 %v1259, %v1444
        %v1545 = vadd.f32 %v1264, %v1449
        %v1546 = vadd.f32 %v1267, %v1452
        %v1547 = vadd.f32 %v1272, %v1457
        %v1548 = vadd.f32 %v1275, %v1460
        %v1549 = vadd.f32 %v1280, %v1465
        %v1550 = vadd.f32 %v1283, %v1468
        %v1551 = vadd.f32 %v1288, %v1473
        %v1552 = vadd.f32 %v1291, %v1476
        %v1553 = vadd.f32 %v1296, %v1481
        %v1554 = vadd.f32 %v1299, %v1484
        %v1555 = vadd.f32 %v1304, %v1489
        %v1556 = vadd.f32 %v1307, %v1492
        %v1557 = vadd.f32 %v1312, %v1497
        %v1558 = vadd.f32 %v1315, %v1500
        %v1559 = vadd.f32 %v1320, %v1505
        %v1560 = vadd.f32 %v1323, %v1508
        %v1561 = vadd.f32 %v1328, %v1513
        %v1562 = vadd.f32 %v1331, %v1516
        %v1563 = vadd.f32 %v1336, %v1521
        %v1564 = vadd.f32 %v1339, %v1524
        %v1565 = vadd.f32 %v1344, %v1529
        %v1566 = vadd.f32 %v1347, %v1532
        %s1567 = scalar_lea.vmem %s3, 24
        %v1568 = vld [vmem:[%s1567] sm:$0xf]
        %v1569 = vld [vmem:[%s1567 + $0x4] sm:$0xf]
        %v1570 = vld [vmem:[%s1567 + $0x8] sm:$0xf]
        %v1574 = vunpack.c.l.b16 %v1568
        %v1575 = vunpack.c.l.b16 %v1569
        %v1576 = vunpack.c.l.b16 %v1570
        %v1577 = vpack.c.b16 %v1575, %v1574
        %v1578 = vpack.c.b16 %v1576, %v1576
        %v1581 = vsel %vm1193, %v1578, 0
        %1583 = vmatprep.subr.bf16.mxu0 0
        %1584 = vmatpush1.bf16.msra.mxu0 %v1577
        %1585 = vmatprep.subr.bf16.mxu0 0
        %1586 = vmatpush1.bf16.msra.mxu0 %v1581
        %1587 = vmatprep.subr.bf16.mxu0 0
        %1588 = vmatpush1.bf16.msra.mxu0 0
        %1589 = vmatprep.subr.bf16.mxu0 0
        %1590 = vmatpush1.bf16.msra.mxu0 0
        %1591 = vmatprep.subr.bf16.mxu0 0
        %1592 = vmatpush1.bf16.msra.mxu0 0
        %1593 = vmatprep.subr.bf16.mxu0 0
        %1594 = vmatpush1.bf16.msra.mxu0 0
        %1595 = vmatprep.subr.bf16.mxu0 0
        %1596 = vmatpush1.bf16.msra.mxu0 0
        %1597 = vmatprep.subr.bf16.mxu0 0
        %1598 = vmatpush1.bf16.msra.mxu0 0
        %1599 = vmatprep.subr.bf16.mxu0 0
        %1600 = vmatpush1.bf16.msra.mxu0 0
        %1601 = vmatprep.subr.bf16.mxu0 0
        %1602 = vmatpush1.bf16.msra.mxu0 0
        %1603 = vmatprep.subr.bf16.mxu0 0
        %1604 = vmatpush1.bf16.msra.mxu0 0
        %1605 = vmatprep.subr.bf16.mxu0 0
        %1606 = vmatpush1.bf16.msra.mxu0 0
        %1607 = vmatprep.subr.bf16.mxu0 0
        %1608 = vmatpush1.bf16.msra.mxu0 0
        %1609 = vmatprep.subr.bf16.mxu0 0
        %1610 = vmatpush1.bf16.msra.mxu0 0
        %1611 = vmatprep.subr.bf16.mxu0 0
        %1612 = vmatpush1.bf16.msra.mxu0 0
        %1613 = vmatprep.subr.bf16.mxu0 0
        %1614 = vmatpush1.bf16.msra.mxu0 0
        %1615 = vmatprep.mubr.bf16.mxu0 0
        %1616 = vmatmul.mubr.bf16.gmra.mrb[0].mxu0 %v1161
        %v1617 = vpop.f32.mrb[0].mxu0
        %v1618 = vadd.f32 0.0, %v1617
        %v1619 = vpop.f32.mrb[0].mxu0
        %v1620 = vpop.f32.mrb[0].mxu0
        %v1621 = vadd.f32 0.0, %v1620
        %v1622 = vpop.f32.mrb[0].mxu0
        %1623 = vmatprep.mubr.bf16.mxu0 0
        %1624 = vmatmul.mubr.bf16.gmra.mrb[0].mxu0 %v1163
        %v1625 = vpop.f32.mrb[0].mxu0
        %v1626 = vadd.f32 0.0, %v1625
        %v1627 = vpop.f32.mrb[0].mxu0
        %v1628 = vpop.f32.mrb[0].mxu0
        %v1629 = vadd.f32 0.0, %v1628
        %v1630 = vpop.f32.mrb[0].mxu0
        %1631 = vmatprep.mubr.bf16.mxu0 0
        %1632 = vmatmul.mubr.bf16.gmra.mrb[0].mxu0 %v1165
        %v1633 = vpop.f32.mrb[0].mxu0
        %v1634 = vadd.f32 0.0, %v1633
        %v1635 = vpop.f32.mrb[0].mxu0
        %v1636 = vpop.f32.mrb[0].mxu0
        %v1637 = vadd.f32 0.0, %v1636
        %v1638 = vpop.f32.mrb[0].mxu0
        %1639 = vmatprep.mubr.bf16.mxu0 0
        %1640 = vmatmul.mubr.bf16.gmra.mrb[0].mxu0 %v1167
        %v1641 = vpop.f32.mrb[0].mxu0
        %v1642 = vadd.f32 0.0, %v1641
        %v1643 = vpop.f32.mrb[0].mxu0
        %v1644 = vpop.f32.mrb[0].mxu0
        %v1645 = vadd.f32 0.0, %v1644
        %v1646 = vpop.f32.mrb[0].mxu0
        %1647 = vmatprep.mubr.bf16.mxu0 0
        %1648 = vmatmul.mubr.bf16.gmra.mrb[0].mxu0 %v1169
        %v1649 = vpop.f32.mrb[0].mxu0
        %v1650 = vadd.f32 0.0, %v1649
        %v1651 = vpop.f32.mrb[0].mxu0
        %v1652 = vpop.f32.mrb[0].mxu0
        %v1653 = vadd.f32 0.0, %v1652
        %v1654 = vpop.f32.mrb[0].mxu0
        %1655 = vmatprep.mubr.bf16.mxu0 0
        %1656 = vmatmul.mubr.bf16.gmra.mrb[0].mxu0 %v1171
        %v1657 = vpop.f32.mrb[0].mxu0
        %v1658 = vadd.f32 0.0, %v1657
        %v1659 = vpop.f32.mrb[0].mxu0
        %v1660 = vpop.f32.mrb[0].mxu0
        %v1661 = vadd.f32 0.0, %v1660
        %v1662 = vpop.f32.mrb[0].mxu0
        %1663 = vmatprep.mubr.bf16.mxu0 0
        %1664 = vmatmul.mubr.bf16.gmra.mrb[0].mxu0 %v1173
        %v1665 = vpop.f32.mrb[0].mxu0
        %v1666 = vadd.f32 0.0, %v1665
        %v1667 = vpop.f32.mrb[0].mxu0
        %v1668 = vpop.f32.mrb[0].mxu0
        %v1669 = vadd.f32 0.0, %v1668
        %v1670 = vpop.f32.mrb[0].mxu0
        %1671 = vmatprep.mubr.bf16.mxu0 0
        %1672 = vmatmul.mubr.bf16.gmra.mrb[0].mxu0 %v1175
        %v1673 = vpop.f32.mrb[0].mxu0
        %v1674 = vadd.f32 0.0, %v1673
        %v1675 = vpop.f32.mrb[0].mxu0
        %v1676 = vpop.f32.mrb[0].mxu0
        %v1677 = vadd.f32 0.0, %v1676
        %v1678 = vpop.f32.mrb[0].mxu0
        %1679 = vmatprep.mubr.bf16.mxu0 0
        %1680 = vmatmul.mubr.bf16.gmra.mrb[0].mxu0 %v1177
        %v1681 = vpop.f32.mrb[0].mxu0
        %v1682 = vadd.f32 0.0, %v1681
        %v1683 = vpop.f32.mrb[0].mxu0
        %v1684 = vpop.f32.mrb[0].mxu0
        %v1685 = vadd.f32 0.0, %v1684
        %v1686 = vpop.f32.mrb[0].mxu0
        %1687 = vmatprep.mubr.bf16.mxu0 0
        %1688 = vmatmul.mubr.bf16.gmra.mrb[0].mxu0 %v1179
        %v1689 = vpop.f32.mrb[0].mxu0
        %v1690 = vadd.f32 0.0, %v1689
        %v1691 = vpop.f32.mrb[0].mxu0
        %v1692 = vpop.f32.mrb[0].mxu0
        %v1693 = vadd.f32 0.0, %v1692
        %v1694 = vpop.f32.mrb[0].mxu0
        %1695 = vmatprep.mubr.bf16.mxu0 0
        %1696 = vmatmul.mubr.bf16.gmra.mrb[0].mxu0 %v1181
        %v1697 = vpop.f32.mrb[0].mxu0
        %v1698 = vadd.f32 0.0, %v1697
        %v1699 = vpop.f32.mrb[0].mxu0
        %v1700 = vpop.f32.mrb[0].mxu0
        %v1701 = vadd.f32 0.0, %v1700
        %v1702 = vpop.f32.mrb[0].mxu0
        %1703 = vmatprep.mubr.bf16.mxu0 0
        %1704 = vmatmul.mubr.bf16.gmra.mrb[0].mxu0 %v1183
        %v1705 = vpop.f32.mrb[0].mxu0
        %v1706 = vadd.f32 0.0, %v1705
        %v1707 = vpop.f32.mrb[0].mxu0
        %v1708 = vpop.f32.mrb[0].mxu0
        %v1709 = vadd.f32 0.0, %v1708
        %v1710 = vpop.f32.mrb[0].mxu0
        %1711 = vmatprep.mubr.bf16.mxu0 0
        %1712 = vmatmul.mubr.bf16.gmra.mrb[0].mxu0 %v1185
        %v1713 = vpop.f32.mrb[0].mxu0
        %v1714 = vadd.f32 0.0, %v1713
        %v1715 = vpop.f32.mrb[0].mxu0
        %v1716 = vpop.f32.mrb[0].mxu0
        %v1717 = vadd.f32 0.0, %v1716
        %v1718 = vpop.f32.mrb[0].mxu0
        %1719 = vmatprep.mubr.bf16.mxu0 0
        %1720 = vmatmul.mubr.bf16.gmra.mrb[0].mxu0 %v1187
        %v1721 = vpop.f32.mrb[0].mxu0
        %v1722 = vadd.f32 0.0, %v1721
        %v1723 = vpop.f32.mrb[0].mxu0
        %v1724 = vpop.f32.mrb[0].mxu0
        %v1725 = vadd.f32 0.0, %v1724
        %v1726 = vpop.f32.mrb[0].mxu0
        %1727 = vmatprep.mubr.bf16.mxu0 0
        %1728 = vmatmul.mubr.bf16.gmra.mrb[0].mxu0 %v1189
        %v1729 = vpop.f32.mrb[0].mxu0
        %v1730 = vadd.f32 0.0, %v1729
        %v1731 = vpop.f32.mrb[0].mxu0
        %v1732 = vpop.f32.mrb[0].mxu0
        %v1733 = vadd.f32 0.0, %v1732
        %v1734 = vpop.f32.mrb[0].mxu0
        %1735 = vmatprep.mubr.bf16.mxu0 0
        %1736 = vmatmul.mubr.bf16.gmra.mrb[0].mxu0 %v1191
        %v1737 = vpop.f32.mrb[0].mxu0
        %v1738 = vadd.f32 0.0, %v1737
        %v1739 = vpop.f32.mrb[0].mxu0
        %v1740 = vpop.f32.mrb[0].mxu0
        %v1741 = vadd.f32 0.0, %v1740
        %v1742 = vpop.f32.mrb[0].mxu0
        %1743 = vdwg.mxu0
        %v1744 = vadd.f32 %v1535, %v1626
        %v1745 = vadd.f32 %v1536, %v1629
        %v1746 = vadd.f32 %v1537, %v1634
        %v1747 = vadd.f32 %v1538, %v1637
        %v1748 = vadd.f32 %v1539, %v1642
        %v1749 = vadd.f32 %v1540, %v1645
        %v1750 = vadd.f32 %v1541, %v1650
        %v1751 = vadd.f32 %v1542, %v1653
        %v1752 = vadd.f32 %v1543, %v1658
        %v1753 = vadd.f32 %v1544, %v1661
        %v1754 = vadd.f32 %v1545, %v1666
        %v1755 = vadd.f32 %v1546, %v1669
        %v1756 = vadd.f32 %v1547, %v1674
        %v1757 = vadd.f32 %v1548, %v1677
        %v1758 = vadd.f32 %v1549, %v1682
        %v1759 = vadd.f32 %v1550, %v1685
        %v1760 = vadd.f32 %v1551, %v1690
        %v1761 = vadd.f32 %v1552, %v1693
        %v1762 = vadd.f32 %v1553, %v1698
        %v1763 = vadd.f32 %v1554, %v1701
        %v1764 = vadd.f32 %v1555, %v1706
        %v1765 = vadd.f32 %v1556, %v1709
        %v1766 = vadd.f32 %v1557, %v1714
        %v1767 = vadd.f32 %v1558, %v1717
        %v1768 = vadd.f32 %v1559, %v1722
        %v1769 = vadd.f32 %v1560, %v1725
        %v1770 = vadd.f32 %v1561, %v1730
        %v1771 = vadd.f32 %v1562, %v1733
        %v1772 = vadd.f32 %v1563, %v1738
        %v1773 = vadd.f32 %v1564, %v1741
        %v1774 = vadd.f32 %v1565, %v1618
        %v1775 = vadd.f32 %v1566, %v1621
        %v1776 = vlaneseq
        %v1777 = vshrl.u32 %v1776, 7
        %v1778 = vsub.s32 0, %v1777
        %v1779 = vrot.slane %v227, %v1778
        %v1780 = vadd.f32 %v1744, %v1779
        %v1781 = vadd.f32 %v1745, %v1779
        %v1782 = vadd.f32 %v1746, %v1779
        %v1783 = vadd.f32 %v1747, %v1779
        %v1784 = vadd.f32 %v1748, %v1779
        %v1785 = vadd.f32 %v1749, %v1779
        %v1786 = vadd.f32 %v1750, %v1779
        %v1787 = vadd.f32 %v1751, %v1779
        %v1788 = vadd.f32 %v1752, %v1779
        %v1789 = vadd.f32 %v1753, %v1779
        %v1790 = vadd.f32 %v1754, %v1779
        %v1791 = vadd.f32 %v1755, %v1779
        %v1792 = vadd.f32 %v1756, %v1779
        %v1793 = vadd.f32 %v1757, %v1779
        %v1794 = vadd.f32 %v1758, %v1779
        %v1795 = vadd.f32 %v1759, %v1779
        %v1796 = vadd.f32 %v1760, %v1779
        %v1797 = vadd.f32 %v1761, %v1779
        %v1798 = vadd.f32 %v1762, %v1779
        %v1799 = vadd.f32 %v1763, %v1779
        %v1800 = vadd.f32 %v1764, %v1779
        %v1801 = vadd.f32 %v1765, %v1779
        %v1802 = vadd.f32 %v1766, %v1779
        %v1803 = vadd.f32 %v1767, %v1779
        %v1804 = vadd.f32 %v1768, %v1779
        %v1805 = vadd.f32 %v1769, %v1779
        %v1806 = vadd.f32 %v1770, %v1779
        %v1807 = vadd.f32 %v1771, %v1779
        %v1808 = vadd.f32 %v1772, %v1779
        %v1809 = vadd.f32 %v1773, %v1779
        %v1810 = vadd.f32 %v1774, %v1779
        %v1811 = vadd.f32 %v1775, %v1779
        %v1812 = vmax.f32 %v1780, 0.0
        %v1813 = vmax.f32 %v1781, 0.0
        %v1814 = vmax.f32 %v1782, 0.0
        %v1815 = vmax.f32 %v1783, 0.0
        %v1816 = vmax.f32 %v1784, 0.0
        %v1817 = vmax.f32 %v1785, 0.0
        %v1818 = vmax.f32 %v1786, 0.0
        %v1819 = vmax.f32 %v1787, 0.0
        %v1820 = vmax.f32 %v1788, 0.0
        %v1821 = vmax.f32 %v1789, 0.0
        %v1822 = vmax.f32 %v1790, 0.0
        %v1823 = vmax.f32 %v1791, 0.0
        %v1824 = vmax.f32 %v1792, 0.0
        %v1825 = vmax.f32 %v1793, 0.0
        %v1826 = vmax.f32 %v1794, 0.0
        %v1827 = vmax.f32 %v1795, 0.0
        %v1828 = vmax.f32 %v1796, 0.0
        %v1829 = vmax.f32 %v1797, 0.0
        %v1830 = vmax.f32 %v1798, 0.0
        %v1831 = vmax.f32 %v1799, 0.0
        %v1832 = vmax.f32 %v1800, 0.0
        %v1833 = vmax.f32 %v1801, 0.0
        %v1834 = vmax.f32 %v1802, 0.0
        %v1835 = vmax.f32 %v1803, 0.0
        %v1836 = vmax.f32 %v1804, 0.0
        %v1837 = vmax.f32 %v1805, 0.0
        %v1838 = vmax.f32 %v1806, 0.0
        %v1839 = vmax.f32 %v1807, 0.0
        %v1840 = vmax.f32 %v1808, 0.0
        %v1841 = vmax.f32 %v1809, 0.0
        %v1842 = vmax.f32 %v1810, 0.0
        %v1843 = vmax.f32 %v1811, 0.0
        %v1844 = vpack.c.bf16 %v1813, %v1812
        %v1845 = vpack.c.bf16 %v1815, %v1814
        %v1846 = vpack.c.bf16 %v1817, %v1816
        %v1847 = vpack.c.bf16 %v1819, %v1818
        %v1848 = vpack.c.bf16 %v1821, %v1820
        %v1849 = vpack.c.bf16 %v1823, %v1822
        %v1850 = vpack.c.bf16 %v1825, %v1824
        %v1851 = vpack.c.bf16 %v1827, %v1826
        %v1852 = vpack.c.bf16 %v1829, %v1828
        %v1853 = vpack.c.bf16 %v1831, %v1830
        %v1854 = vpack.c.bf16 %v1833, %v1832
        %v1855 = vpack.c.bf16 %v1835, %v1834
        %v1856 = vpack.c.bf16 %v1837, %v1836
        %v1857 = vpack.c.bf16 %v1839, %v1838
        %v1858 = vpack.c.bf16 %v1841, %v1840
        %v1859 = vpack.c.bf16 %v1843, %v1842
        %v1860 = vpack.c.bf16 %v230, %v229
        %v1861 = vpack.c.bf16 %v232, %v231
        %v1862 = vpack.c.bf16 %v234, %v233
        %v1863 = vpack.c.bf16 %v236, %v235
        %v1864 = vpack.c.bf16 %v238, %v237
        %v1865 = vpack.c.bf16 %v240, %v239
        %v1866 = vpack.c.bf16 %v242, %v241
        %v1867 = vpack.c.bf16 %v244, %v243
        %v1868 = vpack.c.bf16 %v246, %v245
        %v1869 = vpack.c.bf16 %v248, %v247
        %v1870 = vpack.c.bf16 %v250, %v249
        %v1871 = vpack.c.bf16 %v252, %v251
        %v1872 = vpack.c.bf16 %v254, %v253
        %v1873 = vpack.c.bf16 %v256, %v255
        %v1874 = vpack.c.bf16 %v258, %v257
        %v1875 = vpack.c.bf16 %v260, %v259
        %1892 = vrot.lane.b32.xlu0 %v1860, 8
        %v1893 = vpop.permute.xlu0 %1892
        %1894 = vrot.lane.b32.xlu0 %v1861, 8
        %v1895 = vpop.permute.xlu0 %1894
        %1896 = vrot.lane.b32.xlu0 %v1862, 8
        %v1897 = vpop.permute.xlu0 %1896
        %1898 = vrot.lane.b32.xlu0 %v1863, 8
        %v1899 = vpop.permute.xlu0 %1898
        %1900 = vrot.lane.b32.xlu0 %v1864, 8
        %v1901 = vpop.permute.xlu0 %1900
        %1902 = vrot.lane.b32.xlu0 %v1865, 8
        %v1903 = vpop.permute.xlu0 %1902
        %1904 = vrot.lane.b32.xlu0 %v1866, 8
        %v1905 = vpop.permute.xlu0 %1904
        %1906 = vrot.lane.b32.xlu0 %v1867, 8
        %v1907 = vpop.permute.xlu0 %1906
        %1908 = vrot.lane.b32.xlu0 %v1868, 8
        %v1909 = vpop.permute.xlu0 %1908
        %1910 = vrot.lane.b32.xlu0 %v1869, 8
        %v1911 = vpop.permute.xlu0 %1910
        %1912 = vrot.lane.b32.xlu0 %v1870, 8
        %v1913 = vpop.permute.xlu0 %1912
        %1914 = vrot.lane.b32.xlu0 %v1871, 8
        %v1915 = vpop.permute.xlu0 %1914
        %1916 = vrot.lane.b32.xlu0 %v1872, 8
        %v1917 = vpop.permute.xlu0 %1916
        %1918 = vrot.lane.b32.xlu0 %v1873, 8
        %v1919 = vpop.permute.xlu0 %1918
        %1920 = vrot.lane.b32.xlu0 %v1874, 8
        %v1921 = vpop.permute.xlu0 %1920
        %1922 = vrot.lane.b32.xlu0 %v1875, 8
        %v1923 = vpop.permute.xlu0 %1922
        %v1926 = vsel %vm1066, %v1844, %v1893
        %v1929 = vsel %vm1066, %v1845, %v1895
        %v1932 = vsel %vm1066, %v1846, %v1897
        %v1935 = vsel %vm1066, %v1847, %v1899
        %v1938 = vsel %vm1066, %v1848, %v1901
        %v1941 = vsel %vm1066, %v1849, %v1903
        %v1944 = vsel %vm1066, %v1850, %v1905
        %v1947 = vsel %vm1066, %v1851, %v1907
        %v1950 = vsel %vm1066, %v1852, %v1909
        %v1953 = vsel %vm1066, %v1853, %v1911
        %v1956 = vsel %vm1066, %v1854, %v1913
        %v1959 = vsel %vm1066, %v1855, %v1915
        %v1962 = vsel %vm1066, %v1856, %v1917
        %v1965 = vsel %vm1066, %v1857, %v1919
        %v1968 = vsel %vm1066, %v1858, %v1921
        %v1971 = vsel %vm1066, %v1859, %v1923
        %v1972 = vld [vmem:[%s4] sm:$0xf]
        %v1973 = vld [vmem:[%s4 + $0x4] sm:$0x3]
        %v1976 = vunpack.c.l.b16 %v1972
        %v1977 = vunpack.c.l.b16 %v1973
        %v1978 = vpack.c.b16 %v1977, %v1976
        %vm1979 = vcmask 97280
        %v1980 = vsel %vm1979, %v1926, 0
        %v1982 = vsel %vm1979, %v1929, 0
        %v1984 = vsel %vm1979, %v1932, 0
        %v1986 = vsel %vm1979, %v1935, 0
        %v1988 = vsel %vm1979, %v1938, 0
        %v1990 = vsel %vm1979, %v1941, 0
        %v1992 = vsel %vm1979, %v1944, 0
        %v1994 = vsel %vm1979, %v1947, 0
        %v1996 = vsel %vm1979, %v1950, 0
        %v1998 = vsel %vm1979, %v1953, 0
        %v2000 = vsel %vm1979, %v1956, 0
        %v2002 = vsel %vm1979, %v1959, 0
        %v2004 = vsel %vm1979, %v1962, 0
        %v2006 = vsel %vm1979, %v1965, 0
        %v2008 = vsel %vm1979, %v1968, 0
        %v2010 = vsel %vm1979, %v1971, 0
        %vm2012 = vcmask 1045504
        %v2014 = vsel %vm2012, %v1978, 0
        %2016 = vmatprep.subr.bf16.mxu0 0
        %2017 = vmatpush1.bf16.msra.mxu0 %v2014
        %2018 = vmatprep.subr.bf16.mxu0 0
        %2019 = vmatpush1.bf16.msra.mxu0 0
        %2020 = vmatprep.subr.bf16.mxu0 0
        %2021 = vmatpush1.bf16.msra.mxu0 0
        %2022 = vmatprep.subr.bf16.mxu0 0
        %2023 = vmatpush1.bf16.msra.mxu0 0
        %2024 = vmatprep.subr.bf16.mxu0 0
        %2025 = vmatpush1.bf16.msra.mxu0 0
        %2026 = vmatprep.subr.bf16.mxu0 0
        %2027 = vmatpush1.bf16.msra.mxu0 0
        %2028 = vmatprep.subr.bf16.mxu0 0
        %2029 = vmatpush1.bf16.msra.mxu0 0
        %2030 = vmatprep.subr.bf16.mxu0 0
        %2031 = vmatpush1.bf16.msra.mxu0 0
        %2032 = vmatprep.subr.bf16.mxu0 0
        %2033 = vmatpush1.bf16.msra.mxu0 0
        %2034 = vmatprep.subr.bf16.mxu0 0
        %2035 = vmatpush1.bf16.msra.mxu0 0
        %2036 = vmatprep.subr.bf16.mxu0 0
        %2037 = vmatpush1.bf16.msra.mxu0 0
        %2038 = vmatprep.subr.bf16.mxu0 0
        %2039 = vmatpush1.bf16.msra.mxu0 0
        %2040 = vmatprep.subr.bf16.mxu0 0
        %2041 = vmatpush1.bf16.msra.mxu0 0
        %2042 = vmatprep.subr.bf16.mxu0 0
        %2043 = vmatpush1.bf16.msra.mxu0 0
        %2044 = vmatprep.subr.bf16.mxu0 0
        %2045 = vmatpush1.bf16.msra.mxu0 0
        %2046 = vmatprep.subr.bf16.mxu0 0
        %2047 = vmatpush1.bf16.msra.mxu0 0
        %2048 = vmatprep.mubr.bf16.mxu0 0
        %2049 = vmatmul.mubr.bf16.gmra.mrb[0].mxu0 %v1980
        %v2050 = vpop.f32.mrb[0].mxu0
        %v2051 = vadd.f32 0.0, %v2050
        %v2052 = vpop.f32.mrb[0].mxu0
        %v2053 = vpop.f32.mrb[0].mxu0
        %v2054 = vadd.f32 0.0, %v2053
        %v2055 = vpop.f32.mrb[0].mxu0
        %2056 = vmatprep.mubr.bf16.mxu0 0
        %2057 = vmatmul.mubr.bf16.gmra.mrb[0].mxu0 %v1982
        %v2058 = vpop.f32.mrb[0].mxu0
        %v2059 = vadd.f32 0.0, %v2058
        %v2060 = vpop.f32.mrb[0].mxu0
        %v2061 = vpop.f32.mrb[0].mxu0
        %v2062 = vadd.f32 0.0, %v2061
        %v2063 = vpop.f32.mrb[0].mxu0
        %2064 = vmatprep.mubr.bf16.mxu0 0
        %2065 = vmatmul.mubr.bf16.gmra.mrb[0].mxu0 %v1984
        %v2066 = vpop.f32.mrb[0].mxu0
        %v2067 = vadd.f32 0.0, %v2066
        %v2068 = vpop.f32.mrb[0].mxu0
        %v2069 = vpop.f32.mrb[0].mxu0
        %v2070 = vadd.f32 0.0, %v2069
        %v2071 = vpop.f32.mrb[0].mxu0
        %2072 = vmatprep.mubr.bf16.mxu0 0
        %2073 = vmatmul.mubr.bf16.gmra.mrb[0].mxu0 %v1986
        %v2074 = vpop.f32.mrb[0].mxu0
        %v2075 = vadd.f32 0.0, %v2074
        %v2076 = vpop.f32.mrb[0].mxu0
        %v2077 = vpop.f32.mrb[0].mxu0
        %v2078 = vadd.f32 0.0, %v2077
        %v2079 = vpop.f32.mrb[0].mxu0
        %2080 = vmatprep.mubr.bf16.mxu0 0
        %2081 = vmatmul.mubr.bf16.gmra.mrb[0].mxu0 %v1988
        %v2082 = vpop.f32.mrb[0].mxu0
        %v2083 = vadd.f32 0.0, %v2082
        %v2084 = vpop.f32.mrb[0].mxu0
        %v2085 = vpop.f32.mrb[0].mxu0
        %v2086 = vadd.f32 0.0, %v2085
        %v2087 = vpop.f32.mrb[0].mxu0
        %2088 = vmatprep.mubr.bf16.mxu0 0
        %2089 = vmatmul.mubr.bf16.gmra.mrb[0].mxu0 %v1990
        %v2090 = vpop.f32.mrb[0].mxu0
        %v2091 = vadd.f32 0.0, %v2090
        %v2092 = vpop.f32.mrb[0].mxu0
        %v2093 = vpop.f32.mrb[0].mxu0
        %v2094 = vadd.f32 0.0, %v2093
        %v2095 = vpop.f32.mrb[0].mxu0
        %2096 = vmatprep.mubr.bf16.mxu0 0
        %2097 = vmatmul.mubr.bf16.gmra.mrb[0].mxu0 %v1992
        %v2098 = vpop.f32.mrb[0].mxu0
        %v2099 = vadd.f32 0.0, %v2098
        %v2100 = vpop.f32.mrb[0].mxu0
        %v2101 = vpop.f32.mrb[0].mxu0
        %v2102 = vadd.f32 0.0, %v2101
        %v2103 = vpop.f32.mrb[0].mxu0
        %2104 = vmatprep.mubr.bf16.mxu0 0
        %2105 = vmatmul.mubr.bf16.gmra.mrb[0].mxu0 %v1994
        %v2106 = vpop.f32.mrb[0].mxu0
        %v2107 = vadd.f32 0.0, %v2106
        %v2108 = vpop.f32.mrb[0].mxu0
        %v2109 = vpop.f32.mrb[0].mxu0
        %v2110 = vadd.f32 0.0, %v2109
        %v2111 = vpop.f32.mrb[0].mxu0
        %2112 = vmatprep.mubr.bf16.mxu0 0
        %2113 = vmatmul.mubr.bf16.gmra.mrb[0].mxu0 %v1996
        %v2114 = vpop.f32.mrb[0].mxu0
        %v2115 = vadd.f32 0.0, %v2114
        %v2116 = vpop.f32.mrb[0].mxu0
        %v2117 = vpop.f32.mrb[0].mxu0
        %v2118 = vadd.f32 0.0, %v2117
        %v2119 = vpop.f32.mrb[0].mxu0
        %2120 = vmatprep.mubr.bf16.mxu0 0
        %2121 = vmatmul.mubr.bf16.gmra.mrb[0].mxu0 %v1998
        %v2122 = vpop.f32.mrb[0].mxu0
        %v2123 = vadd.f32 0.0, %v2122
        %v2124 = vpop.f32.mrb[0].mxu0
        %v2125 = vpop.f32.mrb[0].mxu0
        %v2126 = vadd.f32 0.0, %v2125
        %v2127 = vpop.f32.mrb[0].mxu0
        %2128 = vmatprep.mubr.bf16.mxu0 0
        %2129 = vmatmul.mubr.bf16.gmra.mrb[0].mxu0 %v2000
        %v2130 = vpop.f32.mrb[0].mxu0
        %v2131 = vadd.f32 0.0, %v2130
        %v2132 = vpop.f32.mrb[0].mxu0
        %v2133 = vpop.f32.mrb[0].mxu0
        %v2134 = vadd.f32 0.0, %v2133
        %v2135 = vpop.f32.mrb[0].mxu0
        %2136 = vmatprep.mubr.bf16.mxu0 0
        %2137 = vmatmul.mubr.bf16.gmra.mrb[0].mxu0 %v2002
        %v2138 = vpop.f32.mrb[0].mxu0
        %v2139 = vadd.f32 0.0, %v2138
        %v2140 = vpop.f32.mrb[0].mxu0
        %v2141 = vpop.f32.mrb[0].mxu0
        %v2142 = vadd.f32 0.0, %v2141
        %v2143 = vpop.f32.mrb[0].mxu0
        %2144 = vmatprep.mubr.bf16.mxu0 0
        %2145 = vmatmul.mubr.bf16.gmra.mrb[0].mxu0 %v2004
        %v2146 = vpop.f32.mrb[0].mxu0
        %v2147 = vadd.f32 0.0, %v2146
        %v2148 = vpop.f32.mrb[0].mxu0
        %v2149 = vpop.f32.mrb[0].mxu0
        %v2150 = vadd.f32 0.0, %v2149
        %v2151 = vpop.f32.mrb[0].mxu0
        %2152 = vmatprep.mubr.bf16.mxu0 0
        %2153 = vmatmul.mubr.bf16.gmra.mrb[0].mxu0 %v2006
        %v2154 = vpop.f32.mrb[0].mxu0
        %v2155 = vadd.f32 0.0, %v2154
        %v2156 = vpop.f32.mrb[0].mxu0
        %v2157 = vpop.f32.mrb[0].mxu0
        %v2158 = vadd.f32 0.0, %v2157
        %v2159 = vpop.f32.mrb[0].mxu0
        %2160 = vmatprep.mubr.bf16.mxu0 0
        %2161 = vmatmul.mubr.bf16.gmra.mrb[0].mxu0 %v2008
        %v2162 = vpop.f32.mrb[0].mxu0
        %v2163 = vadd.f32 0.0, %v2162
        %v2164 = vpop.f32.mrb[0].mxu0
        %v2165 = vpop.f32.mrb[0].mxu0
        %v2166 = vadd.f32 0.0, %v2165
        %v2167 = vpop.f32.mrb[0].mxu0
        %2168 = vmatprep.mubr.bf16.mxu0 0
        %2169 = vmatmul.mubr.bf16.gmra.mrb[0].mxu0 %v2010
        %v2170 = vpop.f32.mrb[0].mxu0
        %v2171 = vadd.f32 0.0, %v2170
        %v2172 = vpop.f32.mrb[0].mxu0
        %v2173 = vpop.f32.mrb[0].mxu0
        %v2174 = vadd.f32 0.0, %v2173
        %v2175 = vpop.f32.mrb[0].mxu0
        %2176 = vdwg.mxu0
        %v2177 = vlaneseq
        %v2178 = vshrl.u32 %v2177, 7
        %v2179 = vsub.s32 0, %v2178
        %v2180 = vrot.slane %v228, %v2179
        %v2181 = vadd.f32 %v2051, %v2180
        %v2182 = vadd.f32 %v2054, %v2180
        %v2183 = vadd.f32 %v2059, %v2180
        %v2184 = vadd.f32 %v2062, %v2180
        %v2185 = vadd.f32 %v2067, %v2180
        %v2186 = vadd.f32 %v2070, %v2180
        %v2187 = vadd.f32 %v2075, %v2180
        %v2188 = vadd.f32 %v2078, %v2180
        %v2189 = vadd.f32 %v2083, %v2180
        %v2190 = vadd.f32 %v2086, %v2180
        %v2191 = vadd.f32 %v2091, %v2180
        %v2192 = vadd.f32 %v2094, %v2180
        %v2193 = vadd.f32 %v2099, %v2180
        %v2194 = vadd.f32 %v2102, %v2180
        %v2195 = vadd.f32 %v2107, %v2180
        %v2196 = vadd.f32 %v2110, %v2180
        %v2197 = vadd.f32 %v2115, %v2180
        %v2198 = vadd.f32 %v2118, %v2180
        %v2199 = vadd.f32 %v2123, %v2180
        %v2200 = vadd.f32 %v2126, %v2180
        %v2201 = vadd.f32 %v2131, %v2180
        %v2202 = vadd.f32 %v2134, %v2180
        %v2203 = vadd.f32 %v2139, %v2180
        %v2204 = vadd.f32 %v2142, %v2180
        %v2205 = vadd.f32 %v2147, %v2180
        %v2206 = vadd.f32 %v2150, %v2180
        %v2207 = vadd.f32 %v2155, %v2180
        %v2208 = vadd.f32 %v2158, %v2180
        %v2209 = vadd.f32 %v2163, %v2180
        %v2210 = vadd.f32 %v2166, %v2180
        %v2211 = vadd.f32 %v2171, %v2180
        %v2212 = vadd.f32 %v2174, %v2180
        %2213 = vst.msk [vmem:[%s217] sm:$0xff] %vm1115, %v2181
        %2214 = vst.msk [vmem:[%s217 + $0x8] sm:$0xff] %vm1115, %v2182
        %2215 = vst.msk [vmem:[%s217 + $0x10] sm:$0xff] %vm1115, %v2183
        %2216 = vst.msk [vmem:[%s217 + $0x18] sm:$0xff] %vm1115, %v2184
        %2217 = vst.msk [vmem:[%s217 + $0x20] sm:$0xff] %vm1115, %v2185
        %2218 = vst.msk [vmem:[%s217 + $0x28] sm:$0xff] %vm1115, %v2186
        %2219 = vst.msk [vmem:[%s217 + $0x30] sm:$0xff] %vm1115, %v2187
        %2220 = vst.msk [vmem:[%s217 + $0x38] sm:$0xff] %vm1115, %v2188
        %2221 = vst.msk [vmem:[%s217 + $0x40] sm:$0xff] %vm1115, %v2189
        %2222 = vst.msk [vmem:[%s217 + $0x48] sm:$0xff] %vm1115, %v2190
        %2223 = vst.msk [vmem:[%s217 + $0x50] sm:$0xff] %vm1115, %v2191
        %2224 = vst.msk [vmem:[%s217 + $0x58] sm:$0xff] %vm1115, %v2192
        %2225 = vst.msk [vmem:[%s217 + $0x60] sm:$0xff] %vm1115, %v2193
        %2226 = vst.msk [vmem:[%s217 + $0x68] sm:$0xff] %vm1115, %v2194
        %2227 = vst.msk [vmem:[%s217 + $0x70] sm:$0xff] %vm1115, %v2195
        %2228 = vst.msk [vmem:[%s217 + $0x78] sm:$0xff] %vm1115, %v2196
        %2229 = vst.msk [vmem:[%s217 + $0x80] sm:$0xff] %vm1115, %v2197
        %2230 = vst.msk [vmem:[%s217 + $0x88] sm:$0xff] %vm1115, %v2198
        %2231 = vst.msk [vmem:[%s217 + $0x90] sm:$0xff] %vm1115, %v2199
        %2232 = vst.msk [vmem:[%s217 + $0x98] sm:$0xff] %vm1115, %v2200
        %2233 = vst.msk [vmem:[%s217 + $0xa0] sm:$0xff] %vm1115, %v2201
        %2234 = vst.msk [vmem:[%s217 + $0xa8] sm:$0xff] %vm1115, %v2202
        %2235 = vst.msk [vmem:[%s217 + $0xb0] sm:$0xff] %vm1115, %v2203
        %2236 = vst.msk [vmem:[%s217 + $0xb8] sm:$0xff] %vm1115, %v2204
        %2237 = vst.msk [vmem:[%s217 + $0xc0] sm:$0xff] %vm1115, %v2205
        %2238 = vst.msk [vmem:[%s217 + $0xc8] sm:$0xff] %vm1115, %v2206
        %2239 = vst.msk [vmem:[%s217 + $0xd0] sm:$0xff] %vm1115, %v2207
        %2240 = vst.msk [vmem:[%s217 + $0xd8] sm:$0xff] %vm1115, %v2208
        %2241 = vst.msk [vmem:[%s217 + $0xe0] sm:$0xff] %vm1115, %v2209
        %2242 = vst.msk [vmem:[%s217 + $0xe8] sm:$0xff] %vm1115, %v2210
        %2243 = vst.msk [vmem:[%s217 + $0xf0] sm:$0xff] %vm1115, %v2211
        %2244 = vst.msk [vmem:[%s217 + $0xf8] sm:$0xff] %vm1115, %v2212
        %s2245 = sand.u32 %s137, 1
        %s2246 = scalar_lea.sflag [#allocation3], %s2245
        %s2247 = sand.u32 %s137, 1
        %s2248 = smul.addr %s2247, 256
        %s2249 = scalar_lea.vmem [#allocation2], %s2248
        // Predicated region
        $region41: #{tpu_custom_call.1} parent=39 // pred_check
          %p2250 = pneg %p147
        $region42: #{tpu_custom_call.1} parent=39 // pred_check_branch
          %2252 = sbr.rel (%p2250) target = $region44
        $region43: #{tpu_custom_call.1} parent=39 // pred_region
          %s2254 = ssub.s32 4096, 4096
          %2255 = vsyncadd %s2246, %s2254
          %s2256 = smul.addr %s19, 32
          %s2257 = smul.addr %s2256, 128
          %s2258 = scalar_lea.hbm %s5, %s2257
          %s2259 = sshll.u32 %s2249, 4
          %s2260 = int_to_ptr.vmem [resolvable:$true] %s2259
          %2265 = dma.vmem_to_hbm [thread:$0]  %s2260, 4096, %s2258, %s2246, 128, 128, 8
        $region44: #{tpu_custom_call.1} parent=39 // pred_fallthru
          _
      $region40: #{tpu_custom_call.1} parent=5 // pred_fallthru
        _
      %p2266 = scmp.le.s32.totalorder 2, %s14
      // Predicated region
      $region45: #{tpu_custom_call.1} parent=5 // pred_check
        %p2267 = pneg %p2266
      $region46: #{tpu_custom_call.1} parent=5 // pred_check_branch
        %2269 = sbr.rel (%p2267) target = $region48
      $region47: #{tpu_custom_call.1} parent=5 // pred_region
        %s2270 = ssub.s32 %s14, 2
        // Predicated region
        $region49: #{tpu_custom_call.1} parent=47 // pred_check
          %p2271 = pneg %p153
        $region50: #{tpu_custom_call.1} parent=47 // pred_check_branch
          %2273 = sbr.rel (%p2271) target = $region52
        $region51: #{tpu_custom_call.1} parent=47 // pred_region
          %s2274 = sand.u32 %s138, 1
          %s2275 = scalar_lea.sflag [#allocation3], %s2274
          %s2276 = sand.u32 %s138, 1
          %s2277 = smul.addr %s2276, 256
          %s2278 = scalar_lea.vmem [#allocation2], %s2277
          %2279 = dma.done %s2275, 4096
        $region52: #{tpu_custom_call.1} parent=47 // pred_fallthru
          _
      $region48: #{tpu_custom_call.1} parent=5 // pred_fallthru
        _
    $region6: #{tpu_custom_call.1} parent=1 // loop_footer
      %s18 = sadd.s32 1, %s14
    $region7: #{tpu_custom_call.1} parent=1 // loop_footer_branch
      %13 = sbr.rel target = $region3
    $region8: #{tpu_custom_call.1} parent=1 // loop_exit
      _
    %2280 = vsyncpa [#allocation3], 1
    %s2281 = scalar_lea.sflag [#allocation3], 1
    %2282 = vsyncpa %s2281, 1

</llo_original>
